<compile_context>
chip_gen: v5e
topology: v5e:2x2
jax: 0.10.0
libtpu: 0.0.40
codegen_flags: <defaults>
</compile_context>

<pallas_src>
import jax
import jax.numpy as jnp
from jax.experimental import pallas as pl
from jax.experimental.pallas import tpu as pltpu

EPS = 1e-5


# -----------------------------------------------------------------------------
# Kernel 1: DR = 1x1 conv (bf16 MXU) + BatchNorm2d (batch stats) + ReLU
# -----------------------------------------------------------------------------
def _dr_kernel(x_ref, w_ref, g_ref, b_ref, o_ref):
    # 1x1 conv == matmul over channels; bf16 operands, f32 accumulation.
    y = jnp.dot(x_ref[...].astype(jnp.bfloat16), w_ref[...],
                preferred_element_type=jnp.float32)
    # Training-mode BatchNorm2d: biased batch statistics over the N*H*W rows.
    # (Conv bias omitted: a per-channel constant is exactly removed by the
    #  mean subtraction below.)
    mean = jnp.mean(y, axis=0, keepdims=True)
    var = jnp.mean(jnp.square(y - mean), axis=0, keepdims=True)
    y = (y - mean) * jax.lax.rsqrt(var + EPS) * g_ref[...] + b_ref[...]
    o_ref[...] = jnp.maximum(y, 0.0)


def dr_conv_bn_relu(x_flat, w, gamma, beta):
    P, C = x_flat.shape
    Cr = w.shape[1]
    w_bf16 = w.astype(jnp.bfloat16)
    g2 = gamma.reshape(1, Cr)
    b2 = beta.reshape(1, Cr)
    # TODO(synk): BN batch statistics need all P rows, so this call runs as a
    # single grid step; for very large P switch to a two-pass (accumulate
    # per-channel sum / sum-of-squares over P tiles, then normalize) variant.
    return pl.pallas_call(
        _dr_kernel,
        out_shape=jax.ShapeDtypeStruct((P, Cr), jnp.float32),
        grid_spec=pltpu.PrefetchScalarGridSpec(
            num_scalar_prefetch=0,
            grid=(1,),
            in_specs=[
                pl.BlockSpec((P, C), lambda i: (0, 0)),
                pl.BlockSpec((C, Cr), lambda i: (0, 0)),
                pl.BlockSpec((1, Cr), lambda i: (0, 0)),
                pl.BlockSpec((1, Cr), lambda i: (0, 0)),
            ],
            out_specs=pl.BlockSpec((P, Cr), lambda i: (0, 0)),
        ),
        compiler_params=pltpu.CompilerParams(
            dimension_semantics=("arbitrary",)),
    )(x_flat, w_bf16, g2, b2)


# -----------------------------------------------------------------------------
# Kernel 2: MRA1/3/5 (packed-tap matmul) + ReLU + last_conv + sigmoid + combine
# -----------------------------------------------------------------------------
def _mra_tail_kernel(p_ref, x_ref, wm_ref, bm_ref, wl_ref, bl_ref,
                     o1_ref, o2_ref):
    # All three attention convs as one packed bf16 matmul over the 25 taps.
    a = jnp.dot(p_ref[...].astype(jnp.bfloat16), wm_ref[...],
                preferred_element_type=jnp.float32) + bm_ref[...]
    a = jnp.maximum(a, 0.0)                                   # per-branch ReLU
    # last_conv: 1x1 conv (3 -> 1) + sigmoid.
    z = jnp.sum(a * wl_ref[...], axis=1, keepdims=True) + bl_ref[...]
    s = 1.0 / (1.0 + jnp.exp(-z))
    one_minus = 1.0 - s
    o1_ref[...] = one_minus                                   # 1 - x
    o2_ref[...] = x_ref[...] * one_minus                      # input - input*x


def mra_tail(patches, x_flat, wm, bm, wl, bl, tp=256):
    P, KKCr = patches.shape
    C = x_flat.shape[1]
    tp = min(tp, P)
    while P % tp != 0:          # demo shapes divide evenly; fall back safely
        tp //= 2
    assert tp % 8 == 0
    wm_bf16 = wm.astype(jnp.bfloat16)
    return pl.pallas_call(
        _mra_tail_kernel,
        out_shape=(jax.ShapeDtypeStruct((P, 1), jnp.float32),
                   jax.ShapeDtypeStruct((P, C), jnp.float32)),
        grid_spec=pltpu.PrefetchScalarGridSpec(
            num_scalar_prefetch=0,
            grid=(P // tp,),
            in_specs=[
                pl.BlockSpec((tp, KKCr), lambda i: (i, 0)),
                pl.BlockSpec((tp, C), lambda i: (i, 0)),
                pl.BlockSpec((KKCr, 3), lambda i: (0, 0)),
                pl.BlockSpec((1, 3), lambda i: (0, 0)),
                pl.BlockSpec((1, 3), lambda i: (0, 0)),
                pl.BlockSpec((1, 1), lambda i: (0, 0)),
            ],
            out_specs=[
                pl.BlockSpec((tp, 1), lambda i: (i, 0)),
                pl.BlockSpec((tp, C), lambda i: (i, 0)),
            ],
        ),
        compiler_params=pltpu.CompilerParams(
            dimension_semantics=("parallel",)),
    )(patches, x_flat, wm_bf16, bm, wl, bl)


# -----------------------------------------------------------------------------
# Plain-JAX glue: padding / tap extraction / weight packing / layout plumbing
# -----------------------------------------------------------------------------
def extract_taps(dr_img, k=5, pad=2):
    """(N,H,W,Cr) -> (N*H*W, k*k*Cr): tap-major, channel-minor packed taps."""
    # TODO(synk): for large feature maps, read the taps in-kernel from the
    # padded NHWC tensor via shifted slices instead of materializing them.
    N, H, W, Cr = dr_img.shape
    xp = jnp.pad(dr_img, ((0, 0), (pad, pad), (pad, pad), (0, 0)))
    taps = []
    for kh in range(k):
        for kw in range(k):
            taps.append(xp[:, kh:kh + H, kw:kw + W, :].reshape(N * H * W, Cr))
    return jnp.concatenate(taps, axis=1)


def pack_mra_weights(w1, w3, w5):
    """Pack MRA1 (1x1), MRA3 (3x3), MRA5 (5x5) conv weights into (25*Cr, 3).

    Row block (kh*5+kw)*Cr : +Cr corresponds to the 5x5 tap at offset
    (kh-2, kw-2); MRA1/MRA3 weights are zero-padded outside their support.
    """
    Cr = w1.shape[0]
    zero = jnp.zeros((Cr,), jnp.float32)
    blocks = []
    for kh in range(5):
        for kw in range(5):
            c1 = w1 if (kh == 2 and kw == 2) else zero
            c3 = w3[:, kh - 1, kw - 1] if (1 <= kh <= 3 and 1 <= kw <= 3) else zero
            c5 = w5[:, kh, kw]
            blocks.append(jnp.stack([c1, c3, c5], axis=1))   # (Cr, 3)
    return jnp.concatenate(blocks, axis=0)                   # (25*Cr, 3)


# -----------------------------------------------------------------------------
# Deterministic parameter construction (synthetic, matches module shapes)
# -----------------------------------------------------------------------------
def init_params(key, C, reduction=16):
    Cr = C // reduction
    ks = jax.random.split(key, 10)
    # DR: Conv2d(C, Cr, 1).weight (Cr,C,1,1) -> (C, Cr);  BN affine params.
    w_dr = 0.05 * jax.random.normal(ks[0], (C, Cr), jnp.float32)
    gamma = 1.0 + 0.1 * jax.random.normal(ks[1], (Cr,), jnp.float32)
    beta = 0.1 * jax.random.normal(ks[2], (Cr,), jnp.float32)
    # MRA convs: Conv2d(Cr, 1, k).weight (1,Cr,k,k) squeezed.
    w1 = 0.2 * jax.random.normal(ks[3], (Cr,), jnp.float32)
    w3 = 0.1 * jax.random.normal(ks[4], (Cr, 3, 3), jnp.float32)
    w5 = 0.05 * jax.random.normal(ks[5], (Cr, 5, 5), jnp.float32)
    b1 = 0.02 * jax.random.normal(ks[6], (), jnp.float32)
    b3 = 0.02 * jax.random.normal(ks[7], (), jnp.float32)
    b5 = 0.02 * jax.random.normal(ks[8], (), jnp.float32)
    # last_conv: Conv2d(3, 1, 1)
    wl = 0.5 * jax.random.normal(ks[9], (3,), jnp.float32)
    bl = jnp.zeros((), jnp.float32)
    return dict(
        w_dr=w_dr, gamma=gamma, beta=beta,
        wm=pack_mra_weights(w1, w3, w5),
        bm=jnp.stack([b1, b3, b5]).reshape(1, 3),
        wl=wl.reshape(1, 3),
        bl=bl.reshape(1, 1),
    )


# -----------------------------------------------------------------------------
# Forward pass
# -----------------------------------------------------------------------------
def mmca_forward(params, x_nchw):
    N, C, H, W = x_nchw.shape
    x_nhwc = jnp.transpose(x_nchw, (0, 2, 3, 1))
    P = N * H * W
    x_flat = x_nhwc.reshape(P, C)

    # DR: 1x1 conv + BN (training-mode batch stats, as a fresh PyTorch module
    # in .train() would use) + ReLU, fused in one kernel.
    dr_flat = dr_conv_bn_relu(x_flat, params["w_dr"], params["gamma"],
                              params["beta"])
    Cr = dr_flat.shape[1]
    dr_img = dr_flat.reshape(N, H, W, Cr)

    # MRA1/3/5 + concat + last_conv + sigmoid + output combine, one kernel.
    patches = extract_taps(dr_img, k=5, pad=2)
    out1_flat, out2_flat = mra_tail(patches, x_flat, params["wm"],
                                    params["bm"], params["wl"], params["bl"])

    out1 = jnp.transpose(out1_flat.reshape(N, H, W, 1), (0, 3, 1, 2))
    out2 = jnp.transpose(out2_flat.reshape(N, H, W, C), (0, 3, 1, 2))
    return out1, out2   # (1 - x, input - input * x)


if __name__ == "__main__":
    key = jax.random.PRNGKey(0)
    kp, kx = jax.random.split(key)

    N, C, H, W = 2, 256, 16, 16          # MMCA does not change channel count
    params = init_params(kp, C, reduction=16)
    x = jax.random.normal(kx, (N, C, H, W), jnp.float32)

    fwd = jax.jit(mmca_forward)
    out1, out2 = jax.block_until_ready(fwd(params, x))

    assert out1.shape == (N, 1, H, W)
    assert out2.shape == (N, C, H, W)
    assert bool(jnp.all(jnp.isfinite(out1)))
    assert bool(jnp.all(jnp.isfinite(out2)))
    # sanity: out1 = 1 - sigmoid(.) in (0,1); out2 = input * out1
    assert bool(jnp.all((out1 > 0.0) & (out1 < 1.0)))
    assert bool(jnp.allclose(out2, x * out1, atol=1e-5, rtol=1e-5))
    print("KERNEL_OK")
</pallas_src>

<mosaic_0001>
module attributes {stable_mosaic.version = 11 : i64} {
  func.func @_dr_kernel(%arg0: i32, %arg1: memref<512x256xf32, #tpu.memory_space<vmem>>, %arg2: memref<256x16xbf16, #tpu.memory_space<vmem>>, %arg3: memref<1x16xf32, #tpu.memory_space<vmem>>, %arg4: memref<1x16xf32, #tpu.memory_space<vmem>>, %arg5: memref<512x16xf32, #tpu.memory_space<vmem>>) attributes {dimension_semantics = [#tpu.dimension_semantics<arbitrary>], iteration_bounds = array<i64: 1>, scalar_prefetch = 0 : i64, scratch_operands = 0 : i64, tpu.core_type = #tpu.core_type<tc>, window_params = [{pipeline_mode = #tpu.pipeline_mode<synchronous>, transform_indices = @transform_0, window_bounds = array<i64: 512, 256>}, {pipeline_mode = #tpu.pipeline_mode<synchronous>, transform_indices = @transform_1, window_bounds = array<i64: 256, 16>}, {pipeline_mode = #tpu.pipeline_mode<synchronous>, transform_indices = @transform_2, window_bounds = array<i64: 1, 16>}, {pipeline_mode = #tpu.pipeline_mode<synchronous>, transform_indices = @transform_3, window_bounds = array<i64: 1, 16>}, {pipeline_mode = #tpu.pipeline_mode<synchronous>, transform_indices = @transform_4, window_bounds = array<i64: 512, 16>}]} {
    %c0 = arith.constant 0 : index
    %c0_0 = arith.constant 0 : index
    %0 = vector.load %arg1[%c0, %c0_0] : memref<512x256xf32, #tpu.memory_space<vmem>>, vector<512x256xf32>
    %1 = arith.truncf %0 : vector<512x256xf32> to vector<512x256xbf16>
    %c0_1 = arith.constant 0 : index
    %c0_2 = arith.constant 0 : index
    %2 = vector.load %arg2[%c0_1, %c0_2] : memref<256x16xbf16, #tpu.memory_space<vmem>>, vector<256x16xbf16>
    %cst = arith.constant dense<0.000000e+00> : vector<512x16xf32>
    %3 = tpu.matmul %1, %2, %cst {dimension_numbers = #tpu.dot_dimension_numbers<[1], [0], [0], [1], [0, 0, 1, 1], [], []>} : vector<512x256xbf16>, vector<256x16xbf16>, vector<512x16xf32> -> vector<512x16xf32>
    %cst_3 = arith.constant dense<0.000000e+00> : vector<16xf32>
    %4 = vector.multi_reduction <add>, %3, %cst_3 [0] : vector<512x16xf32> to vector<16xf32>
    %5 = vector.shape_cast %4 : vector<16xf32> to vector<1x16xf32>
    %cst_4 = arith.constant 5.120000e+02 : f32
    %6 = vector.broadcast %cst_4 : f32 to vector<1x16xf32>
    %7 = arith.divf %5, %6 : vector<1x16xf32>
    %8 = vector.broadcast %7 : vector<1x16xf32> to vector<512x16xf32>
    %9 = arith.subf %3, %8 : vector<512x16xf32>
    %10 = arith.mulf %9, %9 : vector<512x16xf32>
    %cst_5 = arith.constant dense<0.000000e+00> : vector<16xf32>
    %11 = vector.multi_reduction <add>, %10, %cst_5 [0] : vector<512x16xf32> to vector<16xf32>
    %12 = vector.shape_cast %11 : vector<16xf32> to vector<1x16xf32>
    %cst_6 = arith.constant 5.120000e+02 : f32
    %13 = vector.broadcast %cst_6 : f32 to vector<1x16xf32>
    %14 = arith.divf %12, %13 : vector<1x16xf32>
    %15 = vector.broadcast %7 : vector<1x16xf32> to vector<512x16xf32>
    %16 = arith.subf %3, %15 : vector<512x16xf32>
    %cst_7 = arith.constant 9.99999974E-6 : f32
    %17 = vector.broadcast %cst_7 : f32 to vector<1x16xf32>
    %18 = arith.addf %14, %17 : vector<1x16xf32>
    %19 = math.rsqrt %18 : vector<1x16xf32>
    %20 = vector.broadcast %19 : vector<1x16xf32> to vector<512x16xf32>
    %21 = arith.mulf %16, %20 : vector<512x16xf32>
    %c0_8 = arith.constant 0 : index
    %c0_9 = arith.constant 0 : index
    %22 = vector.load %arg3[%c0_8, %c0_9] : memref<1x16xf32, #tpu.memory_space<vmem>>, vector<1x16xf32>
    %23 = vector.broadcast %22 : vector<1x16xf32> to vector<512x16xf32>
    %24 = arith.mulf %21, %23 : vector<512x16xf32>
    %c0_10 = arith.constant 0 : index
    %c0_11 = arith.constant 0 : index
    %25 = vector.load %arg4[%c0_10, %c0_11] : memref<1x16xf32, #tpu.memory_space<vmem>>, vector<1x16xf32>
    %26 = vector.broadcast %25 : vector<1x16xf32> to vector<512x16xf32>
    %27 = arith.addf %24, %26 : vector<512x16xf32>
    %cst_12 = arith.constant 0.000000e+00 : f32
    %28 = vector.broadcast %cst_12 : f32 to vector<512x16xf32>
    %29 = arith.maximumf %27, %28 : vector<512x16xf32>
    %c0_13 = arith.constant 0 : index
    %c0_14 = arith.constant 0 : index
    %30 = vector.load %arg5[%c0_13, %c0_14] : memref<512x16xf32, #tpu.memory_space<vmem>>, vector<512x16xf32>
    tpu.vector_store %arg5[%c0_13, %c0_14], %29 {strides = array<i32>} : memref<512x16xf32, #tpu.memory_space<vmem>>, vector<512x16xf32>,
    return
  }
  func.func @transform_0(%arg0: i32) -> (i32, i32) {
    %c0_i32 = arith.constant 0 : i32
    %c0_i32_0 = arith.constant 0 : i32
    %c0_i32_1 = arith.constant 0 : i32
    return %c0_i32, %c0_i32_0 : i32, i32
  }
  func.func @transform_1(%arg0: i32) -> (i32, i32) {
    %c0_i32 = arith.constant 0 : i32
    %c0_i32_0 = arith.constant 0 : i32
    %c0_i32_1 = arith.constant 0 : i32
    return %c0_i32, %c0_i32_0 : i32, i32
  }
  func.func @transform_2(%arg0: i32) -> (i32, i32) {
    %c0_i32 = arith.constant 0 : i32
    %c0_i32_0 = arith.constant 0 : i32
    %c0_i32_1 = arith.constant 0 : i32
    return %c0_i32, %c0_i32_0 : i32, i32
  }
  func.func @transform_3(%arg0: i32) -> (i32, i32) {
    %c0_i32 = arith.constant 0 : i32
    %c0_i32_0 = arith.constant 0 : i32
    %c0_i32_1 = arith.constant 0 : i32
    return %c0_i32, %c0_i32_0 : i32, i32
  }
  func.func @transform_4(%arg0: i32) -> (i32, i32) {
    %c0_i32 = arith.constant 0 : i32
    %c0_i32_0 = arith.constant 0 : i32
    %c0_i32_1 = arith.constant 0 : i32
    return %c0_i32, %c0_i32_0 : i32, i32
  }
}

module attributes {stable_mosaic.version = 11 : i64} {
  func.func @_mra_tail_kernel(%arg0: i32, %arg1: memref<256x400xf32, #tpu.memory_space<vmem>>, %arg2: memref<256x256xf32, #tpu.memory_space<vmem>>, %arg3: memref<400x3xbf16, #tpu.memory_space<vmem>>, %arg4: memref<1x3xf32, #tpu.memory_space<vmem>>, %arg5: memref<1x3xf32, #tpu.memory_space<vmem>>, %arg6: memref<1x1xf32, #tpu.memory_space<vmem>>, %arg7: memref<256x1xf32, #tpu.memory_space<vmem>>, %arg8: memref<256x256xf32, #tpu.memory_space<vmem>>) attributes {dimension_semantics = [#tpu.dimension_semantics<parallel>], iteration_bounds = array<i64: 2>, scalar_prefetch = 0 : i64, scratch_operands = 0 : i64, tpu.core_type = #tpu.core_type<tc>, window_params = [{transform_indices = @transform_0, window_bounds = array<i64: 256, 400>}, {transform_indices = @transform_1, window_bounds = array<i64: 256, 256>}, {pipeline_mode = #tpu.pipeline_mode<synchronous>, transform_indices = @transform_2, window_bounds = array<i64: 400, 3>}, {pipeline_mode = #tpu.pipeline_mode<synchronous>, transform_indices = @transform_3, window_bounds = array<i64: 1, 3>}, {pipeline_mode = #tpu.pipeline_mode<synchronous>, transform_indices = @transform_4, window_bounds = array<i64: 1, 3>}, {pipeline_mode = #tpu.pipeline_mode<synchronous>, transform_indices = @transform_5, window_bounds = array<i64: 1, 1>}, {transform_indices = @transform_6, window_bounds = array<i64: 256, 1>}, {transform_indices = @transform_7, window_bounds = array<i64: 256, 256>}]} {
    %c0 = arith.constant 0 : index
    %c0_0 = arith.constant 0 : index
    %0 = vector.load %arg1[%c0, %c0_0] : memref<256x400xf32, #tpu.memory_space<vmem>>, vector<256x400xf32>
    %1 = arith.truncf %0 : vector<256x400xf32> to vector<256x400xbf16>
    %c0_1 = arith.constant 0 : index
    %c0_2 = arith.constant 0 : index
    %2 = vector.load %arg3[%c0_1, %c0_2] : memref<400x3xbf16, #tpu.memory_space<vmem>>, vector<400x3xbf16>
    %cst = arith.constant dense<0.000000e+00> : vector<256x3xf32>
    %3 = tpu.matmul %1, %2, %cst {dimension_numbers = #tpu.dot_dimension_numbers<[1], [0], [0], [1], [0, 0, 1, 1], [], []>} : vector<256x400xbf16>, vector<400x3xbf16>, vector<256x3xf32> -> vector<256x3xf32>
    %c0_3 = arith.constant 0 : index
    %c0_4 = arith.constant 0 : index
    %4 = vector.load %arg4[%c0_3, %c0_4] : memref<1x3xf32, #tpu.memory_space<vmem>>, vector<1x3xf32>
    %5 = vector.broadcast %4 : vector<1x3xf32> to vector<256x3xf32>
    %6 = arith.addf %3, %5 : vector<256x3xf32>
    %cst_5 = arith.constant 0.000000e+00 : f32
    %7 = vector.broadcast %cst_5 : f32 to vector<256x3xf32>
    %8 = arith.maximumf %6, %7 : vector<256x3xf32>
    %c0_6 = arith.constant 0 : index
    %c0_7 = arith.constant 0 : index
    %9 = vector.load %arg5[%c0_6, %c0_7] : memref<1x3xf32, #tpu.memory_space<vmem>>, vector<1x3xf32>
    %10 = vector.broadcast %9 : vector<1x3xf32> to vector<256x3xf32>
    %11 = arith.mulf %8, %10 : vector<256x3xf32>
    %cst_8 = arith.constant dense<0.000000e+00> : vector<256xf32>
    %12 = vector.multi_reduction <add>, %11, %cst_8 [1] : vector<256x3xf32> to vector<256xf32>
    %13 = vector.shape_cast %12 : vector<256xf32> to vector<256x1xf32>
    %c0_9 = arith.constant 0 : index
    %c0_10 = arith.constant 0 : index
    %14 = vector.load %arg6[%c0_9, %c0_10] : memref<1x1xf32, #tpu.memory_space<vmem>>, vector<1x1xf32>
    %15 = vector.broadcast %14 : vector<1x1xf32> to vector<256x1xf32>
    %16 = arith.addf %13, %15 : vector<256x1xf32>
    %cst_11 = arith.constant 0.000000e+00 : f32
    %17 = vector.broadcast %cst_11 : f32 to vector<256x1xf32>
    %18 = arith.subf %17, %16 : vector<256x1xf32>
    %19 = math.exp %18 : vector<256x1xf32>
    %cst_12 = arith.constant 1.000000e+00 : f32
    %20 = vector.broadcast %cst_12 : f32 to vector<256x1xf32>
    %21 = arith.addf %20, %19 : vector<256x1xf32>
    %cst_13 = arith.constant 1.000000e+00 : f32
    %22 = vector.broadcast %cst_13 : f32 to vector<256x1xf32>
    %23 = arith.divf %22, %21 : vector<256x1xf32>
    %cst_14 = arith.constant 1.000000e+00 : f32
    %24 = vector.broadcast %cst_14 : f32 to vector<256x1xf32>
    %25 = arith.subf %24, %23 : vector<256x1xf32>
    %c0_15 = arith.constant 0 : index
    %c0_16 = arith.constant 0 : index
    %26 = vector.load %arg7[%c0_15, %c0_16] : memref<256x1xf32, #tpu.memory_space<vmem>>, vector<256x1xf32>
    tpu.vector_store %arg7[%c0_15, %c0_16], %25 {strides = array<i32>} : memref<256x1xf32, #tpu.memory_space<vmem>>, vector<256x1xf32>,
    %c0_17 = arith.constant 0 : index
    %c0_18 = arith.constant 0 : index
    %27 = vector.load %arg2[%c0_17, %c0_18] : memref<256x256xf32, #tpu.memory_space<vmem>>, vector<256x256xf32>
    %28 = vector.broadcast %25 : vector<256x1xf32> to vector<256x256xf32>
    %29 = arith.mulf %27, %28 : vector<256x256xf32>
    %c0_19 = arith.constant 0 : index
    %c0_20 = arith.constant 0 : index
    %30 = vector.load %arg8[%c0_19, %c0_20] : memref<256x256xf32, #tpu.memory_space<vmem>>, vector<256x256xf32>
    tpu.vector_store %arg8[%c0_19, %c0_20], %29 {strides = array<i32>} : memref<256x256xf32, #tpu.memory_space<vmem>>, vector<256x256xf32>,
    return
  }
  func.func @transform_0(%arg0: i32) -> (i32, i32) {
    %c0_i32 = arith.constant 0 : i32
    %c0_i32_0 = arith.constant 0 : i32
    return %arg0, %c0_i32 : i32, i32
  }
  func.func @transform_1(%arg0: i32) -> (i32, i32) {
    %c0_i32 = arith.constant 0 : i32
    %c0_i32_0 = arith.constant 0 : i32
    return %arg0, %c0_i32 : i32, i32
  }
  func.func @transform_2(%arg0: i32) -> (i32, i32) {
    %c0_i32 = arith.constant 0 : i32
    %c0_i32_0 = arith.constant 0 : i32
    %c0_i32_1 = arith.constant 0 : i32
    return %c0_i32, %c0_i32_0 : i32, i32
  }
  func.func @transform_3(%arg0: i32) -> (i32, i32) {
    %c0_i32 = arith.constant 0 : i32
    %c0_i32_0 = arith.constant 0 : i32
    %c0_i32_1 = arith.constant 0 : i32
    return %c0_i32, %c0_i32_0 : i32, i32
  }
  func.func @transform_4(%arg0: i32) -> (i32, i32) {
    %c0_i32 = arith.constant 0 : i32
    %c0_i32_0 = arith.constant 0 : i32
    %c0_i32_1 = arith.constant 0 : i32
    return %c0_i32, %c0_i32_0 : i32, i32
  }
  func.func @transform_5(%arg0: i32) -> (i32, i32) {
    %c0_i32 = arith.constant 0 : i32
    %c0_i32_0 = arith.constant 0 : i32
    %c0_i32_1 = arith.constant 0 : i32
    return %c0_i32, %c0_i32_0 : i32, i32
  }
  func.func @transform_6(%arg0: i32) -> (i32, i32) {
    %c0_i32 = arith.constant 0 : i32
    %c0_i32_0 = arith.constant 0 : i32
    return %arg0, %c0_i32 : i32, i32
  }
  func.func @transform_7(%arg0: i32) -> (i32, i32) {
    %c0_i32 = arith.constant 0 : i32
    %c0_i32_0 = arith.constant 0 : i32
    return %arg0, %c0_i32 : i32, i32
  }
}

</mosaic_0001>

<llo_original>
// kernel: mmca_forward.2
$region0: #{mmca_forward.2}
  #allocation0 [shape = 'u32[]', space=smem, size = 0x4, offset = 0x4, fixed_abs, tag = 'smem constant byte address 0x4 - core index']
  #allocation1 [shape = 'u32[72,128]{1,0:T(1,128)}', space=vmem, size = 0x9000, scoped, tag = 'internal scratch']
  %s0 = inlined_call_operand.hbm [shape: f32[512,256], index: 0, kind: input, shape index: {}]
  %s1 = inlined_call_operand.vmem [shape: bf16[256,16], index: 1, kind: input, shape index: {}]
  %s2 = inlined_call_operand.vmem [shape: f32[1,16], index: 2, kind: input, shape index: {}]
  %s3 = inlined_call_operand.vmem [shape: f32[1,16], index: 3, kind: input, shape index: {}]
  %s4 = inlined_call_operand.vmem [shape: f32[512,16], index: 4, kind: output, shape index: {}]
  %s5 = sld [smem:[#allocation0]]
  $region30: #{mmca_forward.2} parent=0
    _
  %s7 = ssub.s32 1, %s5
  %s8 = scalar_select 0, %s7, %s5
  $region1: #{mmca_forward.2} parent=0
    #allocation2 [shape = 'u8[524288]{0}', space=vmem, size = 0x80000, scoped, tag = 'input window, operand 0, single buffered']
    #allocation3 [shape = 's32[1]{0}', space=sflag, size = 0x4, scoped, tag = 'scoped memory for mmca_forward.2']
    %9 = vsyncpa [#allocation3], 0
    // Predicated region
    $region2: #{mmca_forward.2} parent=1 // pred_check
      _
    $region3: #{mmca_forward.2} parent=1 // pred_check_branch
      %11 = sbr.rel (0) target = $region5
    $region4: #{mmca_forward.2} parent=1 // pred_region
      %13 = vsyncadd [#allocation3], 0
      %s14 = sshll.u32 %s0, 4
      %s15 = int_to_ptr.hbm [resolvable:$true] %s14
      %s16 = sshll.u32 [#allocation2], 4
      %s17 = int_to_ptr.vmem [resolvable:$true] %s16
      %22 = dma.hbm_to_vmem [thread:$0]  %s15, 16384, %s17, [#allocation3], 256, 256, 16
    $region5: #{mmca_forward.2} parent=1 // pred_fallthru
      _
    // Predicated region
    $region6: #{mmca_forward.2} parent=1 // pred_check
      _
    $region7: #{mmca_forward.2} parent=1 // pred_check_branch
      %24 = sbr.rel (0) target = $region9
    $region8: #{mmca_forward.2} parent=1 // pred_region
      _
    $region9: #{mmca_forward.2} parent=1 // pred_fallthru
      _
    // Predicated region
    $region10: #{mmca_forward.2} parent=1 // pred_check
      _
    $region11: #{mmca_forward.2} parent=1 // pred_check_branch
      %26 = sbr.rel (0) target = $region13
    $region12: #{mmca_forward.2} parent=1 // pred_region
      _
    $region13: #{mmca_forward.2} parent=1 // pred_fallthru
      _
    // Predicated region
    $region14: #{mmca_forward.2} parent=1 // pred_check
      _
    $region15: #{mmca_forward.2} parent=1 // pred_check_branch
      %28 = sbr.rel (0) target = $region17
    $region16: #{mmca_forward.2} parent=1 // pred_region
      _
    $region17: #{mmca_forward.2} parent=1 // pred_fallthru
      _
    // Predicated region
    $region18: #{mmca_forward.2} parent=1 // pred_check
      _
    $region19: #{mmca_forward.2} parent=1 // pred_check_branch
      %30 = sbr.rel (0) target = $region21
    $region20: #{mmca_forward.2} parent=1 // pred_region
      %32 = dma.done [#allocation3], 16384
    $region21: #{mmca_forward.2} parent=1 // pred_fallthru
      _
    %v33 = vld [vmem:[#allocation2] sm:$0xff]
    %v34 = vld [vmem:[#allocation2 + $0x8] sm:$0xff]
    %v35 = vld [vmem:[#allocation2 + $0x10] sm:$0xff]
    %v36 = vld [vmem:[#allocation2 + $0x18] sm:$0xff]
    %v37 = vld [vmem:[#allocation2 + $0x20] sm:$0xff]
    %v38 = vld [vmem:[#allocation2 + $0x28] sm:$0xff]
    %v39 = vld [vmem:[#allocation2 + $0x30] sm:$0xff]
    %v40 = vld [vmem:[#allocation2 + $0x38] sm:$0xff]
    %v41 = vld [vmem:[#allocation2 + $0x40] sm:$0xff]
    %v42 = vld [vmem:[#allocation2 + $0x48] sm:$0xff]
    %v43 = vld [vmem:[#allocation2 + $0x50] sm:$0xff]
    %v44 = vld [vmem:[#allocation2 + $0x58] sm:$0xff]
    %v45 = vld [vmem:[#allocation2 + $0x60] sm:$0xff]
    %v46 = vld [vmem:[#allocation2 + $0x68] sm:$0xff]
    %v47 = vld [vmem:[#allocation2 + $0x70] sm:$0xff]
    %v48 = vld [vmem:[#allocation2 + $0x78] sm:$0xff]
    %v49 = vld [vmem:[#allocation2 + $0x80] sm:$0xff]
    %v50 = vld [vmem:[#allocation2 + $0x88] sm:$0xff]
    %v51 = vld [vmem:[#allocation2 + $0x90] sm:$0xff]
    %v52 = vld [vmem:[#allocation2 + $0x98] sm:$0xff]
    %v53 = vld [vmem:[#allocation2 + $0xa0] sm:$0xff]
    %v54 = vld [vmem:[#allocation2 + $0xa8] sm:$0xff]
    %v55 = vld [vmem:[#allocation2 + $0xb0] sm:$0xff]
    %v56 = vld [vmem:[#allocation2 + $0xb8] sm:$0xff]
    %v57 = vld [vmem:[#allocation2 + $0xc0] sm:$0xff]
    %v58 = vld [vmem:[#allocation2 + $0xc8] sm:$0xff]
    %v59 = vld [vmem:[#allocation2 + $0xd0] sm:$0xff]
    %v60 = vld [vmem:[#allocation2 + $0xd8] sm:$0xff]
    %v61 = vld [vmem:[#allocation2 + $0xe0] sm:$0xff]
    %v62 = vld [vmem:[#allocation2 + $0xe8] sm:$0xff]
    %v63 = vld [vmem:[#allocation2 + $0xf0] sm:$0xff]
    %v64 = vld [vmem:[#allocation2 + $0xf8] sm:$0xff]
    %v65 = vld [vmem:[#allocation2 + $0x100] sm:$0xff]
    %v66 = vld [vmem:[#allocation2 + $0x108] sm:$0xff]
    %v67 = vld [vmem:[#allocation2 + $0x110] sm:$0xff]
    %v68 = vld [vmem:[#allocation2 + $0x118] sm:$0xff]
    %v69 = vld [vmem:[#allocation2 + $0x120] sm:$0xff]
    %v70 = vld [vmem:[#allocation2 + $0x128] sm:$0xff]
    %v71 = vld [vmem:[#allocation2 + $0x130] sm:$0xff]
    %v72 = vld [vmem:[#allocation2 + $0x138] sm:$0xff]
    %v73 = vld [vmem:[#allocation2 + $0x140] sm:$0xff]
    %v74 = vld [vmem:[#allocation2 + $0x148] sm:$0xff]
    %v75 = vld [vmem:[#allocation2 + $0x150] sm:$0xff]
    %v76 = vld [vmem:[#allocation2 + $0x158] sm:$0xff]
    %v77 = vld [vmem:[#allocation2 + $0x160] sm:$0xff]
    %v78 = vld [vmem:[#allocation2 + $0x168] sm:$0xff]
    %v79 = vld [vmem:[#allocation2 + $0x170] sm:$0xff]
    %v80 = vld [vmem:[#allocation2 + $0x178] sm:$0xff]
    %v81 = vld [vmem:[#allocation2 + $0x180] sm:$0xff]
    %v82 = vld [vmem:[#allocation2 + $0x188] sm:$0xff]
    %v83 = vld [vmem:[#allocation2 + $0x190] sm:$0xff]
    %v84 = vld [vmem:[#allocation2 + $0x198] sm:$0xff]
    %v85 = vld [vmem:[#allocation2 + $0x1a0] sm:$0xff]
    %v86 = vld [vmem:[#allocation2 + $0x1a8] sm:$0xff]
    %v87 = vld [vmem:[#allocation2 + $0x1b0] sm:$0xff]
    %v88 = vld [vmem:[#allocation2 + $0x1b8] sm:$0xff]
    %v89 = vld [vmem:[#allocation2 + $0x1c0] sm:$0xff]
    %v90 = vld [vmem:[#allocation2 + $0x1c8] sm:$0xff]
    %v91 = vld [vmem:[#allocation2 + $0x1d0] sm:$0xff]
    %v92 = vld [vmem:[#allocation2 + $0x1d8] sm:$0xff]
    %v93 = vld [vmem:[#allocation2 + $0x1e0] sm:$0xff]
    %v94 = vld [vmem:[#allocation2 + $0x1e8] sm:$0xff]
    %v95 = vld [vmem:[#allocation2 + $0x1f0] sm:$0xff]
    %v96 = vld [vmem:[#allocation2 + $0x1f8] sm:$0xff]
    %v97 = vld [vmem:[#allocation2 + $0x200] sm:$0xff]
    %v98 = vld [vmem:[#allocation2 + $0x208] sm:$0xff]
    %v99 = vld [vmem:[#allocation2 + $0x210] sm:$0xff]
    %v100 = vld [vmem:[#allocation2 + $0x218] sm:$0xff]
    %v101 = vld [vmem:[#allocation2 + $0x220] sm:$0xff]
    %v102 = vld [vmem:[#allocation2 + $0x228] sm:$0xff]
    %v103 = vld [vmem:[#allocation2 + $0x230] sm:$0xff]
    %v104 = vld [vmem:[#allocation2 + $0x238] sm:$0xff]
    %v105 = vld [vmem:[#allocation2 + $0x240] sm:$0xff]
    %v106 = vld [vmem:[#allocation2 + $0x248] sm:$0xff]
    %v107 = vld [vmem:[#allocation2 + $0x250] sm:$0xff]
    %v108 = vld [vmem:[#allocation2 + $0x258] sm:$0xff]
    %v109 = vld [vmem:[#allocation2 + $0x260] sm:$0xff]
    %v110 = vld [vmem:[#allocation2 + $0x268] sm:$0xff]
    %v111 = vld [vmem:[#allocation2 + $0x270] sm:$0xff]
    %v112 = vld [vmem:[#allocation2 + $0x278] sm:$0xff]
    %v113 = vld [vmem:[#allocation2 + $0x280] sm:$0xff]
    %v114 = vld [vmem:[#allocation2 + $0x288] sm:$0xff]
    %v115 = vld [vmem:[#allocation2 + $0x290] sm:$0xff]
    %v116 = vld [vmem:[#allocation2 + $0x298] sm:$0xff]
    %v117 = vld [vmem:[#allocation2 + $0x2a0] sm:$0xff]
    %v118 = vld [vmem:[#allocation2 + $0x2a8] sm:$0xff]
    %v119 = vld [vmem:[#allocation2 + $0x2b0] sm:$0xff]
    %v120 = vld [vmem:[#allocation2 + $0x2b8] sm:$0xff]
    %v121 = vld [vmem:[#allocation2 + $0x2c0] sm:$0xff]
    %v122 = vld [vmem:[#allocation2 + $0x2c8] sm:$0xff]
    %v123 = vld [vmem:[#allocation2 + $0x2d0] sm:$0xff]
    %v124 = vld [vmem:[#allocation2 + $0x2d8] sm:$0xff]
    %v125 = vld [vmem:[#allocation2 + $0x2e0] sm:$0xff]
    %v126 = vld [vmem:[#allocation2 + $0x2e8] sm:$0xff]
    %v127 = vld [vmem:[#allocation2 + $0x2f0] sm:$0xff]
    %v128 = vld [vmem:[#allocation2 + $0x2f8] sm:$0xff]
    %v129 = vld [vmem:[#allocation2 + $0x300] sm:$0xff]
    %v130 = vld [vmem:[#allocation2 + $0x308] sm:$0xff]
    %v131 = vld [vmem:[#allocation2 + $0x310] sm:$0xff]
    %v132 = vld [vmem:[#allocation2 + $0x318] sm:$0xff]
    %v133 = vld [vmem:[#allocation2 + $0x320] sm:$0xff]
    %v134 = vld [vmem:[#allocation2 + $0x328] sm:$0xff]
    %v135 = vld [vmem:[#allocation2 + $0x330] sm:$0xff]
    %v136 = vld [vmem:[#allocation2 + $0x338] sm:$0xff]
    %v137 = vld [vmem:[#allocation2 + $0x340] sm:$0xff]
    %v138 = vld [vmem:[#allocation2 + $0x348] sm:$0xff]
    %v139 = vld [vmem:[#allocation2 + $0x350] sm:$0xff]
    %v140 = vld [vmem:[#allocation2 + $0x358] sm:$0xff]
    %v141 = vld [vmem:[#allocation2 + $0x360] sm:$0xff]
    %v142 = vld [vmem:[#allocation2 + $0x368] sm:$0xff]
    %v143 = vld [vmem:[#allocation2 + $0x370] sm:$0xff]
    %v144 = vld [vmem:[#allocation2 + $0x378] sm:$0xff]
    %v145 = vld [vmem:[#allocation2 + $0x380] sm:$0xff]
    %v146 = vld [vmem:[#allocation2 + $0x388] sm:$0xff]
    %v147 = vld [vmem:[#allocation2 + $0x390] sm:$0xff]
    %v148 = vld [vmem:[#allocation2 + $0x398] sm:$0xff]
    %v149 = vld [vmem:[#allocation2 + $0x3a0] sm:$0xff]
    %v150 = vld [vmem:[#allocation2 + $0x3a8] sm:$0xff]
    %v151 = vld [vmem:[#allocation2 + $0x3b0] sm:$0xff]
    %v152 = vld [vmem:[#allocation2 + $0x3b8] sm:$0xff]
    %v153 = vld [vmem:[#allocation2 + $0x3c0] sm:$0xff]
    %v154 = vld [vmem:[#allocation2 + $0x3c8] sm:$0xff]
    %v155 = vld [vmem:[#allocation2 + $0x3d0] sm:$0xff]
    %v156 = vld [vmem:[#allocation2 + $0x3d8] sm:$0xff]
    %v157 = vld [vmem:[#allocation2 + $0x3e0] sm:$0xff]
    %v158 = vld [vmem:[#allocation2 + $0x3e8] sm:$0xff]
    %v159 = vld [vmem:[#allocation2 + $0x3f0] sm:$0xff]
    %v160 = vld [vmem:[#allocation2 + $0x3f8] sm:$0xff]
    %v161 = vpack.c.bf16 %v35, %v33
    %v162 = vpack.c.bf16 %v36, %v34
    %v163 = vpack.c.bf16 %v39, %v37
    %v164 = vpack.c.bf16 %v40, %v38
    %v165 = vpack.c.bf16 %v43, %v41
    %v166 = vpack.c.bf16 %v44, %v42
    %v167 = vpack.c.bf16 %v47, %v45
    %v168 = vpack.c.bf16 %v48, %v46
    %v169 = vpack.c.bf16 %v51, %v49
    %v170 = vpack.c.bf16 %v52, %v50
    %v171 = vpack.c.bf16 %v55, %v53
    %v172 = vpack.c.bf16 %v56, %v54
    %v173 = vpack.c.bf16 %v59, %v57
    %v174 = vpack.c.bf16 %v60, %v58
    %v175 = vpack.c.bf16 %v63, %v61
    %v176 = vpack.c.bf16 %v64, %v62
    %v177 = vpack.c.bf16 %v67, %v65
    %v178 = vpack.c.bf16 %v68, %v66
    %v179 = vpack.c.bf16 %v71, %v69
    %v180 = vpack.c.bf16 %v72, %v70
    %v181 = vpack.c.bf16 %v75, %v73
    %v182 = vpack.c.bf16 %v76, %v74
    %v183 = vpack.c.bf16 %v79, %v77
    %v184 = vpack.c.bf16 %v80, %v78
    %v185 = vpack.c.bf16 %v83, %v81
    %v186 = vpack.c.bf16 %v84, %v82
    %v187 = vpack.c.bf16 %v87, %v85
    %v188 = vpack.c.bf16 %v88, %v86
    %v189 = vpack.c.bf16 %v91, %v89
    %v190 = vpack.c.bf16 %v92, %v90
    %v191 = vpack.c.bf16 %v95, %v93
    %v192 = vpack.c.bf16 %v96, %v94
    %v193 = vpack.c.bf16 %v99, %v97
    %v194 = vpack.c.bf16 %v100, %v98
    %v195 = vpack.c.bf16 %v103, %v101
    %v196 = vpack.c.bf16 %v104, %v102
    %v197 = vpack.c.bf16 %v107, %v105
    %v198 = vpack.c.bf16 %v108, %v106
    %v199 = vpack.c.bf16 %v111, %v109
    %v200 = vpack.c.bf16 %v112, %v110
    %v201 = vpack.c.bf16 %v115, %v113
    %v202 = vpack.c.bf16 %v116, %v114
    %v203 = vpack.c.bf16 %v119, %v117
    %v204 = vpack.c.bf16 %v120, %v118
    %v205 = vpack.c.bf16 %v123, %v121
    %v206 = vpack.c.bf16 %v124, %v122
    %v207 = vpack.c.bf16 %v127, %v125
    %v208 = vpack.c.bf16 %v128, %v126
    %v209 = vpack.c.bf16 %v131, %v129
    %v210 = vpack.c.bf16 %v132, %v130
    %v211 = vpack.c.bf16 %v135, %v133
    %v212 = vpack.c.bf16 %v136, %v134
    %v213 = vpack.c.bf16 %v139, %v137
    %v214 = vpack.c.bf16 %v140, %v138
    %v215 = vpack.c.bf16 %v143, %v141
    %v216 = vpack.c.bf16 %v144, %v142
    %v217 = vpack.c.bf16 %v147, %v145
    %v218 = vpack.c.bf16 %v148, %v146
    %v219 = vpack.c.bf16 %v151, %v149
    %v220 = vpack.c.bf16 %v152, %v150
    %v221 = vpack.c.bf16 %v155, %v153
    %v222 = vpack.c.bf16 %v156, %v154
    %v223 = vpack.c.bf16 %v159, %v157
    %v224 = vpack.c.bf16 %v160, %v158
    %v225 = vld [vmem:[%s1] sm:$0xf]
    %v226 = vld [vmem:[%s1 + $0x4] sm:$0xf]
    %v227 = vld [vmem:[%s1 + $0x8] sm:$0xf]
    %v228 = vld [vmem:[%s1 + $0xc] sm:$0xf]
    %v229 = vld [vmem:[%s1 + $0x10] sm:$0xf]
    %v230 = vld [vmem:[%s1 + $0x14] sm:$0xf]
    %v231 = vld [vmem:[%s1 + $0x18] sm:$0xf]
    %v232 = vld [vmem:[%s1 + $0x1c] sm:$0xf]
    %v233 = vld [vmem:[%s1 + $0x20] sm:$0xf]
    %v234 = vld [vmem:[%s1 + $0x24] sm:$0xf]
    %v235 = vld [vmem:[%s1 + $0x28] sm:$0xf]
    %v236 = vld [vmem:[%s1 + $0x2c] sm:$0xf]
    %v237 = vld [vmem:[%s1 + $0x30] sm:$0xf]
    %v238 = vld [vmem:[%s1 + $0x34] sm:$0xf]
    %v239 = vld [vmem:[%s1 + $0x38] sm:$0xf]
    %v240 = vld [vmem:[%s1 + $0x3c] sm:$0xf]
    %v241 = vld [vmem:[%s1 + $0x40] sm:$0xf]
    %v242 = vld [vmem:[%s1 + $0x44] sm:$0xf]
    %v243 = vld [vmem:[%s1 + $0x48] sm:$0xf]
    %v244 = vld [vmem:[%s1 + $0x4c] sm:$0xf]
    %v245 = vld [vmem:[%s1 + $0x50] sm:$0xf]
    %v246 = vld [vmem:[%s1 + $0x54] sm:$0xf]
    %v247 = vld [vmem:[%s1 + $0x58] sm:$0xf]
    %v248 = vld [vmem:[%s1 + $0x5c] sm:$0xf]
    %v249 = vld [vmem:[%s1 + $0x60] sm:$0xf]
    %v250 = vld [vmem:[%s1 + $0x64] sm:$0xf]
    %v251 = vld [vmem:[%s1 + $0x68] sm:$0xf]
    %v252 = vld [vmem:[%s1 + $0x6c] sm:$0xf]
    %v253 = vld [vmem:[%s1 + $0x70] sm:$0xf]
    %v254 = vld [vmem:[%s1 + $0x74] sm:$0xf]
    %v255 = vld [vmem:[%s1 + $0x78] sm:$0xf]
    %v256 = vld [vmem:[%s1 + $0x7c] sm:$0xf]
    %v289 = vunpack.c.l.b16 %v225
    %v290 = vunpack.c.l.b16 %v226
    %v291 = vunpack.c.l.b16 %v227
    %v292 = vunpack.c.l.b16 %v228
    %v293 = vunpack.c.l.b16 %v229
    %v294 = vunpack.c.l.b16 %v230
    %v295 = vunpack.c.l.b16 %v231
    %v296 = vunpack.c.l.b16 %v232
    %v297 = vunpack.c.l.b16 %v233
    %v298 = vunpack.c.l.b16 %v234
    %v299 = vunpack.c.l.b16 %v235
    %v300 = vunpack.c.l.b16 %v236
    %v301 = vunpack.c.l.b16 %v237
    %v302 = vunpack.c.l.b16 %v238
    %v303 = vunpack.c.l.b16 %v239
    %v304 = vunpack.c.l.b16 %v240
    %v305 = vunpack.c.l.b16 %v241
    %v306 = vunpack.c.l.b16 %v242
    %v307 = vunpack.c.l.b16 %v243
    %v308 = vunpack.c.l.b16 %v244
    %v309 = vunpack.c.l.b16 %v245
    %v310 = vunpack.c.l.b16 %v246
    %v311 = vunpack.c.l.b16 %v247
    %v312 = vunpack.c.l.b16 %v248
    %v313 = vunpack.c.l.b16 %v249
    %v314 = vunpack.c.l.b16 %v250
    %v315 = vunpack.c.l.b16 %v251
    %v316 = vunpack.c.l.b16 %v252
    %v317 = vunpack.c.l.b16 %v253
    %v318 = vunpack.c.l.b16 %v254
    %v319 = vunpack.c.l.b16 %v255
    %v320 = vunpack.c.l.b16 %v256
    %v321 = vpack.c.b16 %v290, %v289
    %v322 = vpack.c.b16 %v292, %v291
    %v323 = vpack.c.b16 %v294, %v293
    %v324 = vpack.c.b16 %v296, %v295
    %v325 = vpack.c.b16 %v298, %v297
    %v326 = vpack.c.b16 %v300, %v299
    %v327 = vpack.c.b16 %v302, %v301
    %v328 = vpack.c.b16 %v304, %v303
    %v329 = vpack.c.b16 %v306, %v305
    %v330 = vpack.c.b16 %v308, %v307
    %v331 = vpack.c.b16 %v310, %v309
    %v332 = vpack.c.b16 %v312, %v311
    %v333 = vpack.c.b16 %v314, %v313
    %v334 = vpack.c.b16 %v316, %v315
    %v335 = vpack.c.b16 %v318, %v317
    %v336 = vpack.c.b16 %v320, %v319
    %353 = vmatpush.bf16.msra.mxu0 %v328
    %354 = vmatpush.bf16.msra.mxu0 %v327
    %355 = vmatpush.bf16.msra.mxu0 %v326
    %356 = vmatpush.bf16.msra.mxu0 %v325
    %357 = vmatpush.bf16.msra.mxu0 %v324
    %358 = vmatpush.bf16.msra.mxu0 %v323
    %359 = vmatpush.bf16.msra.mxu0 %v322
    %360 = vmatpush.bf16.msra.mxu0 %v321
    %361 = vmatmul.bf16.gmra.mxu0 %v161
    %v362 = vpop.f32.mrf.mxu0
    %v363 = vadd.f32 0.0, %v362
    %v364 = vpop.f32.mrf.mxu0
    %v365 = vadd.f32 0.0, %v364
    %366 = vmatmul.bf16.gmra.mxu0 %v163
    %v367 = vpop.f32.mrf.mxu0
    %v368 = vadd.f32 0.0, %v367
    %v369 = vpop.f32.mrf.mxu0
    %v370 = vadd.f32 0.0, %v369
    %371 = vmatmul.bf16.gmra.mxu0 %v165
    %v372 = vpop.f32.mrf.mxu0
    %v373 = vadd.f32 0.0, %v372
    %v374 = vpop.f32.mrf.mxu0
    %v375 = vadd.f32 0.0, %v374
    %376 = vmatmul.bf16.gmra.mxu0 %v167
    %v377 = vpop.f32.mrf.mxu0
    %v378 = vadd.f32 0.0, %v377
    %v379 = vpop.f32.mrf.mxu0
    %v380 = vadd.f32 0.0, %v379
    %381 = vmatmul.bf16.gmra.mxu0 %v169
    %v382 = vpop.f32.mrf.mxu0
    %v383 = vadd.f32 0.0, %v382
    %v384 = vpop.f32.mrf.mxu0
    %v385 = vadd.f32 0.0, %v384
    %386 = vmatmul.bf16.gmra.mxu0 %v171
    %v387 = vpop.f32.mrf.mxu0
    %v388 = vadd.f32 0.0, %v387
    %v389 = vpop.f32.mrf.mxu0
    %v390 = vadd.f32 0.0, %v389
    %391 = vmatmul.bf16.gmra.mxu0 %v173
    %v392 = vpop.f32.mrf.mxu0
    %v393 = vadd.f32 0.0, %v392
    %v394 = vpop.f32.mrf.mxu0
    %v395 = vadd.f32 0.0, %v394
    %396 = vmatmul.bf16.gmra.mxu0 %v175
    %v397 = vpop.f32.mrf.mxu0
    %v398 = vadd.f32 0.0, %v397
    %v399 = vpop.f32.mrf.mxu0
    %v400 = vadd.f32 0.0, %v399
    %401 = vmatmul.bf16.gmra.mxu0 %v177
    %v402 = vpop.f32.mrf.mxu0
    %v403 = vadd.f32 0.0, %v402
    %v404 = vpop.f32.mrf.mxu0
    %v405 = vadd.f32 0.0, %v404
    %406 = vmatmul.bf16.gmra.mxu0 %v179
    %v407 = vpop.f32.mrf.mxu0
    %v408 = vadd.f32 0.0, %v407
    %v409 = vpop.f32.mrf.mxu0
    %v410 = vadd.f32 0.0, %v409
    %411 = vmatmul.bf16.gmra.mxu0 %v181
    %v412 = vpop.f32.mrf.mxu0
    %v413 = vadd.f32 0.0, %v412
    %v414 = vpop.f32.mrf.mxu0
    %v415 = vadd.f32 0.0, %v414
    %416 = vmatmul.bf16.gmra.mxu0 %v183
    %v417 = vpop.f32.mrf.mxu0
    %v418 = vadd.f32 0.0, %v417
    %v419 = vpop.f32.mrf.mxu0
    %v420 = vadd.f32 0.0, %v419
    %421 = vmatmul.bf16.gmra.mxu0 %v185
    %v422 = vpop.f32.mrf.mxu0
    %v423 = vadd.f32 0.0, %v422
    %v424 = vpop.f32.mrf.mxu0
    %v425 = vadd.f32 0.0, %v424
    %426 = vmatmul.bf16.gmra.mxu0 %v187
    %v427 = vpop.f32.mrf.mxu0
    %v428 = vadd.f32 0.0, %v427
    %v429 = vpop.f32.mrf.mxu0
    %v430 = vadd.f32 0.0, %v429
    %431 = vmatmul.bf16.gmra.mxu0 %v189
    %v432 = vpop.f32.mrf.mxu0
    %v433 = vadd.f32 0.0, %v432
    %v434 = vpop.f32.mrf.mxu0
    %v435 = vadd.f32 0.0, %v434
    %436 = vmatmul.bf16.gmra.mxu0 %v191
    %v437 = vpop.f32.mrf.mxu0
    %v438 = vadd.f32 0.0, %v437
    %v439 = vpop.f32.mrf.mxu0
    %v440 = vadd.f32 0.0, %v439
    %441 = vmatmul.bf16.gmra.mxu0 %v193
    %v442 = vpop.f32.mrf.mxu0
    %v443 = vadd.f32 0.0, %v442
    %v444 = vpop.f32.mrf.mxu0
    %v445 = vadd.f32 0.0, %v444
    %446 = vmatmul.bf16.gmra.mxu0 %v195
    %v447 = vpop.f32.mrf.mxu0
    %v448 = vadd.f32 0.0, %v447
    %v449 = vpop.f32.mrf.mxu0
    %v450 = vadd.f32 0.0, %v449
    %451 = vmatmul.bf16.gmra.mxu0 %v197
    %v452 = vpop.f32.mrf.mxu0
    %v453 = vadd.f32 0.0, %v452
    %v454 = vpop.f32.mrf.mxu0
    %v455 = vadd.f32 0.0, %v454
    %456 = vmatmul.bf16.gmra.mxu0 %v199
    %v457 = vpop.f32.mrf.mxu0
    %v458 = vadd.f32 0.0, %v457
    %v459 = vpop.f32.mrf.mxu0
    %v460 = vadd.f32 0.0, %v459
    %461 = vmatmul.bf16.gmra.mxu0 %v201
    %v462 = vpop.f32.mrf.mxu0
    %v463 = vadd.f32 0.0, %v462
    %v464 = vpop.f32.mrf.mxu0
    %v465 = vadd.f32 0.0, %v464
    %466 = vmatmul.bf16.gmra.mxu0 %v203
    %v467 = vpop.f32.mrf.mxu0
    %v468 = vadd.f32 0.0, %v467
    %v469 = vpop.f32.mrf.mxu0
    %v470 = vadd.f32 0.0, %v469
    %471 = vmatmul.bf16.gmra.mxu0 %v205
    %v472 = vpop.f32.mrf.mxu0
    %v473 = vadd.f32 0.0, %v472
    %v474 = vpop.f32.mrf.mxu0
    %v475 = vadd.f32 0.0, %v474
    %476 = vmatmul.bf16.gmra.mxu0 %v207
    %v477 = vpop.f32.mrf.mxu0
    %v478 = vadd.f32 0.0, %v477
    %v479 = vpop.f32.mrf.mxu0
    %v480 = vadd.f32 0.0, %v479
    %481 = vmatmul.bf16.gmra.mxu0 %v209
    %v482 = vpop.f32.mrf.mxu0
    %v483 = vadd.f32 0.0, %v482
    %v484 = vpop.f32.mrf.mxu0
    %v485 = vadd.f32 0.0, %v484
    %486 = vmatmul.bf16.gmra.mxu0 %v211
    %v487 = vpop.f32.mrf.mxu0
    %v488 = vadd.f32 0.0, %v487
    %v489 = vpop.f32.mrf.mxu0
    %v490 = vadd.f32 0.0, %v489
    %491 = vmatmul.bf16.gmra.mxu0 %v213
    %v492 = vpop.f32.mrf.mxu0
    %v493 = vadd.f32 0.0, %v492
    %v494 = vpop.f32.mrf.mxu0
    %v495 = vadd.f32 0.0, %v494
    %496 = vmatmul.bf16.gmra.mxu0 %v215
    %v497 = vpop.f32.mrf.mxu0
    %v498 = vadd.f32 0.0, %v497
    %v499 = vpop.f32.mrf.mxu0
    %v500 = vadd.f32 0.0, %v499
    %501 = vmatmul.bf16.gmra.mxu0 %v217
    %v502 = vpop.f32.mrf.mxu0
    %v503 = vadd.f32 0.0, %v502
    %v504 = vpop.f32.mrf.mxu0
    %v505 = vadd.f32 0.0, %v504
    %506 = vmatmul.bf16.gmra.mxu0 %v219
    %v507 = vpop.f32.mrf.mxu0
    %v508 = vadd.f32 0.0, %v507
    %v509 = vpop.f32.mrf.mxu0
    %v510 = vadd.f32 0.0, %v509
    %511 = vmatmul.bf16.gmra.mxu0 %v221
    %v512 = vpop.f32.mrf.mxu0
    %v513 = vadd.f32 0.0, %v512
    %v514 = vpop.f32.mrf.mxu0
    %v515 = vadd.f32 0.0, %v514
    %516 = vmatmul.bf16.gmra.mxu0 %v223
    %v517 = vpop.f32.mrf.mxu0
    %v518 = vadd.f32 0.0, %v517
    %v519 = vpop.f32.mrf.mxu0
    %v520 = vadd.f32 0.0, %v519
    %521 = vdwg.mxu0
    %522 = vmatpush.bf16.msra.mxu0 %v336
    %523 = vmatpush.bf16.msra.mxu0 %v335
    %524 = vmatpush.bf16.msra.mxu0 %v334
    %525 = vmatpush.bf16.msra.mxu0 %v333
    %526 = vmatpush.bf16.msra.mxu0 %v332
    %527 = vmatpush.bf16.msra.mxu0 %v331
    %528 = vmatpush.bf16.msra.mxu0 %v330
    %529 = vmatpush.bf16.msra.mxu0 %v329
    %530 = vmatmul.bf16.gmra.mxu0 %v162
    %v531 = vpop.f32.mrf.mxu0
    %v532 = vadd.f32 %v363, %v531
    %v533 = vpop.f32.mrf.mxu0
    %v534 = vadd.f32 %v365, %v533
    %535 = vmatmul.bf16.gmra.mxu0 %v164
    %v536 = vpop.f32.mrf.mxu0
    %v537 = vadd.f32 %v368, %v536
    %v538 = vpop.f32.mrf.mxu0
    %v539 = vadd.f32 %v370, %v538
    %540 = vmatmul.bf16.gmra.mxu0 %v166
    %v541 = vpop.f32.mrf.mxu0
    %v542 = vadd.f32 %v373, %v541
    %v543 = vpop.f32.mrf.mxu0
    %v544 = vadd.f32 %v375, %v543
    %545 = vmatmul.bf16.gmra.mxu0 %v168
    %v546 = vpop.f32.mrf.mxu0
    %v547 = vadd.f32 %v378, %v546
    %v548 = vpop.f32.mrf.mxu0
    %v549 = vadd.f32 %v380, %v548
    %550 = vmatmul.bf16.gmra.mxu0 %v170
    %v551 = vpop.f32.mrf.mxu0
    %v552 = vadd.f32 %v383, %v551
    %v553 = vpop.f32.mrf.mxu0
    %v554 = vadd.f32 %v385, %v553
    %555 = vmatmul.bf16.gmra.mxu0 %v172
    %v556 = vpop.f32.mrf.mxu0
    %v557 = vadd.f32 %v388, %v556
    %v558 = vpop.f32.mrf.mxu0
    %v559 = vadd.f32 %v390, %v558
    %560 = vmatmul.bf16.gmra.mxu0 %v174
    %v561 = vpop.f32.mrf.mxu0
    %v562 = vadd.f32 %v393, %v561
    %v563 = vpop.f32.mrf.mxu0
    %v564 = vadd.f32 %v395, %v563
    %565 = vmatmul.bf16.gmra.mxu0 %v176
    %v566 = vpop.f32.mrf.mxu0
    %v567 = vadd.f32 %v398, %v566
    %v568 = vpop.f32.mrf.mxu0
    %v569 = vadd.f32 %v400, %v568
    %570 = vmatmul.bf16.gmra.mxu0 %v178
    %v571 = vpop.f32.mrf.mxu0
    %v572 = vadd.f32 %v403, %v571
    %v573 = vpop.f32.mrf.mxu0
    %v574 = vadd.f32 %v405, %v573
    %575 = vmatmul.bf16.gmra.mxu0 %v180
    %v576 = vpop.f32.mrf.mxu0
    %v577 = vadd.f32 %v408, %v576
    %v578 = vpop.f32.mrf.mxu0
    %v579 = vadd.f32 %v410, %v578
    %580 = vmatmul.bf16.gmra.mxu0 %v182
    %v581 = vpop.f32.mrf.mxu0
    %v582 = vadd.f32 %v413, %v581
    %v583 = vpop.f32.mrf.mxu0
    %v584 = vadd.f32 %v415, %v583
    %585 = vmatmul.bf16.gmra.mxu0 %v184
    %v586 = vpop.f32.mrf.mxu0
    %v587 = vadd.f32 %v418, %v586
    %v588 = vpop.f32.mrf.mxu0
    %v589 = vadd.f32 %v420, %v588
    %590 = vmatmul.bf16.gmra.mxu0 %v186
    %v591 = vpop.f32.mrf.mxu0
    %v592 = vadd.f32 %v423, %v591
    %v593 = vpop.f32.mrf.mxu0
    %v594 = vadd.f32 %v425, %v593
    %595 = vmatmul.bf16.gmra.mxu0 %v188
    %v596 = vpop.f32.mrf.mxu0
    %v597 = vadd.f32 %v428, %v596
    %v598 = vpop.f32.mrf.mxu0
    %v599 = vadd.f32 %v430, %v598
    %600 = vmatmul.bf16.gmra.mxu0 %v190
    %v601 = vpop.f32.mrf.mxu0
    %v602 = vadd.f32 %v433, %v601
    %v603 = vpop.f32.mrf.mxu0
    %v604 = vadd.f32 %v435, %v603
    %605 = vmatmul.bf16.gmra.mxu0 %v192
    %v606 = vpop.f32.mrf.mxu0
    %v607 = vadd.f32 %v438, %v606
    %v608 = vpop.f32.mrf.mxu0
    %v609 = vadd.f32 %v440, %v608
    %610 = vmatmul.bf16.gmra.mxu0 %v194
    %v611 = vpop.f32.mrf.mxu0
    %v612 = vadd.f32 %v443, %v611
    %v613 = vpop.f32.mrf.mxu0
    %v614 = vadd.f32 %v445, %v613
    %615 = vmatmul.bf16.gmra.mxu0 %v196
    %v616 = vpop.f32.mrf.mxu0
    %v617 = vadd.f32 %v448, %v616
    %v618 = vpop.f32.mrf.mxu0
    %v619 = vadd.f32 %v450, %v618
    %620 = vmatmul.bf16.gmra.mxu0 %v198
    %v621 = vpop.f32.mrf.mxu0
    %v622 = vadd.f32 %v453, %v621
    %v623 = vpop.f32.mrf.mxu0
    %v624 = vadd.f32 %v455, %v623
    %625 = vmatmul.bf16.gmra.mxu0 %v200
    %v626 = vpop.f32.mrf.mxu0
    %v627 = vadd.f32 %v458, %v626
    %v628 = vpop.f32.mrf.mxu0
    %v629 = vadd.f32 %v460, %v628
    %630 = vmatmul.bf16.gmra.mxu0 %v202
    %v631 = vpop.f32.mrf.mxu0
    %v632 = vadd.f32 %v463, %v631
    %v633 = vpop.f32.mrf.mxu0
    %v634 = vadd.f32 %v465, %v633
    %635 = vmatmul.bf16.gmra.mxu0 %v204
    %v636 = vpop.f32.mrf.mxu0
    %v637 = vadd.f32 %v468, %v636
    %v638 = vpop.f32.mrf.mxu0
    %v639 = vadd.f32 %v470, %v638
    %640 = vmatmul.bf16.gmra.mxu0 %v206
    %v641 = vpop.f32.mrf.mxu0
    %v642 = vadd.f32 %v473, %v641
    %v643 = vpop.f32.mrf.mxu0
    %v644 = vadd.f32 %v475, %v643
    %645 = vmatmul.bf16.gmra.mxu0 %v208
    %v646 = vpop.f32.mrf.mxu0
    %v647 = vadd.f32 %v478, %v646
    %v648 = vpop.f32.mrf.mxu0
    %v649 = vadd.f32 %v480, %v648
    %650 = vmatmul.bf16.gmra.mxu0 %v210
    %v651 = vpop.f32.mrf.mxu0
    %v652 = vadd.f32 %v483, %v651
    %v653 = vpop.f32.mrf.mxu0
    %v654 = vadd.f32 %v485, %v653
    %655 = vmatmul.bf16.gmra.mxu0 %v212
    %v656 = vpop.f32.mrf.mxu0
    %v657 = vadd.f32 %v488, %v656
    %v658 = vpop.f32.mrf.mxu0
    %v659 = vadd.f32 %v490, %v658
    %660 = vmatmul.bf16.gmra.mxu0 %v214
    %v661 = vpop.f32.mrf.mxu0
    %v662 = vadd.f32 %v493, %v661
    %v663 = vpop.f32.mrf.mxu0
    %v664 = vadd.f32 %v495, %v663
    %665 = vmatmul.bf16.gmra.mxu0 %v216
    %v666 = vpop.f32.mrf.mxu0
    %v667 = vadd.f32 %v498, %v666
    %v668 = vpop.f32.mrf.mxu0
    %v669 = vadd.f32 %v500, %v668
    %670 = vmatmul.bf16.gmra.mxu0 %v218
    %v671 = vpop.f32.mrf.mxu0
    %v672 = vadd.f32 %v503, %v671
    %v673 = vpop.f32.mrf.mxu0
    %v674 = vadd.f32 %v505, %v673
    %675 = vmatmul.bf16.gmra.mxu0 %v220
    %v676 = vpop.f32.mrf.mxu0
    %v677 = vadd.f32 %v508, %v676
    %v678 = vpop.f32.mrf.mxu0
    %v679 = vadd.f32 %v510, %v678
    %680 = vmatmul.bf16.gmra.mxu0 %v222
    %v681 = vpop.f32.mrf.mxu0
    %v682 = vadd.f32 %v513, %v681
    %v683 = vpop.f32.mrf.mxu0
    %v684 = vadd.f32 %v515, %v683
    %685 = vmatmul.bf16.gmra.mxu0 %v224
    %v686 = vpop.f32.mrf.mxu0
    %v687 = vadd.f32 %v518, %v686
    %v688 = vpop.f32.mrf.mxu0
    %v689 = vadd.f32 %v520, %v688
    %690 = vdwg.mxu0
    %vm691 = vcmask 130048
    %v692 = vsel %vm691, %v532, 0.0
    %v693 = vsel %vm691, %v534, 0.0
    %v694 = vadd.f32 %v692, %v693
    %v695 = vsel %vm691, %v537, 0.0
    %v696 = vadd.f32 %v694, %v695
    %v697 = vsel %vm691, %v539, 0.0
    %v698 = vadd.f32 %v696, %v697
    %v699 = vsel %vm691, %v542, 0.0
    %v700 = vadd.f32 %v698, %v699
    %v701 = vsel %vm691, %v544, 0.0
    %v702 = vadd.f32 %v700, %v701
    %v703 = vsel %vm691, %v547, 0.0
    %v704 = vadd.f32 %v702, %v703
    %v705 = vsel %vm691, %v549, 0.0
    %v706 = vadd.f32 %v704, %v705
    %v707 = vsel %vm691, %v552, 0.0
    %v708 = vadd.f32 %v706, %v707
    %v709 = vsel %vm691, %v554, 0.0
    %v710 = vadd.f32 %v708, %v709
    %v711 = vsel %vm691, %v557, 0.0
    %v712 = vadd.f32 %v710, %v711
    %v713 = vsel %vm691, %v559, 0.0
    %v714 = vadd.f32 %v712, %v713
    %v715 = vsel %vm691, %v562, 0.0
    %v716 = vadd.f32 %v714, %v715
    %v717 = vsel %vm691, %v564, 0.0
    %v718 = vadd.f32 %v716, %v717
    %v719 = vsel %vm691, %v567, 0.0
    %v720 = vadd.f32 %v718, %v719
    %v721 = vsel %vm691, %v569, 0.0
    %v722 = vadd.f32 %v720, %v721
    %v723 = vsel %vm691, %v572, 0.0
    %v724 = vadd.f32 %v722, %v723
    %v725 = vsel %vm691, %v574, 0.0
    %v726 = vadd.f32 %v724, %v725
    %v727 = vsel %vm691, %v577, 0.0
    %v728 = vadd.f32 %v726, %v727
    %v729 = vsel %vm691, %v579, 0.0
    %v730 = vadd.f32 %v728, %v729
    %v731 = vsel %vm691, %v582, 0.0
    %v732 = vadd.f32 %v730, %v731
    %v733 = vsel %vm691, %v584, 0.0
    %v734 = vadd.f32 %v732, %v733
    %v735 = vsel %vm691, %v587, 0.0
    %v736 = vadd.f32 %v734, %v735
    %v737 = vsel %vm691, %v589, 0.0
    %v738 = vadd.f32 %v736, %v737
    %v739 = vsel %vm691, %v592, 0.0
    %v740 = vadd.f32 %v738, %v739
    %v741 = vsel %vm691, %v594, 0.0
    %v742 = vadd.f32 %v740, %v741
    %v743 = vsel %vm691, %v597, 0.0
    %v744 = vadd.f32 %v742, %v743
    %v745 = vsel %vm691, %v599, 0.0
    %v746 = vadd.f32 %v744, %v745
    %v747 = vsel %vm691, %v602, 0.0
    %v748 = vadd.f32 %v746, %v747
    %v749 = vsel %vm691, %v604, 0.0
    %v750 = vadd.f32 %v748, %v749
    %v751 = vsel %vm691, %v607, 0.0
    %v752 = vadd.f32 %v750, %v751
    %v753 = vsel %vm691, %v609, 0.0
    %v754 = vadd.f32 %v752, %v753
    %v755 = vsel %vm691, %v612, 0.0
    %v756 = vadd.f32 %v754, %v755
    %v757 = vsel %vm691, %v614, 0.0
    %v758 = vadd.f32 %v756, %v757
    %v759 = vsel %vm691, %v617, 0.0
    %v760 = vadd.f32 %v758, %v759
    %v761 = vsel %vm691, %v619, 0.0
    %v762 = vadd.f32 %v760, %v761
    %v763 = vsel %vm691, %v622, 0.0
    %v764 = vadd.f32 %v762, %v763
    %v765 = vsel %vm691, %v624, 0.0
    %v766 = vadd.f32 %v764, %v765
    %v767 = vsel %vm691, %v627, 0.0
    %v768 = vadd.f32 %v766, %v767
    %v769 = vsel %vm691, %v629, 0.0
    %v770 = vadd.f32 %v768, %v769
    %v771 = vsel %vm691, %v632, 0.0
    %v772 = vadd.f32 %v770, %v771
    %v773 = vsel %vm691, %v634, 0.0
    %v774 = vadd.f32 %v772, %v773
    %v775 = vsel %vm691, %v637, 0.0
    %v776 = vadd.f32 %v774, %v775
    %v777 = vsel %vm691, %v639, 0.0
    %v778 = vadd.f32 %v776, %v777
    %v779 = vsel %vm691, %v642, 0.0
    %v780 = vadd.f32 %v778, %v779
    %v781 = vsel %vm691, %v644, 0.0
    %v782 = vadd.f32 %v780, %v781
    %v783 = vsel %vm691, %v647, 0.0
    %v784 = vadd.f32 %v782, %v783
    %v785 = vsel %vm691, %v649, 0.0
    %v786 = vadd.f32 %v784, %v785
    %v787 = vsel %vm691, %v652, 0.0
    %v788 = vadd.f32 %v786, %v787
    %v789 = vsel %vm691, %v654, 0.0
    %v790 = vadd.f32 %v788, %v789
    %v791 = vsel %vm691, %v657, 0.0
    %v792 = vadd.f32 %v790, %v791
    %v793 = vsel %vm691, %v659, 0.0
    %v794 = vadd.f32 %v792, %v793
    %v795 = vsel %vm691, %v662, 0.0
    %v796 = vadd.f32 %v794, %v795
    %v797 = vsel %vm691, %v664, 0.0
    %v798 = vadd.f32 %v796, %v797
    %v799 = vsel %vm691, %v667, 0.0
    %v800 = vadd.f32 %v798, %v799
    %v801 = vsel %vm691, %v669, 0.0
    %v802 = vadd.f32 %v800, %v801
    %v803 = vsel %vm691, %v672, 0.0
    %v804 = vadd.f32 %v802, %v803
    %v805 = vsel %vm691, %v674, 0.0
    %v806 = vadd.f32 %v804, %v805
    %v807 = vsel %vm691, %v677, 0.0
    %v808 = vadd.f32 %v806, %v807
    %v809 = vsel %vm691, %v679, 0.0
    %v810 = vadd.f32 %v808, %v809
    %v811 = vsel %vm691, %v682, 0.0
    %v812 = vadd.f32 %v810, %v811
    %v813 = vsel %vm691, %v684, 0.0
    %v814 = vadd.f32 %v812, %v813
    %v815 = vsel %vm691, %v687, 0.0
    %v816 = vadd.f32 %v814, %v815
    %v817 = vsel %vm691, %v689, 0.0
    %v818 = vadd.f32 %v816, %v817
    %v819 = vrot.slane %v818, 4
    %v820 = vadd.f32 %v818, %v819
    %v821 = vrot.slane %v820, 2
    %v822 = vadd.f32 %v820, %v821
    %v823 = vrot.slane %v822, 1
    %v824 = vadd.f32 %v822, %v823
    %v825 = vrcp.pop 512.0
    %v826 = vmul.f32 512.0, %v825
    %v827 = vsub.f32 1.0, %v826
    %v828 = vmul.f32 %v825, %v827
    %v829 = vadd.f32 %v825, %v828
    %vm830 = vweird.f32 %v825
    %v831 = vsel %vm830, %v825, %v829
    %v832 = vmul.f32 %v824, %v831
    %v833 = vsub.f32 %v532, %v832
    %v834 = vsub.f32 %v534, %v832
    %v835 = vsub.f32 %v537, %v832
    %v836 = vsub.f32 %v539, %v832
    %v837 = vsub.f32 %v542, %v832
    %v838 = vsub.f32 %v544, %v832
    %v839 = vsub.f32 %v547, %v832
    %v840 = vsub.f32 %v549, %v832
    %v841 = vsub.f32 %v552, %v832
    %v842 = vsub.f32 %v554, %v832
    %v843 = vsub.f32 %v557, %v832
    %v844 = vsub.f32 %v559, %v832
    %v845 = vsub.f32 %v562, %v832
    %v846 = vsub.f32 %v564, %v832
    %v847 = vsub.f32 %v567, %v832
    %v848 = vsub.f32 %v569, %v832
    %v849 = vsub.f32 %v572, %v832
    %v850 = vsub.f32 %v574, %v832
    %v851 = vsub.f32 %v577, %v832
    %v852 = vsub.f32 %v579, %v832
    %v853 = vsub.f32 %v582, %v832
    %v854 = vsub.f32 %v584, %v832
    %v855 = vsub.f32 %v587, %v832
    %v856 = vsub.f32 %v589, %v832
    %v857 = vsub.f32 %v592, %v832
    %v858 = vsub.f32 %v594, %v832
    %v859 = vsub.f32 %v597, %v832
    %v860 = vsub.f32 %v599, %v832
    %v861 = vsub.f32 %v602, %v832
    %v862 = vsub.f32 %v604, %v832
    %v863 = vsub.f32 %v607, %v832
    %v864 = vsub.f32 %v609, %v832
    %v865 = vsub.f32 %v612, %v832
    %v866 = vsub.f32 %v614, %v832
    %v867 = vsub.f32 %v617, %v832
    %v868 = vsub.f32 %v619, %v832
    %v869 = vsub.f32 %v622, %v832
    %v870 = vsub.f32 %v624, %v832
    %v871 = vsub.f32 %v627, %v832
    %v872 = vsub.f32 %v629, %v832
    %v873 = vsub.f32 %v632, %v832
    %v874 = vsub.f32 %v634, %v832
    %v875 = vsub.f32 %v637, %v832
    %v876 = vsub.f32 %v639, %v832
    %v877 = vsub.f32 %v642, %v832
    %v878 = vsub.f32 %v644, %v832
    %v879 = vsub.f32 %v647, %v832
    %v880 = vsub.f32 %v649, %v832
    %v881 = vsub.f32 %v652, %v832
    %v882 = vsub.f32 %v654, %v832
    %v883 = vsub.f32 %v657, %v832
    %v884 = vsub.f32 %v659, %v832
    %v885 = vsub.f32 %v662, %v832
    %v886 = vsub.f32 %v664, %v832
    %v887 = vsub.f32 %v667, %v832
    %v888 = vsub.f32 %v669, %v832
    %v889 = vsub.f32 %v672, %v832
    %v890 = vsub.f32 %v674, %v832
    %v891 = vsub.f32 %v677, %v832
    %v892 = vsub.f32 %v679, %v832
    %v893 = vsub.f32 %v682, %v832
    %v894 = vsub.f32 %v684, %v832
    %v895 = vsub.f32 %v687, %v832
    %v896 = vsub.f32 %v689, %v832
    %v897 = vmul.f32 %v833, %v833
    %v898 = vmul.f32 %v834, %v834
    %v899 = vmul.f32 %v835, %v835
    %v900 = vmul.f32 %v836, %v836
    %v901 = vmul.f32 %v837, %v837
    %v902 = vmul.f32 %v838, %v838
    %v903 = vmul.f32 %v839, %v839
    %v904 = vmul.f32 %v840, %v840
    %v905 = vmul.f32 %v841, %v841
    %v906 = vmul.f32 %v842, %v842
    %v907 = vmul.f32 %v843, %v843
    %v908 = vmul.f32 %v844, %v844
    %v909 = vmul.f32 %v845, %v845
    %v910 = vmul.f32 %v846, %v846
    %v911 = vmul.f32 %v847, %v847
    %v912 = vmul.f32 %v848, %v848
    %v913 = vmul.f32 %v849, %v849
    %v914 = vmul.f32 %v850, %v850
    %v915 = vmul.f32 %v851, %v851
    %v916 = vmul.f32 %v852, %v852
    %v917 = vmul.f32 %v853, %v853
    %v918 = vmul.f32 %v854, %v854
    %v919 = vmul.f32 %v855, %v855
    %v920 = vmul.f32 %v856, %v856
    %v921 = vmul.f32 %v857, %v857
    %v922 = vmul.f32 %v858, %v858
    %v923 = vmul.f32 %v859, %v859
    %v924 = vmul.f32 %v860, %v860
    %v925 = vmul.f32 %v861, %v861
    %v926 = vmul.f32 %v862, %v862
    %v927 = vmul.f32 %v863, %v863
    %v928 = vmul.f32 %v864, %v864
    %v929 = vmul.f32 %v865, %v865
    %v930 = vmul.f32 %v866, %v866
    %v931 = vmul.f32 %v867, %v867
    %v932 = vmul.f32 %v868, %v868
    %v933 = vmul.f32 %v869, %v869
    %v934 = vmul.f32 %v870, %v870
    %v935 = vmul.f32 %v871, %v871
    %v936 = vmul.f32 %v872, %v872
    %v937 = vmul.f32 %v873, %v873
    %v938 = vmul.f32 %v874, %v874
    %v939 = vmul.f32 %v875, %v875
    %v940 = vmul.f32 %v876, %v876
    %v941 = vmul.f32 %v877, %v877
    %v942 = vmul.f32 %v878, %v878
    %v943 = vmul.f32 %v879, %v879
    %v944 = vmul.f32 %v880, %v880
    %v945 = vmul.f32 %v881, %v881
    %v946 = vmul.f32 %v882, %v882
    %v947 = vmul.f32 %v883, %v883
    %v948 = vmul.f32 %v884, %v884
    %v949 = vmul.f32 %v885, %v885
    %v950 = vmul.f32 %v886, %v886
    %v951 = vmul.f32 %v887, %v887
    %v952 = vmul.f32 %v888, %v888
    %v953 = vmul.f32 %v889, %v889
    %v954 = vmul.f32 %v890, %v890
    %v955 = vmul.f32 %v891, %v891
    %v956 = vmul.f32 %v892, %v892
    %v957 = vmul.f32 %v893, %v893
    %v958 = vmul.f32 %v894, %v894
    %v959 = vmul.f32 %v895, %v895
    %v960 = vmul.f32 %v896, %v896
    %v961 = vsel %vm691, %v897, 0.0
    %v962 = vsel %vm691, %v898, 0.0
    %v963 = vadd.f32 %v961, %v962
    %v964 = vsel %vm691, %v899, 0.0
    %v965 = vadd.f32 %v963, %v964
    %v966 = vsel %vm691, %v900, 0.0
    %v967 = vadd.f32 %v965, %v966
    %v968 = vsel %vm691, %v901, 0.0
    %v969 = vadd.f32 %v967, %v968
    %v970 = vsel %vm691, %v902, 0.0
    %v971 = vadd.f32 %v969, %v970
    %v972 = vsel %vm691, %v903, 0.0
    %v973 = vadd.f32 %v971, %v972
    %v974 = vsel %vm691, %v904, 0.0
    %v975 = vadd.f32 %v973, %v974
    %v976 = vsel %vm691, %v905, 0.0
    %v977 = vadd.f32 %v975, %v976
    %v978 = vsel %vm691, %v906, 0.0
    %v979 = vadd.f32 %v977, %v978
    %v980 = vsel %vm691, %v907, 0.0
    %v981 = vadd.f32 %v979, %v980
    %v982 = vsel %vm691, %v908, 0.0
    %v983 = vadd.f32 %v981, %v982
    %v984 = vsel %vm691, %v909, 0.0
    %v985 = vadd.f32 %v983, %v984
    %v986 = vsel %vm691, %v910, 0.0
    %v987 = vadd.f32 %v985, %v986
    %v988 = vsel %vm691, %v911, 0.0
    %v989 = vadd.f32 %v987, %v988
    %v990 = vsel %vm691, %v912, 0.0
    %v991 = vadd.f32 %v989, %v990
    %v992 = vsel %vm691, %v913, 0.0
    %v993 = vadd.f32 %v991, %v992
    %v994 = vsel %vm691, %v914, 0.0
    %v995 = vadd.f32 %v993, %v994
    %v996 = vsel %vm691, %v915, 0.0
    %v997 = vadd.f32 %v995, %v996
    %v998 = vsel %vm691, %v916, 0.0
    %v999 = vadd.f32 %v997, %v998
    %v1000 = vsel %vm691, %v917, 0.0
    %v1001 = vadd.f32 %v999, %v1000
    %v1002 = vsel %vm691, %v918, 0.0
    %v1003 = vadd.f32 %v1001, %v1002
    %v1004 = vsel %vm691, %v919, 0.0
    %v1005 = vadd.f32 %v1003, %v1004
    %v1006 = vsel %vm691, %v920, 0.0
    %v1007 = vadd.f32 %v1005, %v1006
    %v1008 = vsel %vm691, %v921, 0.0
    %v1009 = vadd.f32 %v1007, %v1008
    %v1010 = vsel %vm691, %v922, 0.0
    %v1011 = vadd.f32 %v1009, %v1010
    %v1012 = vsel %vm691, %v923, 0.0
    %v1013 = vadd.f32 %v1011, %v1012
    %v1014 = vsel %vm691, %v924, 0.0
    %v1015 = vadd.f32 %v1013, %v1014
    %v1016 = vsel %vm691, %v925, 0.0
    %v1017 = vadd.f32 %v1015, %v1016
    %v1018 = vsel %vm691, %v926, 0.0
    %v1019 = vadd.f32 %v1017, %v1018
    %v1020 = vsel %vm691, %v927, 0.0
    %v1021 = vadd.f32 %v1019, %v1020
    %v1022 = vsel %vm691, %v928, 0.0
    %v1023 = vadd.f32 %v1021, %v1022
    %v1024 = vsel %vm691, %v929, 0.0
    %v1025 = vadd.f32 %v1023, %v1024
    %v1026 = vsel %vm691, %v930, 0.0
    %v1027 = vadd.f32 %v1025, %v1026
    %v1028 = vsel %vm691, %v931, 0.0
    %v1029 = vadd.f32 %v1027, %v1028
    %v1030 = vsel %vm691, %v932, 0.0
    %v1031 = vadd.f32 %v1029, %v1030
    %v1032 = vsel %vm691, %v933, 0.0
    %v1033 = vadd.f32 %v1031, %v1032
    %v1034 = vsel %vm691, %v934, 0.0
    %v1035 = vadd.f32 %v1033, %v1034
    %v1036 = vsel %vm691, %v935, 0.0
    %v1037 = vadd.f32 %v1035, %v1036
    %v1038 = vsel %vm691, %v936, 0.0
    %v1039 = vadd.f32 %v1037, %v1038
    %v1040 = vsel %vm691, %v937, 0.0
    %v1041 = vadd.f32 %v1039, %v1040
    %v1042 = vsel %vm691, %v938, 0.0
    %v1043 = vadd.f32 %v1041, %v1042
    %v1044 = vsel %vm691, %v939, 0.0
    %v1045 = vadd.f32 %v1043, %v1044
    %v1046 = vsel %vm691, %v940, 0.0
    %v1047 = vadd.f32 %v1045, %v1046
    %v1048 = vsel %vm691, %v941, 0.0
    %v1049 = vadd.f32 %v1047, %v1048
    %v1050 = vsel %vm691, %v942, 0.0
    %v1051 = vadd.f32 %v1049, %v1050
    %v1052 = vsel %vm691, %v943, 0.0
    %v1053 = vadd.f32 %v1051, %v1052
    %v1054 = vsel %vm691, %v944, 0.0
    %v1055 = vadd.f32 %v1053, %v1054
    %v1056 = vsel %vm691, %v945, 0.0
    %v1057 = vadd.f32 %v1055, %v1056
    %v1058 = vsel %vm691, %v946, 0.0
    %v1059 = vadd.f32 %v1057, %v1058
    %v1060 = vsel %vm691, %v947, 0.0
    %v1061 = vadd.f32 %v1059, %v1060
    %v1062 = vsel %vm691, %v948, 0.0
    %v1063 = vadd.f32 %v1061, %v1062
    %v1064 = vsel %vm691, %v949, 0.0
    %v1065 = vadd.f32 %v1063, %v1064
    %v1066 = vsel %vm691, %v950, 0.0
    %v1067 = vadd.f32 %v1065, %v1066
    %v1068 = vsel %vm691, %v951, 0.0
    %v1069 = vadd.f32 %v1067, %v1068
    %v1070 = vsel %vm691, %v952, 0.0
    %v1071 = vadd.f32 %v1069, %v1070
    %v1072 = vsel %vm691, %v953, 0.0
    %v1073 = vadd.f32 %v1071, %v1072
    %v1074 = vsel %vm691, %v954, 0.0
    %v1075 = vadd.f32 %v1073, %v1074
    %v1076 = vsel %vm691, %v955, 0.0
    %v1077 = vadd.f32 %v1075, %v1076
    %v1078 = vsel %vm691, %v956, 0.0
    %v1079 = vadd.f32 %v1077, %v1078
    %v1080 = vsel %vm691, %v957, 0.0
    %v1081 = vadd.f32 %v1079, %v1080
    %v1082 = vsel %vm691, %v958, 0.0
    %v1083 = vadd.f32 %v1081, %v1082
    %v1084 = vsel %vm691, %v959, 0.0
    %v1085 = vadd.f32 %v1083, %v1084
    %v1086 = vsel %vm691, %v960, 0.0
    %v1087 = vadd.f32 %v1085, %v1086
    %v1088 = vrot.slane %v1087, 4
    %v1089 = vadd.f32 %v1087, %v1088
    %v1090 = vrot.slane %v1089, 2
    %v1091 = vadd.f32 %v1089, %v1090
    %v1092 = vrot.slane %v1091, 1
    %v1093 = vadd.f32 %v1091, %v1092
    %v1094 = vmul.f32 %v1093, %v831
    %v1095 = vadd.f32 %v1094, 1e-05
    %v1096 = vrsqrt.pop %v1095
    %v1097 = vmul.f32 %v1096, %v1095
    %v1098 = vmul.f32 %v1097, %v1096
    %v1099 = vmul.f32 0.5, %v1098
    %v1100 = vsub.f32 1.5, %v1099
    %v1101 = vmul.f32 %v1096, %v1100
    %vm1102 = vweird.f32 %v1095
    %vm1103 = vweird.f32 %v1096
    %vm1104 = vmor %vm1102, %vm1103
    %v1105 = vsel %vm1104, %v1096, %v1101
    %v1106 = vmul.f32 %v833, %v1105
    %v1107 = vmul.f32 %v834, %v1105
    %v1108 = vmul.f32 %v835, %v1105
    %v1109 = vmul.f32 %v836, %v1105
    %v1110 = vmul.f32 %v837, %v1105
    %v1111 = vmul.f32 %v838, %v1105
    %v1112 = vmul.f32 %v839, %v1105
    %v1113 = vmul.f32 %v840, %v1105
    %v1114 = vmul.f32 %v841, %v1105
    %v1115 = vmul.f32 %v842, %v1105
    %v1116 = vmul.f32 %v843, %v1105
    %v1117 = vmul.f32 %v844, %v1105
    %v1118 = vmul.f32 %v845, %v1105
    %v1119 = vmul.f32 %v846, %v1105
    %v1120 = vmul.f32 %v847, %v1105
    %v1121 = vmul.f32 %v848, %v1105
    %v1122 = vmul.f32 %v849, %v1105
    %v1123 = vmul.f32 %v850, %v1105
    %v1124 = vmul.f32 %v851, %v1105
    %v1125 = vmul.f32 %v852, %v1105
    %v1126 = vmul.f32 %v853, %v1105
    %v1127 = vmul.f32 %v854, %v1105
    %v1128 = vmul.f32 %v855, %v1105
    %v1129 = vmul.f32 %v856, %v1105
    %v1130 = vmul.f32 %v857, %v1105
    %v1131 = vmul.f32 %v858, %v1105
    %v1132 = vmul.f32 %v859, %v1105
    %v1133 = vmul.f32 %v860, %v1105
    %v1134 = vmul.f32 %v861, %v1105
    %v1135 = vmul.f32 %v862, %v1105
    %v1136 = vmul.f32 %v863, %v1105
    %v1137 = vmul.f32 %v864, %v1105
    %v1138 = vmul.f32 %v865, %v1105
    %v1139 = vmul.f32 %v866, %v1105
    %v1140 = vmul.f32 %v867, %v1105
    %v1141 = vmul.f32 %v868, %v1105
    %v1142 = vmul.f32 %v869, %v1105
    %v1143 = vmul.f32 %v870, %v1105
    %v1144 = vmul.f32 %v871, %v1105
    %v1145 = vmul.f32 %v872, %v1105
    %v1146 = vmul.f32 %v873, %v1105
    %v1147 = vmul.f32 %v874, %v1105
    %v1148 = vmul.f32 %v875, %v1105
    %v1149 = vmul.f32 %v876, %v1105
    %v1150 = vmul.f32 %v877, %v1105
    %v1151 = vmul.f32 %v878, %v1105
    %v1152 = vmul.f32 %v879, %v1105
    %v1153 = vmul.f32 %v880, %v1105
    %v1154 = vmul.f32 %v881, %v1105
    %v1155 = vmul.f32 %v882, %v1105
    %v1156 = vmul.f32 %v883, %v1105
    %v1157 = vmul.f32 %v884, %v1105
    %v1158 = vmul.f32 %v885, %v1105
    %v1159 = vmul.f32 %v886, %v1105
    %v1160 = vmul.f32 %v887, %v1105
    %v1161 = vmul.f32 %v888, %v1105
    %v1162 = vmul.f32 %v889, %v1105
    %v1163 = vmul.f32 %v890, %v1105
    %v1164 = vmul.f32 %v891, %v1105
    %v1165 = vmul.f32 %v892, %v1105
    %v1166 = vmul.f32 %v893, %v1105
    %v1167 = vmul.f32 %v894, %v1105
    %v1168 = vmul.f32 %v895, %v1105
    %v1169 = vmul.f32 %v896, %v1105
    %v1170 = vld [vmem:[%s2] sm:$0x1]
    %v1172 = vperm.slane %v1170, 0
    %v1174 = vmul.f32 %v1106, %v1172
    %v1175 = vmul.f32 %v1107, %v1172
    %v1176 = vmul.f32 %v1108, %v1172
    %v1177 = vmul.f32 %v1109, %v1172
    %v1178 = vmul.f32 %v1110, %v1172
    %v1179 = vmul.f32 %v1111, %v1172
    %v1180 = vmul.f32 %v1112, %v1172
    %v1181 = vmul.f32 %v1113, %v1172
    %v1182 = vmul.f32 %v1114, %v1172
    %v1183 = vmul.f32 %v1115, %v1172
    %v1184 = vmul.f32 %v1116, %v1172
    %v1185 = vmul.f32 %v1117, %v1172
    %v1186 = vmul.f32 %v1118, %v1172
    %v1187 = vmul.f32 %v1119, %v1172
    %v1188 = vmul.f32 %v1120, %v1172
    %v1189 = vmul.f32 %v1121, %v1172
    %v1190 = vmul.f32 %v1122, %v1172
    %v1191 = vmul.f32 %v1123, %v1172
    %v1192 = vmul.f32 %v1124, %v1172
    %v1193 = vmul.f32 %v1125, %v1172
    %v1194 = vmul.f32 %v1126, %v1172
    %v1195 = vmul.f32 %v1127, %v1172
    %v1196 = vmul.f32 %v1128, %v1172
    %v1197 = vmul.f32 %v1129, %v1172
    %v1198 = vmul.f32 %v1130, %v1172
    %v1199 = vmul.f32 %v1131, %v1172
    %v1200 = vmul.f32 %v1132, %v1172
    %v1201 = vmul.f32 %v1133, %v1172
    %v1202 = vmul.f32 %v1134, %v1172
    %v1203 = vmul.f32 %v1135, %v1172
    %v1204 = vmul.f32 %v1136, %v1172
    %v1205 = vmul.f32 %v1137, %v1172
    %v1206 = vmul.f32 %v1138, %v1172
    %v1207 = vmul.f32 %v1139, %v1172
    %v1208 = vmul.f32 %v1140, %v1172
    %v1209 = vmul.f32 %v1141, %v1172
    %v1210 = vmul.f32 %v1142, %v1172
    %v1211 = vmul.f32 %v1143, %v1172
    %v1212 = vmul.f32 %v1144, %v1172
    %v1213 = vmul.f32 %v1145, %v1172
    %v1214 = vmul.f32 %v1146, %v1172
    %v1215 = vmul.f32 %v1147, %v1172
    %v1216 = vmul.f32 %v1148, %v1172
    %v1217 = vmul.f32 %v1149, %v1172
    %v1218 = vmul.f32 %v1150, %v1172
    %v1219 = vmul.f32 %v1151, %v1172
    %v1220 = vmul.f32 %v1152, %v1172
    %v1221 = vmul.f32 %v1153, %v1172
    %v1222 = vmul.f32 %v1154, %v1172
    %v1223 = vmul.f32 %v1155, %v1172
    %v1224 = vmul.f32 %v1156, %v1172
    %v1225 = vmul.f32 %v1157, %v1172
    %v1226 = vmul.f32 %v1158, %v1172
    %v1227 = vmul.f32 %v1159, %v1172
    %v1228 = vmul.f32 %v1160, %v1172
    %v1229 = vmul.f32 %v1161, %v1172
    %v1230 = vmul.f32 %v1162, %v1172
    %v1231 = vmul.f32 %v1163, %v1172
    %v1232 = vmul.f32 %v1164, %v1172
    %v1233 = vmul.f32 %v1165, %v1172
    %v1234 = vmul.f32 %v1166, %v1172
    %v1235 = vmul.f32 %v1167, %v1172
    %v1236 = vmul.f32 %v1168, %v1172
    %v1237 = vmul.f32 %v1169, %v1172
    %v1238 = vld [vmem:[%s3] sm:$0x1]
    %v1240 = vperm.slane %v1238, 0
    %v1242 = vadd.f32 %v1174, %v1240
    %v1243 = vadd.f32 %v1175, %v1240
    %v1244 = vadd.f32 %v1176, %v1240
    %v1245 = vadd.f32 %v1177, %v1240
    %v1246 = vadd.f32 %v1178, %v1240
    %v1247 = vadd.f32 %v1179, %v1240
    %v1248 = vadd.f32 %v1180, %v1240
    %v1249 = vadd.f32 %v1181, %v1240
    %v1250 = vadd.f32 %v1182, %v1240
    %v1251 = vadd.f32 %v1183, %v1240
    %v1252 = vadd.f32 %v1184, %v1240
    %v1253 = vadd.f32 %v1185, %v1240
    %v1254 = vadd.f32 %v1186, %v1240
    %v1255 = vadd.f32 %v1187, %v1240
    %v1256 = vadd.f32 %v1188, %v1240
    %v1257 = vadd.f32 %v1189, %v1240
    %v1258 = vadd.f32 %v1190, %v1240
    %v1259 = vadd.f32 %v1191, %v1240
    %v1260 = vadd.f32 %v1192, %v1240
    %v1261 = vadd.f32 %v1193, %v1240
    %v1262 = vadd.f32 %v1194, %v1240
    %v1263 = vadd.f32 %v1195, %v1240
    %v1264 = vadd.f32 %v1196, %v1240
    %v1265 = vadd.f32 %v1197, %v1240
    %v1266 = vadd.f32 %v1198, %v1240
    %v1267 = vadd.f32 %v1199, %v1240
    %v1268 = vadd.f32 %v1200, %v1240
    %v1269 = vadd.f32 %v1201, %v1240
    %v1270 = vadd.f32 %v1202, %v1240
    %v1271 = vadd.f32 %v1203, %v1240
    %v1272 = vadd.f32 %v1204, %v1240
    %v1273 = vadd.f32 %v1205, %v1240
    %v1274 = vadd.f32 %v1206, %v1240
    %v1275 = vadd.f32 %v1207, %v1240
    %v1276 = vadd.f32 %v1208, %v1240
    %v1277 = vadd.f32 %v1209, %v1240
    %v1278 = vadd.f32 %v1210, %v1240
    %v1279 = vadd.f32 %v1211, %v1240
    %v1280 = vadd.f32 %v1212, %v1240
    %v1281 = vadd.f32 %v1213, %v1240
    %v1282 = vadd.f32 %v1214, %v1240
    %v1283 = vadd.f32 %v1215, %v1240
    %v1284 = vadd.f32 %v1216, %v1240
    %v1285 = vadd.f32 %v1217, %v1240
    %v1286 = vadd.f32 %v1218, %v1240
    %v1287 = vadd.f32 %v1219, %v1240
    %v1288 = vadd.f32 %v1220, %v1240
    %v1289 = vadd.f32 %v1221, %v1240
    %v1290 = vadd.f32 %v1222, %v1240
    %v1291 = vadd.f32 %v1223, %v1240
    %v1292 = vadd.f32 %v1224, %v1240
    %v1293 = vadd.f32 %v1225, %v1240
    %v1294 = vadd.f32 %v1226, %v1240
    %v1295 = vadd.f32 %v1227, %v1240
    %v1296 = vadd.f32 %v1228, %v1240
    %v1297 = vadd.f32 %v1229, %v1240
    %v1298 = vadd.f32 %v1230, %v1240
    %v1299 = vadd.f32 %v1231, %v1240
    %v1300 = vadd.f32 %v1232, %v1240
    %v1301 = vadd.f32 %v1233, %v1240
    %v1302 = vadd.f32 %v1234, %v1240
    %v1303 = vadd.f32 %v1235, %v1240
    %v1304 = vadd.f32 %v1236, %v1240
    %v1305 = vadd.f32 %v1237, %v1240
    %v1306 = vmax.f32 %v1242, 0.0
    %v1307 = vmax.f32 %v1243, 0.0
    %v1308 = vmax.f32 %v1244, 0.0
    %v1309 = vmax.f32 %v1245, 0.0
    %v1310 = vmax.f32 %v1246, 0.0
    %v1311 = vmax.f32 %v1247, 0.0
    %v1312 = vmax.f32 %v1248, 0.0
    %v1313 = vmax.f32 %v1249, 0.0
    %v1314 = vmax.f32 %v1250, 0.0
    %v1315 = vmax.f32 %v1251, 0.0
    %v1316 = vmax.f32 %v1252, 0.0
    %v1317 = vmax.f32 %v1253, 0.0
    %v1318 = vmax.f32 %v1254, 0.0
    %v1319 = vmax.f32 %v1255, 0.0
    %v1320 = vmax.f32 %v1256, 0.0
    %v1321 = vmax.f32 %v1257, 0.0
    %v1322 = vmax.f32 %v1258, 0.0
    %v1323 = vmax.f32 %v1259, 0.0
    %v1324 = vmax.f32 %v1260, 0.0
    %v1325 = vmax.f32 %v1261, 0.0
    %v1326 = vmax.f32 %v1262, 0.0
    %v1327 = vmax.f32 %v1263, 0.0
    %v1328 = vmax.f32 %v1264, 0.0
    %v1329 = vmax.f32 %v1265, 0.0
    %v1330 = vmax.f32 %v1266, 0.0
    %v1331 = vmax.f32 %v1267, 0.0
    %v1332 = vmax.f32 %v1268, 0.0
    %v1333 = vmax.f32 %v1269, 0.0
    %v1334 = vmax.f32 %v1270, 0.0
    %v1335 = vmax.f32 %v1271, 0.0
    %v1336 = vmax.f32 %v1272, 0.0
    %v1337 = vmax.f32 %v1273, 0.0
    %v1338 = vmax.f32 %v1274, 0.0
    %v1339 = vmax.f32 %v1275, 0.0
    %v1340 = vmax.f32 %v1276, 0.0
    %v1341 = vmax.f32 %v1277, 0.0
    %v1342 = vmax.f32 %v1278, 0.0
    %v1343 = vmax.f32 %v1279, 0.0
    %v1344 = vmax.f32 %v1280, 0.0
    %v1345 = vmax.f32 %v1281, 0.0
    %v1346 = vmax.f32 %v1282, 0.0
    %v1347 = vmax.f32 %v1283, 0.0
    %v1348 = vmax.f32 %v1284, 0.0
    %v1349 = vmax.f32 %v1285, 0.0
    %v1350 = vmax.f32 %v1286, 0.0
    %v1351 = vmax.f32 %v1287, 0.0
    %v1352 = vmax.f32 %v1288, 0.0
    %v1353 = vmax.f32 %v1289, 0.0
    %v1354 = vmax.f32 %v1290, 0.0
    %v1355 = vmax.f32 %v1291, 0.0
    %v1356 = vmax.f32 %v1292, 0.0
    %v1357 = vmax.f32 %v1293, 0.0
    %v1358 = vmax.f32 %v1294, 0.0
    %v1359 = vmax.f32 %v1295, 0.0
    %v1360 = vmax.f32 %v1296, 0.0
    %v1361 = vmax.f32 %v1297, 0.0
    %v1362 = vmax.f32 %v1298, 0.0
    %v1363 = vmax.f32 %v1299, 0.0
    %v1364 = vmax.f32 %v1300, 0.0
    %v1365 = vmax.f32 %v1301, 0.0
    %v1366 = vmax.f32 %v1302, 0.0
    %v1367 = vmax.f32 %v1303, 0.0
    %v1368 = vmax.f32 %v1304, 0.0
    %v1369 = vmax.f32 %v1305, 0.0
    %1370 = vst.msk [vmem:[%s4] sm:$0xff] %vm691, %v1306
    %1371 = vst.msk [vmem:[%s4 + $0x8] sm:$0xff] %vm691, %v1307
    %1372 = vst.msk [vmem:[%s4 + $0x10] sm:$0xff] %vm691, %v1308
    %1373 = vst.msk [vmem:[%s4 + $0x18] sm:$0xff] %vm691, %v1309
    %1374 = vst.msk [vmem:[%s4 + $0x20] sm:$0xff] %vm691, %v1310
    %1375 = vst.msk [vmem:[%s4 + $0x28] sm:$0xff] %vm691, %v1311
    %1376 = vst.msk [vmem:[%s4 + $0x30] sm:$0xff] %vm691, %v1312
    %1377 = vst.msk [vmem:[%s4 + $0x38] sm:$0xff] %vm691, %v1313
    %1378 = vst.msk [vmem:[%s4 + $0x40] sm:$0xff] %vm691, %v1314
    %1379 = vst.msk [vmem:[%s4 + $0x48] sm:$0xff] %vm691, %v1315
    %1380 = vst.msk [vmem:[%s4 + $0x50] sm:$0xff] %vm691, %v1316
    %1381 = vst.msk [vmem:[%s4 + $0x58] sm:$0xff] %vm691, %v1317
    %1382 = vst.msk [vmem:[%s4 + $0x60] sm:$0xff] %vm691, %v1318
    %1383 = vst.msk [vmem:[%s4 + $0x68] sm:$0xff] %vm691, %v1319
    %1384 = vst.msk [vmem:[%s4 + $0x70] sm:$0xff] %vm691, %v1320
    %1385 = vst.msk [vmem:[%s4 + $0x78] sm:$0xff] %vm691, %v1321
    %1386 = vst.msk [vmem:[%s4 + $0x80] sm:$0xff] %vm691, %v1322
    %1387 = vst.msk [vmem:[%s4 + $0x88] sm:$0xff] %vm691, %v1323
    %1388 = vst.msk [vmem:[%s4 + $0x90] sm:$0xff] %vm691, %v1324
    %1389 = vst.msk [vmem:[%s4 + $0x98] sm:$0xff] %vm691, %v1325
    %1390 = vst.msk [vmem:[%s4 + $0xa0] sm:$0xff] %vm691, %v1326
    %1391 = vst.msk [vmem:[%s4 + $0xa8] sm:$0xff] %vm691, %v1327
    %1392 = vst.msk [vmem:[%s4 + $0xb0] sm:$0xff] %vm691, %v1328
    %1393 = vst.msk [vmem:[%s4 + $0xb8] sm:$0xff] %vm691, %v1329
    %1394 = vst.msk [vmem:[%s4 + $0xc0] sm:$0xff] %vm691, %v1330
    %1395 = vst.msk [vmem:[%s4 + $0xc8] sm:$0xff] %vm691, %v1331
    %1396 = vst.msk [vmem:[%s4 + $0xd0] sm:$0xff] %vm691, %v1332
    %1397 = vst.msk [vmem:[%s4 + $0xd8] sm:$0xff] %vm691, %v1333
    %1398 = vst.msk [vmem:[%s4 + $0xe0] sm:$0xff] %vm691, %v1334
    %1399 = vst.msk [vmem:[%s4 + $0xe8] sm:$0xff] %vm691, %v1335
    %1400 = vst.msk [vmem:[%s4 + $0xf0] sm:$0xff] %vm691, %v1336
    %1401 = vst.msk [vmem:[%s4 + $0xf8] sm:$0xff] %vm691, %v1337
    %1402 = vst.msk [vmem:[%s4 + $0x100] sm:$0xff] %vm691, %v1338
    %1403 = vst.msk [vmem:[%s4 + $0x108] sm:$0xff] %vm691, %v1339
    %1404 = vst.msk [vmem:[%s4 + $0x110] sm:$0xff] %vm691, %v1340
    %1405 = vst.msk [vmem:[%s4 + $0x118] sm:$0xff] %vm691, %v1341
    %1406 = vst.msk [vmem:[%s4 + $0x120] sm:$0xff] %vm691, %v1342
    %1407 = vst.msk [vmem:[%s4 + $0x128] sm:$0xff] %vm691, %v1343
    %1408 = vst.msk [vmem:[%s4 + $0x130] sm:$0xff] %vm691, %v1344
    %1409 = vst.msk [vmem:[%s4 + $0x138] sm:$0xff] %vm691, %v1345
    %1410 = vst.msk [vmem:[%s4 + $0x140] sm:$0xff] %vm691, %v1346
    %1411 = vst.msk [vmem:[%s4 + $0x148] sm:$0xff] %vm691, %v1347
    %1412 = vst.msk [vmem:[%s4 + $0x150] sm:$0xff] %vm691, %v1348
    %1413 = vst.msk [vmem:[%s4 + $0x158] sm:$0xff] %vm691, %v1349
    %1414 = vst.msk [vmem:[%s4 + $0x160] sm:$0xff] %vm691, %v1350
    %1415 = vst.msk [vmem:[%s4 + $0x168] sm:$0xff] %vm691, %v1351
    %1416 = vst.msk [vmem:[%s4 + $0x170] sm:$0xff] %vm691, %v1352
    %1417 = vst.msk [vmem:[%s4 + $0x178] sm:$0xff] %vm691, %v1353
    %1418 = vst.msk [vmem:[%s4 + $0x180] sm:$0xff] %vm691, %v1354
    %1419 = vst.msk [vmem:[%s4 + $0x188] sm:$0xff] %vm691, %v1355
    %1420 = vst.msk [vmem:[%s4 + $0x190] sm:$0xff] %vm691, %v1356
    %1421 = vst.msk [vmem:[%s4 + $0x198] sm:$0xff] %vm691, %v1357
    %1422 = vst.msk [vmem:[%s4 + $0x1a0] sm:$0xff] %vm691, %v1358
    %1423 = vst.msk [vmem:[%s4 + $0x1a8] sm:$0xff] %vm691, %v1359
    %1424 = vst.msk [vmem:[%s4 + $0x1b0] sm:$0xff] %vm691, %v1360
    %1425 = vst.msk [vmem:[%s4 + $0x1b8] sm:$0xff] %vm691, %v1361
    %1426 = vst.msk [vmem:[%s4 + $0x1c0] sm:$0xff] %vm691, %v1362
    %1427 = vst.msk [vmem:[%s4 + $0x1c8] sm:$0xff] %vm691, %v1363
    %1428 = vst.msk [vmem:[%s4 + $0x1d0] sm:$0xff] %vm691, %v1364
    %1429 = vst.msk [vmem:[%s4 + $0x1d8] sm:$0xff] %vm691, %v1365
    %1430 = vst.msk [vmem:[%s4 + $0x1e0] sm:$0xff] %vm691, %v1366
    %1431 = vst.msk [vmem:[%s4 + $0x1e8] sm:$0xff] %vm691, %v1367
    %1432 = vst.msk [vmem:[%s4 + $0x1f0] sm:$0xff] %vm691, %v1368
    %1433 = vst.msk [vmem:[%s4 + $0x1f8] sm:$0xff] %vm691, %v1369
    // Predicated region
    $region22: #{mmca_forward.2} parent=1 // pred_check
      _
    $region23: #{mmca_forward.2} parent=1 // pred_check_branch
      %1435 = sbr.rel (0) target = $region25
    $region24: #{mmca_forward.2} parent=1 // pred_region
      _
    $region25: #{mmca_forward.2} parent=1 // pred_fallthru
      _
    // Predicated region
    $region26: #{mmca_forward.2} parent=1 // pred_check
      _
    $region27: #{mmca_forward.2} parent=1 // pred_check_branch
      %1437 = sbr.rel (0) target = $region29
    $region28: #{mmca_forward.2} parent=1 // pred_region
      _
    $region29: #{mmca_forward.2} parent=1 // pred_fallthru
      _
    %1438 = vsyncpa [#allocation3], 1

// kernel: mmca_forward.3
$region0: #{mmca_forward.3}
  #allocation0 [shape = 'u32[]', space=smem, size = 0x4, offset = 0x4, fixed_abs, tag = 'smem constant byte address 0x4 - core index']
  #allocation1 [shape = 'u32[72,128]{1,0:T(1,128)}', space=vmem, size = 0x9000, scoped, tag = 'internal scratch']
  #allocation2 [shape = 'f32[1,1]{1,0:T(1,128)S(1)}', space=vmem, size = 0x200, scoped, tag = 'scoped memory for mmca_forward.3']
  %s0 = inlined_call_operand.vmem [shape: f32[512,400], index: 0, kind: input, shape index: {}]
  %s1 = inlined_call_operand.vmem [shape: f32[512,256], index: 1, kind: input, shape index: {}]
  %s2 = inlined_call_operand.vmem [shape: bf16[400,3], index: 2, kind: input, shape index: {}]
  %s3 = inlined_call_operand.vmem [shape: f32[1,3], index: 3, kind: input, shape index: {}]
  %s4 = inlined_call_operand.vmem [shape: f32[1,3], index: 4, kind: input, shape index: {}]
  %s5 = inlined_call_operand.<no memory space> [shape: f32[1,1], index: 5, kind: input, shape index: {}]
  %s6 = inlined_call_operand.vmem [shape: f32[512,1], index: 6, kind: output, shape index: {0}]
  %s7 = inlined_call_operand.hbm [shape: f32[512,256], index: 7, kind: output, shape index: {1}]
  %8 = xla_tuple %s6, %s7
  %s9 = sld [smem:[#allocation0]]
  $region65: #{mmca_forward.3} parent=0
    _
  %s11 = ssub.s32 1, %s9
  %s12 = scalar_select 0, %s11, %s9
  %v13 = vstv %s5
  %14 = vst [vmem:[#allocation2] sm:$0x1] %v13
  $region1: #{mmca_forward.3} parent=0
    #allocation3 [shape = 'u8[524288]{0}', space=vmem, size = 0x80000, scoped, tag = 'output window, operand 1']
    #allocation4 [shape = 's32[2]{0}', space=sflag, size = 0x8, scoped, tag = 'scoped memory for mmca_forward.3']
    %15 = vsyncpa [#allocation4], 0
    %s16 = scalar_lea.sflag [#allocation4], 1
    %17 = vsyncpa %s16, 0
    loop: start=0, step=1, limit=4
    $region2: #{mmca_forward.3} parent=1 // loop_pre_header
      _
    $region3: #{mmca_forward.3} parent=1 // loop_header
      %s19 = sphi 0, %s23
      %p20 = scmp.ge.s32.totalorder %s19, 4
      %s29 = sphi 0, %s31
      %s32 = sphi 0, %s29
      %s33 = sphi 0, %s32
      %s49 = sphi 0, %s33
      %s55 = sphi 0, %s57
      %s58 = sphi 0, %s55
      %s59 = sphi 0, %s58
      %s75 = sphi 0, %s59
      %s79 = sphi 0, %s79
      %s81 = sphi 0, %s79
      %s82 = sphi 0, %s81
      %s96 = sphi 0, %s82
      %s100 = sphi 0, %s100
      %s102 = sphi 0, %s100
      %s103 = sphi 0, %s102
      %s117 = sphi 0, %s103
      %s121 = sphi 0, %s121
      %s123 = sphi 0, %s121
      %s124 = sphi 0, %s123
      %s138 = sphi 0, %s124
      %s142 = sphi 0, %s142
      %s144 = sphi 0, %s142
      %s145 = sphi 0, %s144
      %s159 = sphi 0, %s145
      %s165 = sphi 0, %s167
      %s168 = sphi 0, %s165
      %s169 = sphi 0, %s168
      %s185 = sphi 0, %s169
      %s191 = sphi 0, %s193
      %s194 = sphi 0, %s191
      %s195 = sphi 0, %s194
      %s211 = sphi 0, %s195
    $region4: #{mmca_forward.3} parent=1 // loop_header_branch
      %22 = sbr.rel (%p20) target = $region8
    $region5: #{mmca_forward.3} parent=1 // loop_body
      %s24 = ssub.s32 %s19, 1
      %s25 = ssub.s32 %s19, 2
      %s26 = sadd.s32 %s19, 1
      %s27 = ssub.s32 %s19, %s26
      %p28 = scmp.eq.s32.totalorder %s27, 0
      %s30 = sadd.s32 %s29, 1
      %s31 = scalar_select %p28, %s29, %s30
      %p34 = pneg %p28
      %p35 = scmp.eq.s32.totalorder %s19, 1
      %p36 = por %p34, %p35
      %p37 = scmp.ne.s32.totalorder %s29, %s32
      %p38 = scmp.eq.s32.totalorder %s19, 0
      %p39 = por %p37, %p38
      %p40 = scmp.ne.s32.totalorder %s29, %s32
      %p41 = scmp.eq.s32.totalorder %s24, 1
      %p42 = por %p40, %p41
      %p43 = scmp.ne.s32.totalorder %s32, %s33
      %p44 = scmp.eq.s32.totalorder %s24, 0
      %p45 = por %p43, %p44
      %p46 = scmp.ne.s32.totalorder %s32, %s33
      %p47 = scmp.eq.s32.totalorder %s25, 1
      %p48 = por %p46, %p47
      %p50 = scmp.ne.s32.totalorder %s33, %s49
      %p51 = scmp.eq.s32.totalorder %s25, 0
      %p52 = por %p50, %p51
      %s53 = ssub.s32 %s19, %s26
      %p54 = scmp.eq.s32.totalorder %s53, 0
      %s56 = sadd.s32 %s55, 1
      %s57 = scalar_select %p54, %s55, %s56
      %p60 = pneg %p54
      %p61 = scmp.eq.s32.totalorder %s19, 1
      %p62 = por %p60, %p61
      %p63 = scmp.ne.s32.totalorder %s55, %s58
      %p64 = scmp.eq.s32.totalorder %s19, 0
      %p65 = por %p63, %p64
      %p66 = scmp.ne.s32.totalorder %s55, %s58
      %p67 = scmp.eq.s32.totalorder %s24, 1
      %p68 = por %p66, %p67
      %p69 = scmp.ne.s32.totalorder %s58, %s59
      %p70 = scmp.eq.s32.totalorder %s24, 0
      %p71 = por %p69, %p70
      %p72 = scmp.ne.s32.totalorder %s58, %s59
      %p73 = scmp.eq.s32.totalorder %s25, 1
      %p74 = por %p72, %p73
      %p76 = scmp.ne.s32.totalorder %s59, %s75
      %p77 = scmp.eq.s32.totalorder %s25, 0
      %p78 = por %p76, %p77
      %s80 = sadd.s32 %s79, 1
      %p83 = scmp.eq.s32.totalorder %s19, 1
      %p84 = scmp.ne.s32.totalorder %s79, %s81
      %p85 = scmp.eq.s32.totalorder %s19, 0
      %p86 = por %p84, %p85
      %p87 = scmp.ne.s32.totalorder %s79, %s81
      %p88 = scmp.eq.s32.totalorder %s24, 1
      %p89 = por %p87, %p88
      %p90 = scmp.ne.s32.totalorder %s81, %s82
      %p91 = scmp.eq.s32.totalorder %s24, 0
      %p92 = por %p90, %p91
      %p93 = scmp.ne.s32.totalorder %s81, %s82
      %p94 = scmp.eq.s32.totalorder %s25, 1
      %p95 = por %p93, %p94
      %p97 = scmp.ne.s32.totalorder %s82, %s96
      %p98 = scmp.eq.s32.totalorder %s25, 0
      %p99 = por %p97, %p98
      %s101 = sadd.s32 %s100, 1
      %p104 = scmp.eq.s32.totalorder %s19, 1
      %p105 = scmp.ne.s32.totalorder %s100, %s102
      %p106 = scmp.eq.s32.totalorder %s19, 0
      %p107 = por %p105, %p106
      %p108 = scmp.ne.s32.totalorder %s100, %s102
      %p109 = scmp.eq.s32.totalorder %s24, 1
      %p110 = por %p108, %p109
      %p111 = scmp.ne.s32.totalorder %s102, %s103
      %p112 = scmp.eq.s32.totalorder %s24, 0
      %p113 = por %p111, %p112
      %p114 = scmp.ne.s32.totalorder %s102, %s103
      %p115 = scmp.eq.s32.totalorder %s25, 1
      %p116 = por %p114, %p115
      %p118 = scmp.ne.s32.totalorder %s103, %s117
      %p119 = scmp.eq.s32.totalorder %s25, 0
      %p120 = por %p118, %p119
      %s122 = sadd.s32 %s121, 1
      %p125 = scmp.eq.s32.totalorder %s19, 1
      %p126 = scmp.ne.s32.totalorder %s121, %s123
      %p127 = scmp.eq.s32.totalorder %s19, 0
      %p128 = por %p126, %p127
      %p129 = scmp.ne.s32.totalorder %s121, %s123
      %p130 = scmp.eq.s32.totalorder %s24, 1
      %p131 = por %p129, %p130
      %p132 = scmp.ne.s32.totalorder %s123, %s124
      %p133 = scmp.eq.s32.totalorder %s24, 0
      %p134 = por %p132, %p133
      %p135 = scmp.ne.s32.totalorder %s123, %s124
      %p136 = scmp.eq.s32.totalorder %s25, 1
      %p137 = por %p135, %p136
      %p139 = scmp.ne.s32.totalorder %s124, %s138
      %p140 = scmp.eq.s32.totalorder %s25, 0
      %p141 = por %p139, %p140
      %s143 = sadd.s32 %s142, 1
      %p146 = scmp.eq.s32.totalorder %s19, 1
      %p147 = scmp.ne.s32.totalorder %s142, %s144
      %p148 = scmp.eq.s32.totalorder %s19, 0
      %p149 = por %p147, %p148
      %p150 = scmp.ne.s32.totalorder %s142, %s144
      %p151 = scmp.eq.s32.totalorder %s24, 1
      %p152 = por %p150, %p151
      %p153 = scmp.ne.s32.totalorder %s144, %s145
      %p154 = scmp.eq.s32.totalorder %s24, 0
      %p155 = por %p153, %p154
      %p156 = scmp.ne.s32.totalorder %s144, %s145
      %p157 = scmp.eq.s32.totalorder %s25, 1
      %p158 = por %p156, %p157
      %p160 = scmp.ne.s32.totalorder %s145, %s159
      %p161 = scmp.eq.s32.totalorder %s25, 0
      %p162 = por %p160, %p161
      %s163 = ssub.s32 %s19, %s26
      %p164 = scmp.eq.s32.totalorder %s163, 0
      %s166 = sadd.s32 %s165, 1
      %s167 = scalar_select %p164, %s165, %s166
      %p170 = pneg %p164
      %p171 = scmp.eq.s32.totalorder %s19, 1
      %p172 = por %p170, %p171
      %p173 = scmp.ne.s32.totalorder %s165, %s168
      %p174 = scmp.eq.s32.totalorder %s19, 0
      %p175 = por %p173, %p174
      %p176 = scmp.ne.s32.totalorder %s165, %s168
      %p177 = scmp.eq.s32.totalorder %s24, 1
      %p178 = por %p176, %p177
      %p179 = scmp.ne.s32.totalorder %s168, %s169
      %p180 = scmp.eq.s32.totalorder %s24, 0
      %p181 = por %p179, %p180
      %p182 = scmp.ne.s32.totalorder %s168, %s169
      %p183 = scmp.eq.s32.totalorder %s25, 1
      %p184 = por %p182, %p183
      %p186 = scmp.ne.s32.totalorder %s169, %s185
      %p187 = scmp.eq.s32.totalorder %s25, 0
      %p188 = por %p186, %p187
      %s189 = ssub.s32 %s19, %s26
      %p190 = scmp.eq.s32.totalorder %s189, 0
      %s192 = sadd.s32 %s191, 1
      %s193 = scalar_select %p190, %s191, %s192
      %p196 = pneg %p190
      %p197 = scmp.eq.s32.totalorder %s19, 1
      %p198 = por %p196, %p197
      %p199 = scmp.ne.s32.totalorder %s191, %s194
      %p200 = scmp.eq.s32.totalorder %s19, 0
      %p201 = por %p199, %p200
      %p202 = scmp.ne.s32.totalorder %s191, %s194
      %p203 = scmp.eq.s32.totalorder %s24, 1
      %p204 = por %p202, %p203
      %p205 = scmp.ne.s32.totalorder %s194, %s195
      %p206 = scmp.eq.s32.totalorder %s24, 0
      %p207 = por %p205, %p206
      %p208 = scmp.ne.s32.totalorder %s194, %s195
      %p209 = scmp.eq.s32.totalorder %s25, 1
      %p210 = por %p208, %p209
      %p212 = scmp.ne.s32.totalorder %s195, %s211
      %p213 = scmp.eq.s32.totalorder %s25, 0
      %p214 = por %p212, %p213
      %p215 = scmp.le.s32.totalorder 1, %s19
      %p216 = scmp.lt.s32.totalorder %s19, 3
      %p217 = pnand %p215, %p216
      %p218 = pneg %p217
      // Predicated region
      $region9: #{mmca_forward.3} parent=5 // pred_check
        _
      $region10: #{mmca_forward.3} parent=5 // pred_check_branch
        %220 = sbr.rel (%p217) target = $region12
      $region11: #{mmca_forward.3} parent=5 // pred_region
        %s221 = ssub.s32 %s19, 1
        // Predicated region
        $region13: #{mmca_forward.3} parent=11 // pred_check
          %p222 = pneg %p92
        $region14: #{mmca_forward.3} parent=11 // pred_check_branch
          %224 = sbr.rel (%p222) target = $region16
        $region15: #{mmca_forward.3} parent=11 // pred_region
          _
        $region16: #{mmca_forward.3} parent=11 // pred_fallthru
          _
        // Predicated region
        $region17: #{mmca_forward.3} parent=11 // pred_check
          %p225 = pneg %p113
        $region18: #{mmca_forward.3} parent=11 // pred_check_branch
          %227 = sbr.rel (%p225) target = $region20
        $region19: #{mmca_forward.3} parent=11 // pred_region
          _
        $region20: #{mmca_forward.3} parent=11 // pred_fallthru
          _
        // Predicated region
        $region21: #{mmca_forward.3} parent=11 // pred_check
          %p228 = pneg %p134
        $region22: #{mmca_forward.3} parent=11 // pred_check_branch
          %230 = sbr.rel (%p228) target = $region24
        $region23: #{mmca_forward.3} parent=11 // pred_region
          _
        $region24: #{mmca_forward.3} parent=11 // pred_fallthru
          _
        // Predicated region
        $region25: #{mmca_forward.3} parent=11 // pred_check
          %p231 = pneg %p155
        $region26: #{mmca_forward.3} parent=11 // pred_check_branch
          %233 = sbr.rel (%p231) target = $region28
        $region27: #{mmca_forward.3} parent=11 // pred_region
          _
        $region28: #{mmca_forward.3} parent=11 // pred_fallthru
          _
      $region12: #{mmca_forward.3} parent=5 // pred_fallthru
        _
      %p234 = scmp.lt.s32.totalorder %s19, 2
      // Predicated region
      $region29: #{mmca_forward.3} parent=5 // pred_check
        %p235 = pneg %p234
      $region30: #{mmca_forward.3} parent=5 // pred_check_branch
        %237 = sbr.rel (%p235) target = $region32
      $region31: #{mmca_forward.3} parent=5 // pred_region
        // Predicated region
        $region33: #{mmca_forward.3} parent=31 // pred_check
          %p238 = pneg %p39
        $region34: #{mmca_forward.3} parent=31 // pred_check_branch
          %240 = sbr.rel (%p238) target = $region36
        $region35: #{mmca_forward.3} parent=31 // pred_region
          %s241 = smul.u32 32, %s19
          %p242 = scmp.lt.s32.totalorder %s241, 63
          %s243 = scalar_select %p242, %s241, 63
          %s244 = smul.addr %s243, 4
          %s245 = smul.addr %s244, 8
          %s246 = scalar_lea.vmem %s0, %s245
          %s247 = smul.u32 32, %s19
        $region36: #{mmca_forward.3} parent=31 // pred_fallthru
          _
        // Predicated region
        $region37: #{mmca_forward.3} parent=31 // pred_check
          %p248 = pneg %p65
        $region38: #{mmca_forward.3} parent=31 // pred_check_branch
          %250 = sbr.rel (%p248) target = $region40
        $region39: #{mmca_forward.3} parent=31 // pred_region
          %s251 = smul.u32 32, %s19
          %p252 = scmp.lt.s32.totalorder %s251, 63
          %s253 = scalar_select %p252, %s251, 63
          %s254 = smul.addr %s253, 2
          %s255 = smul.addr %s254, 8
          %s256 = scalar_lea.vmem %s1, %s255
          %s257 = smul.u32 32, %s19
        $region40: #{mmca_forward.3} parent=31 // pred_fallthru
          _
      $region32: #{mmca_forward.3} parent=5 // pred_fallthru
        _
      %p258 = scmp.le.s32.totalorder 1, %s19
      %p259 = scmp.lt.s32.totalorder %s19, 3
      %p260 = pnand %p258, %p259
      %p261 = pneg %p260
      // Predicated region
      $region41: #{mmca_forward.3} parent=5 // pred_check
        _
      $region42: #{mmca_forward.3} parent=5 // pred_check_branch
        %263 = sbr.rel (%p260) target = $region44
      $region43: #{mmca_forward.3} parent=5 // pred_region
        %s264 = ssub.s32 %s19, 1
        %s265 = smul.u32 32, %s24
        %p266 = scmp.lt.s32.totalorder %s265, 63
        %s267 = scalar_select %p266, %s265, 63
        %s268 = smul.addr %s267, 4
        %s269 = smul.addr %s268, 8
        %s270 = scalar_lea.vmem %s0, %s269
        %p271 = pneg %p45
        %p272 = pneg %p42
        %s273 = smul.u32 32, %s24
        %p274 = scmp.lt.s32.totalorder %s273, 63
        %s275 = scalar_select %p274, %s273, 63
        %s276 = smul.addr %s275, 2
        %s277 = smul.addr %s276, 8
        %s278 = scalar_lea.vmem %s1, %s277
        %p279 = pneg %p71
        %p280 = pneg %p68
        %p281 = pneg %p92
        %p282 = pneg %p89
        %p283 = pneg %p113
        %p284 = pneg %p110
        %p285 = pneg %p134
        %p286 = pneg %p131
        %p287 = pneg %p155
        %p288 = pneg %p152
        %p289 = pneg %p181
        %p290 = pneg %p178
        %s291 = smul.u32 32, %s24
        %p292 = scmp.lt.s32.totalorder %s291, 63
        %s293 = scalar_select %p292, %s291, 63
        %s294 = smul.addr %s293, 8
        %s295 = scalar_lea.vmem %s6, %s294
        %p296 = pneg %p207
        %p297 = pneg %p204
        %s298 = sand.u32 %s194, 1
        %s299 = scalar_lea.sflag [#allocation4], %s298
        %s300 = sand.u32 %s194, 1
        %s301 = smul.addr %s300, 512
        %s302 = scalar_lea.vmem [#allocation3], %s301
        %s303 = smul.u32 32, %s24
        %p304 = scmp.lt.s32.totalorder %s303, 63
        %s305 = scalar_select %p304, %s303, 63
        %s306 = smul.addr %s305, 4
        %s307 = smul.addr %s306, 8
        %s308 = scalar_lea.vmem %s0, %s307
        %s309 = smul.u32 32, %s24
        %s310 = smul.u32 32, %s24
        %p311 = scmp.lt.s32.totalorder %s310, 63
        %s312 = scalar_select %p311, %s310, 63
        %s313 = smul.addr %s312, 2
        %s314 = smul.addr %s313, 8
        %s315 = scalar_lea.vmem %s1, %s314
        %s316 = smul.u32 32, %s24
        %s317 = smul.u32 32, %s24
        %p318 = scmp.lt.s32.totalorder %s317, 63
        %s319 = scalar_select %p318, %s317, 63
        %s320 = smul.addr %s319, 8
        %s321 = scalar_lea.vmem %s6, %s320
        %s322 = smul.u32 32, %s24
        %s323 = smul.u32 32, %s24
        %v325 = vld [vmem:[%s308] sm:$0xff]
        %v326 = vld [vmem:[%s308 + $0x8] sm:$0xff]
        %v327 = vld [vmem:[%s308 + $0x10] sm:$0xff]
        %v328 = vld [vmem:[%s308 + $0x18] sm:$0xff]
        %v329 = vld [vmem:[%s308 + $0x20] sm:$0xff]
        %v330 = vld [vmem:[%s308 + $0x28] sm:$0xff]
        %v331 = vld [vmem:[%s308 + $0x30] sm:$0xff]
        %v332 = vld [vmem:[%s308 + $0x38] sm:$0xff]
        %v333 = vld [vmem:[%s308 + $0x40] sm:$0xff]
        %v334 = vld [vmem:[%s308 + $0x48] sm:$0xff]
        %v335 = vld [vmem:[%s308 + $0x50] sm:$0xff]
        %v336 = vld [vmem:[%s308 + $0x58] sm:$0xff]
        %v337 = vld [vmem:[%s308 + $0x60] sm:$0xff]
        %v338 = vld [vmem:[%s308 + $0x68] sm:$0xff]
        %v339 = vld [vmem:[%s308 + $0x70] sm:$0xff]
        %v340 = vld [vmem:[%s308 + $0x78] sm:$0xff]
        %v341 = vld [vmem:[%s308 + $0x80] sm:$0xff]
        %v342 = vld [vmem:[%s308 + $0x88] sm:$0xff]
        %v343 = vld [vmem:[%s308 + $0x90] sm:$0xff]
        %v344 = vld [vmem:[%s308 + $0x98] sm:$0xff]
        %v345 = vld [vmem:[%s308 + $0xa0] sm:$0xff]
        %v346 = vld [vmem:[%s308 + $0xa8] sm:$0xff]
        %v347 = vld [vmem:[%s308 + $0xb0] sm:$0xff]
        %v348 = vld [vmem:[%s308 + $0xb8] sm:$0xff]
        %v349 = vld [vmem:[%s308 + $0xc0] sm:$0xff]
        %v350 = vld [vmem:[%s308 + $0xc8] sm:$0xff]
        %v351 = vld [vmem:[%s308 + $0xd0] sm:$0xff]
        %v352 = vld [vmem:[%s308 + $0xd8] sm:$0xff]
        %v353 = vld [vmem:[%s308 + $0xe0] sm:$0xff]
        %v354 = vld [vmem:[%s308 + $0xe8] sm:$0xff]
        %v355 = vld [vmem:[%s308 + $0xf0] sm:$0xff]
        %v356 = vld [vmem:[%s308 + $0xf8] sm:$0xff]
        %v357 = vld [vmem:[%s308 + $0x100] sm:$0xff]
        %v358 = vld [vmem:[%s308 + $0x108] sm:$0xff]
        %v359 = vld [vmem:[%s308 + $0x110] sm:$0xff]
        %v360 = vld [vmem:[%s308 + $0x118] sm:$0xff]
        %v361 = vld [vmem:[%s308 + $0x120] sm:$0xff]
        %v362 = vld [vmem:[%s308 + $0x128] sm:$0xff]
        %v363 = vld [vmem:[%s308 + $0x130] sm:$0xff]
        %v364 = vld [vmem:[%s308 + $0x138] sm:$0xff]
        %v365 = vld [vmem:[%s308 + $0x140] sm:$0xff]
        %v366 = vld [vmem:[%s308 + $0x148] sm:$0xff]
        %v367 = vld [vmem:[%s308 + $0x150] sm:$0xff]
        %v368 = vld [vmem:[%s308 + $0x158] sm:$0xff]
        %v369 = vld [vmem:[%s308 + $0x160] sm:$0xff]
        %v370 = vld [vmem:[%s308 + $0x168] sm:$0xff]
        %v371 = vld [vmem:[%s308 + $0x170] sm:$0xff]
        %v372 = vld [vmem:[%s308 + $0x178] sm:$0xff]
        %v373 = vld [vmem:[%s308 + $0x180] sm:$0xff]
        %v374 = vld [vmem:[%s308 + $0x188] sm:$0xff]
        %v375 = vld [vmem:[%s308 + $0x190] sm:$0xff]
        %v376 = vld [vmem:[%s308 + $0x198] sm:$0xff]
        %v377 = vld [vmem:[%s308 + $0x1a0] sm:$0xff]
        %v378 = vld [vmem:[%s308 + $0x1a8] sm:$0xff]
        %v379 = vld [vmem:[%s308 + $0x1b0] sm:$0xff]
        %v380 = vld [vmem:[%s308 + $0x1b8] sm:$0xff]
        %v381 = vld [vmem:[%s308 + $0x1c0] sm:$0xff]
        %v382 = vld [vmem:[%s308 + $0x1c8] sm:$0xff]
        %v383 = vld [vmem:[%s308 + $0x1d0] sm:$0xff]
        %v384 = vld [vmem:[%s308 + $0x1d8] sm:$0xff]
        %v385 = vld [vmem:[%s308 + $0x1e0] sm:$0xff]
        %v386 = vld [vmem:[%s308 + $0x1e8] sm:$0xff]
        %v387 = vld [vmem:[%s308 + $0x1f0] sm:$0xff]
        %v388 = vld [vmem:[%s308 + $0x1f8] sm:$0xff]
        %v389 = vld [vmem:[%s308 + $0x200] sm:$0xff]
        %v390 = vld [vmem:[%s308 + $0x208] sm:$0xff]
        %v391 = vld [vmem:[%s308 + $0x210] sm:$0xff]
        %v392 = vld [vmem:[%s308 + $0x218] sm:$0xff]
        %v393 = vld [vmem:[%s308 + $0x220] sm:$0xff]
        %v394 = vld [vmem:[%s308 + $0x228] sm:$0xff]
        %v395 = vld [vmem:[%s308 + $0x230] sm:$0xff]
        %v396 = vld [vmem:[%s308 + $0x238] sm:$0xff]
        %v397 = vld [vmem:[%s308 + $0x240] sm:$0xff]
        %v398 = vld [vmem:[%s308 + $0x248] sm:$0xff]
        %v399 = vld [vmem:[%s308 + $0x250] sm:$0xff]
        %v400 = vld [vmem:[%s308 + $0x258] sm:$0xff]
        %v401 = vld [vmem:[%s308 + $0x260] sm:$0xff]
        %v402 = vld [vmem:[%s308 + $0x268] sm:$0xff]
        %v403 = vld [vmem:[%s308 + $0x270] sm:$0xff]
        %v404 = vld [vmem:[%s308 + $0x278] sm:$0xff]
        %v405 = vld [vmem:[%s308 + $0x280] sm:$0xff]
        %v406 = vld [vmem:[%s308 + $0x288] sm:$0xff]
        %v407 = vld [vmem:[%s308 + $0x290] sm:$0xff]
        %v408 = vld [vmem:[%s308 + $0x298] sm:$0xff]
        %v409 = vld [vmem:[%s308 + $0x2a0] sm:$0xff]
        %v410 = vld [vmem:[%s308 + $0x2a8] sm:$0xff]
        %v411 = vld [vmem:[%s308 + $0x2b0] sm:$0xff]
        %v412 = vld [vmem:[%s308 + $0x2b8] sm:$0xff]
        %v413 = vld [vmem:[%s308 + $0x2c0] sm:$0xff]
        %v414 = vld [vmem:[%s308 + $0x2c8] sm:$0xff]
        %v415 = vld [vmem:[%s308 + $0x2d0] sm:$0xff]
        %v416 = vld [vmem:[%s308 + $0x2d8] sm:$0xff]
        %v417 = vld [vmem:[%s308 + $0x2e0] sm:$0xff]
        %v418 = vld [vmem:[%s308 + $0x2e8] sm:$0xff]
        %v419 = vld [vmem:[%s308 + $0x2f0] sm:$0xff]
        %v420 = vld [vmem:[%s308 + $0x2f8] sm:$0xff]
        %v421 = vld [vmem:[%s308 + $0x300] sm:$0xff]
        %v422 = vld [vmem:[%s308 + $0x308] sm:$0xff]
        %v423 = vld [vmem:[%s308 + $0x310] sm:$0xff]
        %v424 = vld [vmem:[%s308 + $0x318] sm:$0xff]
        %v425 = vld [vmem:[%s308 + $0x320] sm:$0xff]
        %v426 = vld [vmem:[%s308 + $0x328] sm:$0xff]
        %v427 = vld [vmem:[%s308 + $0x330] sm:$0xff]
        %v428 = vld [vmem:[%s308 + $0x338] sm:$0xff]
        %v429 = vld [vmem:[%s308 + $0x340] sm:$0xff]
        %v430 = vld [vmem:[%s308 + $0x348] sm:$0xff]
        %v431 = vld [vmem:[%s308 + $0x350] sm:$0xff]
        %v432 = vld [vmem:[%s308 + $0x358] sm:$0xff]
        %v433 = vld [vmem:[%s308 + $0x360] sm:$0xff]
        %v434 = vld [vmem:[%s308 + $0x368] sm:$0xff]
        %v435 = vld [vmem:[%s308 + $0x370] sm:$0xff]
        %v436 = vld [vmem:[%s308 + $0x378] sm:$0xff]
        %v437 = vld [vmem:[%s308 + $0x380] sm:$0xff]
        %v438 = vld [vmem:[%s308 + $0x388] sm:$0xff]
        %v439 = vld [vmem:[%s308 + $0x390] sm:$0xff]
        %v440 = vld [vmem:[%s308 + $0x398] sm:$0xff]
        %v441 = vld [vmem:[%s308 + $0x3a0] sm:$0xff]
        %v442 = vld [vmem:[%s308 + $0x3a8] sm:$0xff]
        %v443 = vld [vmem:[%s308 + $0x3b0] sm:$0xff]
        %v444 = vld [vmem:[%s308 + $0x3b8] sm:$0xff]
        %v445 = vld [vmem:[%s308 + $0x3c0] sm:$0xff]
        %v446 = vld [vmem:[%s308 + $0x3c8] sm:$0xff]
        %v447 = vld [vmem:[%s308 + $0x3d0] sm:$0xff]
        %v448 = vld [vmem:[%s308 + $0x3d8] sm:$0xff]
        %v449 = vld [vmem:[%s308 + $0x3e0] sm:$0xff]
        %v450 = vld [vmem:[%s308 + $0x3e8] sm:$0xff]
        %v451 = vld [vmem:[%s308 + $0x3f0] sm:$0xff]
        %v452 = vld [vmem:[%s308 + $0x3f8] sm:$0xff]
        %v453 = vpack.c.bf16 %v329, %v325
        %v454 = vpack.c.bf16 %v330, %v326
        %v455 = vpack.c.bf16 %v331, %v327
        %v456 = vpack.c.bf16 %v332, %v328
        %v457 = vpack.c.bf16 %v337, %v333
        %v458 = vpack.c.bf16 %v338, %v334
        %v459 = vpack.c.bf16 %v339, %v335
        %v460 = vpack.c.bf16 %v340, %v336
        %v461 = vpack.c.bf16 %v345, %v341
        %v462 = vpack.c.bf16 %v346, %v342
        %v463 = vpack.c.bf16 %v347, %v343
        %v464 = vpack.c.bf16 %v348, %v344
        %v465 = vpack.c.bf16 %v353, %v349
        %v466 = vpack.c.bf16 %v354, %v350
        %v467 = vpack.c.bf16 %v355, %v351
        %v468 = vpack.c.bf16 %v356, %v352
        %v469 = vpack.c.bf16 %v361, %v357
        %v470 = vpack.c.bf16 %v362, %v358
        %v471 = vpack.c.bf16 %v363, %v359
        %v472 = vpack.c.bf16 %v364, %v360
        %v473 = vpack.c.bf16 %v369, %v365
        %v474 = vpack.c.bf16 %v370, %v366
        %v475 = vpack.c.bf16 %v371, %v367
        %v476 = vpack.c.bf16 %v372, %v368
        %v477 = vpack.c.bf16 %v377, %v373
        %v478 = vpack.c.bf16 %v378, %v374
        %v479 = vpack.c.bf16 %v379, %v375
        %v480 = vpack.c.bf16 %v380, %v376
        %v481 = vpack.c.bf16 %v385, %v381
        %v482 = vpack.c.bf16 %v386, %v382
        %v483 = vpack.c.bf16 %v387, %v383
        %v484 = vpack.c.bf16 %v388, %v384
        %v485 = vpack.c.bf16 %v393, %v389
        %v486 = vpack.c.bf16 %v394, %v390
        %v487 = vpack.c.bf16 %v395, %v391
        %v488 = vpack.c.bf16 %v396, %v392
        %v489 = vpack.c.bf16 %v401, %v397
        %v490 = vpack.c.bf16 %v402, %v398
        %v491 = vpack.c.bf16 %v403, %v399
        %v492 = vpack.c.bf16 %v404, %v400
        %v493 = vpack.c.bf16 %v409, %v405
        %v494 = vpack.c.bf16 %v410, %v406
        %v495 = vpack.c.bf16 %v411, %v407
        %v496 = vpack.c.bf16 %v412, %v408
        %v497 = vpack.c.bf16 %v417, %v413
        %v498 = vpack.c.bf16 %v418, %v414
        %v499 = vpack.c.bf16 %v419, %v415
        %v500 = vpack.c.bf16 %v420, %v416
        %v501 = vpack.c.bf16 %v425, %v421
        %v502 = vpack.c.bf16 %v426, %v422
        %v503 = vpack.c.bf16 %v427, %v423
        %v504 = vpack.c.bf16 %v428, %v424
        %v505 = vpack.c.bf16 %v433, %v429
        %v506 = vpack.c.bf16 %v434, %v430
        %v507 = vpack.c.bf16 %v435, %v431
        %v508 = vpack.c.bf16 %v436, %v432
        %v509 = vpack.c.bf16 %v441, %v437
        %v510 = vpack.c.bf16 %v442, %v438
        %v511 = vpack.c.bf16 %v443, %v439
        %v512 = vpack.c.bf16 %v444, %v440
        %v513 = vpack.c.bf16 %v449, %v445
        %v514 = vpack.c.bf16 %v450, %v446
        %v515 = vpack.c.bf16 %v451, %v447
        %v516 = vpack.c.bf16 %v452, %v448
        %v517 = vld [vmem:[%s2] sm:$0xf]
        %v518 = vld [vmem:[%s2 + $0x4] sm:$0xf]
        %v519 = vld [vmem:[%s2 + $0x8] sm:$0xf]
        %v520 = vld [vmem:[%s2 + $0xc] sm:$0xf]
        %v521 = vld [vmem:[%s2 + $0x10] sm:$0xf]
        %v522 = vld [vmem:[%s2 + $0x14] sm:$0xf]
        %v523 = vld [vmem:[%s2 + $0x18] sm:$0xf]
        %v524 = vld [vmem:[%s2 + $0x1c] sm:$0xf]
        %v525 = vld [vmem:[%s2 + $0x20] sm:$0xf]
        %v526 = vld [vmem:[%s2 + $0x24] sm:$0xf]
        %v527 = vld [vmem:[%s2 + $0x28] sm:$0xf]
        %v528 = vld [vmem:[%s2 + $0x2c] sm:$0xf]
        %v529 = vld [vmem:[%s2 + $0x30] sm:$0xf]
        %v530 = vld [vmem:[%s2 + $0x34] sm:$0xf]
        %v531 = vld [vmem:[%s2 + $0x38] sm:$0xf]
        %v532 = vld [vmem:[%s2 + $0x3c] sm:$0xf]
        %v533 = vld [vmem:[%s2 + $0x40] sm:$0xf]
        %v534 = vld [vmem:[%s2 + $0x44] sm:$0xf]
        %v535 = vld [vmem:[%s2 + $0x48] sm:$0xf]
        %v536 = vld [vmem:[%s2 + $0x4c] sm:$0xf]
        %v537 = vld [vmem:[%s2 + $0x50] sm:$0xf]
        %v538 = vld [vmem:[%s2 + $0x54] sm:$0xf]
        %v539 = vld [vmem:[%s2 + $0x58] sm:$0xf]
        %v540 = vld [vmem:[%s2 + $0x5c] sm:$0xf]
        %v541 = vld [vmem:[%s2 + $0x60] sm:$0xf]
        %v542 = vld [vmem:[%s2 + $0x64] sm:$0xf]
        %v543 = vld [vmem:[%s2 + $0x68] sm:$0xf]
        %v544 = vld [vmem:[%s2 + $0x6c] sm:$0xf]
        %v545 = vld [vmem:[%s2 + $0x70] sm:$0xf]
        %v546 = vld [vmem:[%s2 + $0x74] sm:$0xf]
        %v547 = vld [vmem:[%s2 + $0x78] sm:$0xf]
        %v548 = vld [vmem:[%s2 + $0x7c] sm:$0xf]
        %v549 = vld [vmem:[%s2 + $0x80] sm:$0xf]
        %v550 = vld [vmem:[%s2 + $0x84] sm:$0xf]
        %v551 = vld [vmem:[%s2 + $0x88] sm:$0xf]
        %v552 = vld [vmem:[%s2 + $0x8c] sm:$0xf]
        %v553 = vld [vmem:[%s2 + $0x90] sm:$0xf]
        %v554 = vld [vmem:[%s2 + $0x94] sm:$0xf]
        %v555 = vld [vmem:[%s2 + $0x98] sm:$0xf]
        %v556 = vld [vmem:[%s2 + $0x9c] sm:$0xf]
        %v557 = vld [vmem:[%s2 + $0xa0] sm:$0xf]
        %v558 = vld [vmem:[%s2 + $0xa4] sm:$0xf]
        %v559 = vld [vmem:[%s2 + $0xa8] sm:$0xf]
        %v560 = vld [vmem:[%s2 + $0xac] sm:$0xf]
        %v561 = vld [vmem:[%s2 + $0xb0] sm:$0xf]
        %v562 = vld [vmem:[%s2 + $0xb4] sm:$0xf]
        %v563 = vld [vmem:[%s2 + $0xb8] sm:$0xf]
        %v564 = vld [vmem:[%s2 + $0xbc] sm:$0xf]
        %v565 = vld [vmem:[%s2 + $0xc0] sm:$0xf]
        %v566 = vld [vmem:[%s2 + $0xc4] sm:$0xf]
        %v567 = vld [vmem:[%s3] sm:$0x1]
        %v569 = vperm.slane %v567, 0
        %v621 = vunpack.c.l.b16 %v517
        %v622 = vunpack.c.l.b16 %v518
        %v623 = vunpack.c.l.b16 %v519
        %v624 = vunpack.c.l.b16 %v520
        %v625 = vunpack.c.l.b16 %v521
        %v626 = vunpack.c.l.b16 %v522
        %v627 = vunpack.c.l.b16 %v523
        %v628 = vunpack.c.l.b16 %v524
        %v629 = vunpack.c.l.b16 %v525
        %v630 = vunpack.c.l.b16 %v526
        %v631 = vunpack.c.l.b16 %v527
        %v632 = vunpack.c.l.b16 %v528
        %v633 = vunpack.c.l.b16 %v529
        %v634 = vunpack.c.l.b16 %v530
        %v635 = vunpack.c.l.b16 %v531
        %v636 = vunpack.c.l.b16 %v532
        %v637 = vunpack.c.l.b16 %v533
        %v638 = vunpack.c.l.b16 %v534
        %v639 = vunpack.c.l.b16 %v535
        %v640 = vunpack.c.l.b16 %v536
        %v641 = vunpack.c.l.b16 %v537
        %v642 = vunpack.c.l.b16 %v538
        %v643 = vunpack.c.l.b16 %v539
        %v644 = vunpack.c.l.b16 %v540
        %v645 = vunpack.c.l.b16 %v541
        %v646 = vunpack.c.l.b16 %v542
        %v647 = vunpack.c.l.b16 %v543
        %v648 = vunpack.c.l.b16 %v544
        %v649 = vunpack.c.l.b16 %v545
        %v650 = vunpack.c.l.b16 %v546
        %v651 = vunpack.c.l.b16 %v547
        %v652 = vunpack.c.l.b16 %v548
        %v653 = vunpack.c.l.b16 %v549
        %v654 = vunpack.c.l.b16 %v550
        %v655 = vunpack.c.l.b16 %v551
        %v656 = vunpack.c.l.b16 %v552
        %v657 = vunpack.c.l.b16 %v553
        %v658 = vunpack.c.l.b16 %v554
        %v659 = vunpack.c.l.b16 %v555
        %v660 = vunpack.c.l.b16 %v556
        %v661 = vunpack.c.l.b16 %v557
        %v662 = vunpack.c.l.b16 %v558
        %v663 = vunpack.c.l.b16 %v559
        %v664 = vunpack.c.l.b16 %v560
        %v665 = vunpack.c.l.b16 %v561
        %v666 = vunpack.c.l.b16 %v562
        %v667 = vunpack.c.l.b16 %v563
        %v668 = vunpack.c.l.b16 %v564
        %v669 = vunpack.c.l.b16 %v565
        %v670 = vunpack.c.l.b16 %v566
        %v671 = vpack.c.b16 %v622, %v621
        %v672 = vpack.c.b16 %v624, %v623
        %v673 = vpack.c.b16 %v626, %v625
        %v674 = vpack.c.b16 %v628, %v627
        %v675 = vpack.c.b16 %v630, %v629
        %v676 = vpack.c.b16 %v632, %v631
        %v677 = vpack.c.b16 %v634, %v633
        %v678 = vpack.c.b16 %v636, %v635
        %v679 = vpack.c.b16 %v638, %v637
        %v680 = vpack.c.b16 %v640, %v639
        %v681 = vpack.c.b16 %v642, %v641
        %v682 = vpack.c.b16 %v644, %v643
        %v683 = vpack.c.b16 %v646, %v645
        %v684 = vpack.c.b16 %v648, %v647
        %v685 = vpack.c.b16 %v650, %v649
        %v686 = vpack.c.b16 %v652, %v651
        %v687 = vpack.c.b16 %v654, %v653
        %v688 = vpack.c.b16 %v656, %v655
        %v689 = vpack.c.b16 %v658, %v657
        %v690 = vpack.c.b16 %v660, %v659
        %v691 = vpack.c.b16 %v662, %v661
        %v692 = vpack.c.b16 %v664, %v663
        %v693 = vpack.c.b16 %v666, %v665
        %v694 = vpack.c.b16 %v668, %v667
        %v695 = vpack.c.b16 %v670, %v669
        %vm721 = vcmask 130048
        %v723 = vsel %vm721, %v456, 0
        %v726 = vsel %vm721, %v460, 0
        %v729 = vsel %vm721, %v464, 0
        %v732 = vsel %vm721, %v468, 0
        %v735 = vsel %vm721, %v472, 0
        %v738 = vsel %vm721, %v476, 0
        %v741 = vsel %vm721, %v480, 0
        %v744 = vsel %vm721, %v484, 0
        %v747 = vsel %vm721, %v488, 0
        %v750 = vsel %vm721, %v492, 0
        %v753 = vsel %vm721, %v496, 0
        %v756 = vsel %vm721, %v500, 0
        %v759 = vsel %vm721, %v504, 0
        %v762 = vsel %vm721, %v508, 0
        %v765 = vsel %vm721, %v512, 0
        %v768 = vsel %vm721, %v516, 0
        %770 = vmatpush.bf16.msra.mxu0 %v678
        %771 = vmatpush.bf16.msra.mxu0 %v677
        %772 = vmatpush.bf16.msra.mxu0 %v676
        %773 = vmatpush.bf16.msra.mxu0 %v675
        %774 = vmatpush.bf16.msra.mxu0 %v674
        %775 = vmatpush.bf16.msra.mxu0 %v673
        %776 = vmatpush.bf16.msra.mxu0 %v672
        %777 = vmatpush.bf16.msra.mxu0 %v671
        %778 = vmatmul.bf16.gmra.mxu0 %v453
        %v779 = vpop.f32.mrf.mxu0
        %v780 = vadd.f32 %v569, %v779
        %v781 = vpop.f32.mrf.mxu0
        %v782 = vadd.f32 %v569, %v781
        %783 = vmatmul.bf16.gmra.mxu0 %v457
        %v784 = vpop.f32.mrf.mxu0
        %v785 = vadd.f32 %v569, %v784
        %v786 = vpop.f32.mrf.mxu0
        %v787 = vadd.f32 %v569, %v786
        %788 = vmatmul.bf16.gmra.mxu0 %v461
        %v789 = vpop.f32.mrf.mxu0
        %v790 = vadd.f32 %v569, %v789
        %v791 = vpop.f32.mrf.mxu0
        %v792 = vadd.f32 %v569, %v791
        %793 = vmatmul.bf16.gmra.mxu0 %v465
        %v794 = vpop.f32.mrf.mxu0
        %v795 = vadd.f32 %v569, %v794
        %v796 = vpop.f32.mrf.mxu0
        %v797 = vadd.f32 %v569, %v796
        %798 = vmatmul.bf16.gmra.mxu0 %v469
        %v799 = vpop.f32.mrf.mxu0
        %v800 = vadd.f32 %v569, %v799
        %v801 = vpop.f32.mrf.mxu0
        %v802 = vadd.f32 %v569, %v801
        %803 = vmatmul.bf16.gmra.mxu0 %v473
        %v804 = vpop.f32.mrf.mxu0
        %v805 = vadd.f32 %v569, %v804
        %v806 = vpop.f32.mrf.mxu0
        %v807 = vadd.f32 %v569, %v806
        %808 = vmatmul.bf16.gmra.mxu0 %v477
        %v809 = vpop.f32.mrf.mxu0
        %v810 = vadd.f32 %v569, %v809
        %v811 = vpop.f32.mrf.mxu0
        %v812 = vadd.f32 %v569, %v811
        %813 = vmatmul.bf16.gmra.mxu0 %v481
        %v814 = vpop.f32.mrf.mxu0
        %v815 = vadd.f32 %v569, %v814
        %v816 = vpop.f32.mrf.mxu0
        %v817 = vadd.f32 %v569, %v816
        %818 = vmatmul.bf16.gmra.mxu0 %v485
        %v819 = vpop.f32.mrf.mxu0
        %v820 = vadd.f32 %v569, %v819
        %v821 = vpop.f32.mrf.mxu0
        %v822 = vadd.f32 %v569, %v821
        %823 = vmatmul.bf16.gmra.mxu0 %v489
        %v824 = vpop.f32.mrf.mxu0
        %v825 = vadd.f32 %v569, %v824
        %v826 = vpop.f32.mrf.mxu0
        %v827 = vadd.f32 %v569, %v826
        %828 = vmatmul.bf16.gmra.mxu0 %v493
        %v829 = vpop.f32.mrf.mxu0
        %v830 = vadd.f32 %v569, %v829
        %v831 = vpop.f32.mrf.mxu0
        %v832 = vadd.f32 %v569, %v831
        %833 = vmatmul.bf16.gmra.mxu0 %v497
        %v834 = vpop.f32.mrf.mxu0
        %v835 = vadd.f32 %v569, %v834
        %v836 = vpop.f32.mrf.mxu0
        %v837 = vadd.f32 %v569, %v836
        %838 = vmatmul.bf16.gmra.mxu0 %v501
        %v839 = vpop.f32.mrf.mxu0
        %v840 = vadd.f32 %v569, %v839
        %v841 = vpop.f32.mrf.mxu0
        %v842 = vadd.f32 %v569, %v841
        %843 = vmatmul.bf16.gmra.mxu0 %v505
        %v844 = vpop.f32.mrf.mxu0
        %v845 = vadd.f32 %v569, %v844
        %v846 = vpop.f32.mrf.mxu0
        %v847 = vadd.f32 %v569, %v846
        %848 = vmatmul.bf16.gmra.mxu0 %v509
        %v849 = vpop.f32.mrf.mxu0
        %v850 = vadd.f32 %v569, %v849
        %v851 = vpop.f32.mrf.mxu0
        %v852 = vadd.f32 %v569, %v851
        %853 = vmatmul.bf16.gmra.mxu0 %v513
        %v854 = vpop.f32.mrf.mxu0
        %v855 = vadd.f32 %v569, %v854
        %v856 = vpop.f32.mrf.mxu0
        %v857 = vadd.f32 %v569, %v856
        %858 = vdwg.mxu0
        %859 = vmatpush.bf16.msra.mxu0 %v686
        %860 = vmatpush.bf16.msra.mxu0 %v685
        %861 = vmatpush.bf16.msra.mxu0 %v684
        %862 = vmatpush.bf16.msra.mxu0 %v683
        %863 = vmatpush.bf16.msra.mxu0 %v682
        %864 = vmatpush.bf16.msra.mxu0 %v681
        %865 = vmatpush.bf16.msra.mxu0 %v680
        %866 = vmatpush.bf16.msra.mxu0 %v679
        %867 = vmatmul.bf16.gmra.mxu0 %v454
        %v868 = vpop.f32.mrf.mxu0
        %v869 = vadd.f32 %v780, %v868
        %v870 = vpop.f32.mrf.mxu0
        %v871 = vadd.f32 %v782, %v870
        %872 = vmatmul.bf16.gmra.mxu0 %v458
        %v873 = vpop.f32.mrf.mxu0
        %v874 = vadd.f32 %v785, %v873
        %v875 = vpop.f32.mrf.mxu0
        %v876 = vadd.f32 %v787, %v875
        %877 = vmatmul.bf16.gmra.mxu0 %v462
        %v878 = vpop.f32.mrf.mxu0
        %v879 = vadd.f32 %v790, %v878
        %v880 = vpop.f32.mrf.mxu0
        %v881 = vadd.f32 %v792, %v880
        %882 = vmatmul.bf16.gmra.mxu0 %v466
        %v883 = vpop.f32.mrf.mxu0
        %v884 = vadd.f32 %v795, %v883
        %v885 = vpop.f32.mrf.mxu0
        %v886 = vadd.f32 %v797, %v885
        %887 = vmatmul.bf16.gmra.mxu0 %v470
        %v888 = vpop.f32.mrf.mxu0
        %v889 = vadd.f32 %v800, %v888
        %v890 = vpop.f32.mrf.mxu0
        %v891 = vadd.f32 %v802, %v890
        %892 = vmatmul.bf16.gmra.mxu0 %v474
        %v893 = vpop.f32.mrf.mxu0
        %v894 = vadd.f32 %v805, %v893
        %v895 = vpop.f32.mrf.mxu0
        %v896 = vadd.f32 %v807, %v895
        %897 = vmatmul.bf16.gmra.mxu0 %v478
        %v898 = vpop.f32.mrf.mxu0
        %v899 = vadd.f32 %v810, %v898
        %v900 = vpop.f32.mrf.mxu0
        %v901 = vadd.f32 %v812, %v900
        %902 = vmatmul.bf16.gmra.mxu0 %v482
        %v903 = vpop.f32.mrf.mxu0
        %v904 = vadd.f32 %v815, %v903
        %v905 = vpop.f32.mrf.mxu0
        %v906 = vadd.f32 %v817, %v905
        %907 = vmatmul.bf16.gmra.mxu0 %v486
        %v908 = vpop.f32.mrf.mxu0
        %v909 = vadd.f32 %v820, %v908
        %v910 = vpop.f32.mrf.mxu0
        %v911 = vadd.f32 %v822, %v910
        %912 = vmatmul.bf16.gmra.mxu0 %v490
        %v913 = vpop.f32.mrf.mxu0
        %v914 = vadd.f32 %v825, %v913
        %v915 = vpop.f32.mrf.mxu0
        %v916 = vadd.f32 %v827, %v915
        %917 = vmatmul.bf16.gmra.mxu0 %v494
        %v918 = vpop.f32.mrf.mxu0
        %v919 = vadd.f32 %v830, %v918
        %v920 = vpop.f32.mrf.mxu0
        %v921 = vadd.f32 %v832, %v920
        %922 = vmatmul.bf16.gmra.mxu0 %v498
        %v923 = vpop.f32.mrf.mxu0
        %v924 = vadd.f32 %v835, %v923
        %v925 = vpop.f32.mrf.mxu0
        %v926 = vadd.f32 %v837, %v925
        %927 = vmatmul.bf16.gmra.mxu0 %v502
        %v928 = vpop.f32.mrf.mxu0
        %v929 = vadd.f32 %v840, %v928
        %v930 = vpop.f32.mrf.mxu0
        %v931 = vadd.f32 %v842, %v930
        %932 = vmatmul.bf16.gmra.mxu0 %v506
        %v933 = vpop.f32.mrf.mxu0
        %v934 = vadd.f32 %v845, %v933
        %v935 = vpop.f32.mrf.mxu0
        %v936 = vadd.f32 %v847, %v935
        %937 = vmatmul.bf16.gmra.mxu0 %v510
        %v938 = vpop.f32.mrf.mxu0
        %v939 = vadd.f32 %v850, %v938
        %v940 = vpop.f32.mrf.mxu0
        %v941 = vadd.f32 %v852, %v940
        %942 = vmatmul.bf16.gmra.mxu0 %v514
        %v943 = vpop.f32.mrf.mxu0
        %v944 = vadd.f32 %v855, %v943
        %v945 = vpop.f32.mrf.mxu0
        %v946 = vadd.f32 %v857, %v945
        %947 = vdwg.mxu0
        %948 = vmatpush.bf16.msra.mxu0 %v694
        %949 = vmatpush.bf16.msra.mxu0 %v693
        %950 = vmatpush.bf16.msra.mxu0 %v692
        %951 = vmatpush.bf16.msra.mxu0 %v691
        %952 = vmatpush.bf16.msra.mxu0 %v690
        %953 = vmatpush.bf16.msra.mxu0 %v689
        %954 = vmatpush.bf16.msra.mxu0 %v688
        %955 = vmatpush.bf16.msra.mxu0 %v687
        %956 = vmatmul.bf16.gmra.mxu0 %v455
        %v957 = vpop.f32.mrf.mxu0
        %v958 = vadd.f32 %v869, %v957
        %v959 = vpop.f32.mrf.mxu0
        %v960 = vadd.f32 %v871, %v959
        %961 = vmatmul.bf16.gmra.mxu0 %v459
        %v962 = vpop.f32.mrf.mxu0
        %v963 = vadd.f32 %v874, %v962
        %v964 = vpop.f32.mrf.mxu0
        %v965 = vadd.f32 %v876, %v964
        %966 = vmatmul.bf16.gmra.mxu0 %v463
        %v967 = vpop.f32.mrf.mxu0
        %v968 = vadd.f32 %v879, %v967
        %v969 = vpop.f32.mrf.mxu0
        %v970 = vadd.f32 %v881, %v969
        %971 = vmatmul.bf16.gmra.mxu0 %v467
        %v972 = vpop.f32.mrf.mxu0
        %v973 = vadd.f32 %v884, %v972
        %v974 = vpop.f32.mrf.mxu0
        %v975 = vadd.f32 %v886, %v974
        %976 = vmatmul.bf16.gmra.mxu0 %v471
        %v977 = vpop.f32.mrf.mxu0
        %v978 = vadd.f32 %v889, %v977
        %v979 = vpop.f32.mrf.mxu0
        %v980 = vadd.f32 %v891, %v979
        %981 = vmatmul.bf16.gmra.mxu0 %v475
        %v982 = vpop.f32.mrf.mxu0
        %v983 = vadd.f32 %v894, %v982
        %v984 = vpop.f32.mrf.mxu0
        %v985 = vadd.f32 %v896, %v984
        %986 = vmatmul.bf16.gmra.mxu0 %v479
        %v987 = vpop.f32.mrf.mxu0
        %v988 = vadd.f32 %v899, %v987
        %v989 = vpop.f32.mrf.mxu0
        %v990 = vadd.f32 %v901, %v989
        %991 = vmatmul.bf16.gmra.mxu0 %v483
        %v992 = vpop.f32.mrf.mxu0
        %v993 = vadd.f32 %v904, %v992
        %v994 = vpop.f32.mrf.mxu0
        %v995 = vadd.f32 %v906, %v994
        %996 = vmatmul.bf16.gmra.mxu0 %v487
        %v997 = vpop.f32.mrf.mxu0
        %v998 = vadd.f32 %v909, %v997
        %v999 = vpop.f32.mrf.mxu0
        %v1000 = vadd.f32 %v911, %v999
        %1001 = vmatmul.bf16.gmra.mxu0 %v491
        %v1002 = vpop.f32.mrf.mxu0
        %v1003 = vadd.f32 %v914, %v1002
        %v1004 = vpop.f32.mrf.mxu0
        %v1005 = vadd.f32 %v916, %v1004
        %1006 = vmatmul.bf16.gmra.mxu0 %v495
        %v1007 = vpop.f32.mrf.mxu0
        %v1008 = vadd.f32 %v919, %v1007
        %v1009 = vpop.f32.mrf.mxu0
        %v1010 = vadd.f32 %v921, %v1009
        %1011 = vmatmul.bf16.gmra.mxu0 %v499
        %v1012 = vpop.f32.mrf.mxu0
        %v1013 = vadd.f32 %v924, %v1012
        %v1014 = vpop.f32.mrf.mxu0
        %v1015 = vadd.f32 %v926, %v1014
        %1016 = vmatmul.bf16.gmra.mxu0 %v503
        %v1017 = vpop.f32.mrf.mxu0
        %v1018 = vadd.f32 %v929, %v1017
        %v1019 = vpop.f32.mrf.mxu0
        %v1020 = vadd.f32 %v931, %v1019
        %1021 = vmatmul.bf16.gmra.mxu0 %v507
        %v1022 = vpop.f32.mrf.mxu0
        %v1023 = vadd.f32 %v934, %v1022
        %v1024 = vpop.f32.mrf.mxu0
        %v1025 = vadd.f32 %v936, %v1024
        %1026 = vmatmul.bf16.gmra.mxu0 %v511
        %v1027 = vpop.f32.mrf.mxu0
        %v1028 = vadd.f32 %v939, %v1027
        %v1029 = vpop.f32.mrf.mxu0
        %v1030 = vadd.f32 %v941, %v1029
        %1031 = vmatmul.bf16.gmra.mxu0 %v515
        %v1032 = vpop.f32.mrf.mxu0
        %v1033 = vadd.f32 %v944, %v1032
        %v1034 = vpop.f32.mrf.mxu0
        %v1035 = vadd.f32 %v946, %v1034
        %1036 = vdwg.mxu0
        %1037 = vmatpush.bf16.msra.mxu0 0
        %1038 = vmatpush.bf16.msra.mxu0 0
        %1039 = vmatpush.bf16.msra.mxu0 0
        %1040 = vmatpush.bf16.msra.mxu0 0
        %1041 = vmatpush.bf16.msra.mxu0 0
        %1042 = vmatpush.bf16.msra.mxu0 0
        %1043 = vmatpush.bf16.msra.mxu0 0
        %1044 = vmatpush.bf16.msra.mxu0 %v695
        %1045 = vmatmul.bf16.gmra.mxu0 %v723
        %v1046 = vpop.f32.mrf.mxu0
        %v1047 = vadd.f32 %v958, %v1046
        %v1048 = vpop.f32.mrf.mxu0
        %v1049 = vadd.f32 %v960, %v1048
        %1050 = vmatmul.bf16.gmra.mxu0 %v726
        %v1051 = vpop.f32.mrf.mxu0
        %v1052 = vadd.f32 %v963, %v1051
        %v1053 = vpop.f32.mrf.mxu0
        %v1054 = vadd.f32 %v965, %v1053
        %1055 = vmatmul.bf16.gmra.mxu0 %v729
        %v1056 = vpop.f32.mrf.mxu0
        %v1057 = vadd.f32 %v968, %v1056
        %v1058 = vpop.f32.mrf.mxu0
        %v1059 = vadd.f32 %v970, %v1058
        %1060 = vmatmul.bf16.gmra.mxu0 %v732
        %v1061 = vpop.f32.mrf.mxu0
        %v1062 = vadd.f32 %v973, %v1061
        %v1063 = vpop.f32.mrf.mxu0
        %v1064 = vadd.f32 %v975, %v1063
        %1065 = vmatmul.bf16.gmra.mxu0 %v735
        %v1066 = vpop.f32.mrf.mxu0
        %v1067 = vadd.f32 %v978, %v1066
        %v1068 = vpop.f32.mrf.mxu0
        %v1069 = vadd.f32 %v980, %v1068
        %1070 = vmatmul.bf16.gmra.mxu0 %v738
        %v1071 = vpop.f32.mrf.mxu0
        %v1072 = vadd.f32 %v983, %v1071
        %v1073 = vpop.f32.mrf.mxu0
        %v1074 = vadd.f32 %v985, %v1073
        %1075 = vmatmul.bf16.gmra.mxu0 %v741
        %v1076 = vpop.f32.mrf.mxu0
        %v1077 = vadd.f32 %v988, %v1076
        %v1078 = vpop.f32.mrf.mxu0
        %v1079 = vadd.f32 %v990, %v1078
        %1080 = vmatmul.bf16.gmra.mxu0 %v744
        %v1081 = vpop.f32.mrf.mxu0
        %v1082 = vadd.f32 %v993, %v1081
        %v1083 = vpop.f32.mrf.mxu0
        %v1084 = vadd.f32 %v995, %v1083
        %1085 = vmatmul.bf16.gmra.mxu0 %v747
        %v1086 = vpop.f32.mrf.mxu0
        %v1087 = vadd.f32 %v998, %v1086
        %v1088 = vpop.f32.mrf.mxu0
        %v1089 = vadd.f32 %v1000, %v1088
        %1090 = vmatmul.bf16.gmra.mxu0 %v750
        %v1091 = vpop.f32.mrf.mxu0
        %v1092 = vadd.f32 %v1003, %v1091
        %v1093 = vpop.f32.mrf.mxu0
        %v1094 = vadd.f32 %v1005, %v1093
        %1095 = vmatmul.bf16.gmra.mxu0 %v753
        %v1096 = vpop.f32.mrf.mxu0
        %v1097 = vadd.f32 %v1008, %v1096
        %v1098 = vpop.f32.mrf.mxu0
        %v1099 = vadd.f32 %v1010, %v1098
        %1100 = vmatmul.bf16.gmra.mxu0 %v756
        %v1101 = vpop.f32.mrf.mxu0
        %v1102 = vadd.f32 %v1013, %v1101
        %v1103 = vpop.f32.mrf.mxu0
        %v1104 = vadd.f32 %v1015, %v1103
        %1105 = vmatmul.bf16.gmra.mxu0 %v759
        %v1106 = vpop.f32.mrf.mxu0
        %v1107 = vadd.f32 %v1018, %v1106
        %v1108 = vpop.f32.mrf.mxu0
        %v1109 = vadd.f32 %v1020, %v1108
        %1110 = vmatmul.bf16.gmra.mxu0 %v762
        %v1111 = vpop.f32.mrf.mxu0
        %v1112 = vadd.f32 %v1023, %v1111
        %v1113 = vpop.f32.mrf.mxu0
        %v1114 = vadd.f32 %v1025, %v1113
        %1115 = vmatmul.bf16.gmra.mxu0 %v765
        %v1116 = vpop.f32.mrf.mxu0
        %v1117 = vadd.f32 %v1028, %v1116
        %v1118 = vpop.f32.mrf.mxu0
        %v1119 = vadd.f32 %v1030, %v1118
        %1120 = vmatmul.bf16.gmra.mxu0 %v768
        %v1121 = vpop.f32.mrf.mxu0
        %v1122 = vadd.f32 %v1033, %v1121
        %v1123 = vpop.f32.mrf.mxu0
        %v1124 = vadd.f32 %v1035, %v1123
        %1125 = vdwg.mxu0
        %v1126 = vmax.f32 %v1047, 0.0
        %v1127 = vmax.f32 %v1049, 0.0
        %v1128 = vmax.f32 %v1052, 0.0
        %v1129 = vmax.f32 %v1054, 0.0
        %v1130 = vmax.f32 %v1057, 0.0
        %v1131 = vmax.f32 %v1059, 0.0
        %v1132 = vmax.f32 %v1062, 0.0
        %v1133 = vmax.f32 %v1064, 0.0
        %v1134 = vmax.f32 %v1067, 0.0
        %v1135 = vmax.f32 %v1069, 0.0
        %v1136 = vmax.f32 %v1072, 0.0
        %v1137 = vmax.f32 %v1074, 0.0
        %v1138 = vmax.f32 %v1077, 0.0
        %v1139 = vmax.f32 %v1079, 0.0
        %v1140 = vmax.f32 %v1082, 0.0
        %v1141 = vmax.f32 %v1084, 0.0
        %v1142 = vmax.f32 %v1087, 0.0
        %v1143 = vmax.f32 %v1089, 0.0
        %v1144 = vmax.f32 %v1092, 0.0
        %v1145 = vmax.f32 %v1094, 0.0
        %v1146 = vmax.f32 %v1097, 0.0
        %v1147 = vmax.f32 %v1099, 0.0
        %v1148 = vmax.f32 %v1102, 0.0
        %v1149 = vmax.f32 %v1104, 0.0
        %v1150 = vmax.f32 %v1107, 0.0
        %v1151 = vmax.f32 %v1109, 0.0
        %v1152 = vmax.f32 %v1112, 0.0
        %v1153 = vmax.f32 %v1114, 0.0
        %v1154 = vmax.f32 %v1117, 0.0
        %v1155 = vmax.f32 %v1119, 0.0
        %v1156 = vmax.f32 %v1122, 0.0
        %v1157 = vmax.f32 %v1124, 0.0
        %v1158 = vld [vmem:[%s4] sm:$0x1]
        %v1160 = vperm.slane %v1158, 0
        %v1162 = vmul.f32 %v1126, %v1160
        %v1163 = vmul.f32 %v1127, %v1160
        %v1164 = vmul.f32 %v1128, %v1160
        %v1165 = vmul.f32 %v1129, %v1160
        %v1166 = vmul.f32 %v1130, %v1160
        %v1167 = vmul.f32 %v1131, %v1160
        %v1168 = vmul.f32 %v1132, %v1160
        %v1169 = vmul.f32 %v1133, %v1160
        %v1170 = vmul.f32 %v1134, %v1160
        %v1171 = vmul.f32 %v1135, %v1160
        %v1172 = vmul.f32 %v1136, %v1160
        %v1173 = vmul.f32 %v1137, %v1160
        %v1174 = vmul.f32 %v1138, %v1160
        %v1175 = vmul.f32 %v1139, %v1160
        %v1176 = vmul.f32 %v1140, %v1160
        %v1177 = vmul.f32 %v1141, %v1160
        %v1178 = vmul.f32 %v1142, %v1160
        %v1179 = vmul.f32 %v1143, %v1160
        %v1180 = vmul.f32 %v1144, %v1160
        %v1181 = vmul.f32 %v1145, %v1160
        %v1182 = vmul.f32 %v1146, %v1160
        %v1183 = vmul.f32 %v1147, %v1160
        %v1184 = vmul.f32 %v1148, %v1160
        %v1185 = vmul.f32 %v1149, %v1160
        %v1186 = vmul.f32 %v1150, %v1160
        %v1187 = vmul.f32 %v1151, %v1160
        %v1188 = vmul.f32 %v1152, %v1160
        %v1189 = vmul.f32 %v1153, %v1160
        %v1190 = vmul.f32 %v1154, %v1160
        %v1191 = vmul.f32 %v1155, %v1160
        %v1192 = vmul.f32 %v1156, %v1160
        %v1193 = vmul.f32 %v1157, %v1160
        %vm1194 = vcmask 23552
        %v1195 = vsel %vm1194, %v1162, 0.0
        %1196 = vadd.xlane.f32.xlu0 %v1195
        %v1197 = vpop.xlane.xlu0 %1196
        %v1198 = vsel %vm1194, %v1163, 0.0
        %1199 = vadd.xlane.f32.xlu0 %v1198
        %v1200 = vpop.xlane.xlu0 %1199
        %v1201 = vsel %vm1194, %v1164, 0.0
        %1202 = vadd.xlane.f32.xlu0 %v1201
        %v1203 = vpop.xlane.xlu0 %1202
        %v1204 = vsel %vm1194, %v1165, 0.0
        %1205 = vadd.xlane.f32.xlu0 %v1204
        %v1206 = vpop.xlane.xlu0 %1205
        %v1207 = vsel %vm1194, %v1166, 0.0
        %1208 = vadd.xlane.f32.xlu0 %v1207
        %v1209 = vpop.xlane.xlu0 %1208
        %v1210 = vsel %vm1194, %v1167, 0.0
        %1211 = vadd.xlane.f32.xlu0 %v1210
        %v1212 = vpop.xlane.xlu0 %1211
        %v1213 = vsel %vm1194, %v1168, 0.0
        %1214 = vadd.xlane.f32.xlu0 %v1213
        %v1215 = vpop.xlane.xlu0 %1214
        %v1216 = vsel %vm1194, %v1169, 0.0
        %1217 = vadd.xlane.f32.xlu0 %v1216
        %v1218 = vpop.xlane.xlu0 %1217
        %v1219 = vsel %vm1194, %v1170, 0.0
        %1220 = vadd.xlane.f32.xlu0 %v1219
        %v1221 = vpop.xlane.xlu0 %1220
        %v1222 = vsel %vm1194, %v1171, 0.0
        %1223 = vadd.xlane.f32.xlu0 %v1222
        %v1224 = vpop.xlane.xlu0 %1223
        %v1225 = vsel %vm1194, %v1172, 0.0
        %1226 = vadd.xlane.f32.xlu0 %v1225
        %v1227 = vpop.xlane.xlu0 %1226
        %v1228 = vsel %vm1194, %v1173, 0.0
        %1229 = vadd.xlane.f32.xlu0 %v1228
        %v1230 = vpop.xlane.xlu0 %1229
        %v1231 = vsel %vm1194, %v1174, 0.0
        %1232 = vadd.xlane.f32.xlu0 %v1231
        %v1233 = vpop.xlane.xlu0 %1232
        %v1234 = vsel %vm1194, %v1175, 0.0
        %1235 = vadd.xlane.f32.xlu0 %v1234
        %v1236 = vpop.xlane.xlu0 %1235
        %v1237 = vsel %vm1194, %v1176, 0.0
        %1238 = vadd.xlane.f32.xlu0 %v1237
        %v1239 = vpop.xlane.xlu0 %1238
        %v1240 = vsel %vm1194, %v1177, 0.0
        %1241 = vadd.xlane.f32.xlu0 %v1240
        %v1242 = vpop.xlane.xlu0 %1241
        %v1243 = vsel %vm1194, %v1178, 0.0
        %1244 = vadd.xlane.f32.xlu0 %v1243
        %v1245 = vpop.xlane.xlu0 %1244
        %v1246 = vsel %vm1194, %v1179, 0.0
        %1247 = vadd.xlane.f32.xlu0 %v1246
        %v1248 = vpop.xlane.xlu0 %1247
        %v1249 = vsel %vm1194, %v1180, 0.0
        %1250 = vadd.xlane.f32.xlu0 %v1249
        %v1251 = vpop.xlane.xlu0 %1250
        %v1252 = vsel %vm1194, %v1181, 0.0
        %1253 = vadd.xlane.f32.xlu0 %v1252
        %v1254 = vpop.xlane.xlu0 %1253
        %v1255 = vsel %vm1194, %v1182, 0.0
        %1256 = vadd.xlane.f32.xlu0 %v1255
        %v1257 = vpop.xlane.xlu0 %1256
        %v1258 = vsel %vm1194, %v1183, 0.0
        %1259 = vadd.xlane.f32.xlu0 %v1258
        %v1260 = vpop.xlane.xlu0 %1259
        %v1261 = vsel %vm1194, %v1184, 0.0
        %1262 = vadd.xlane.f32.xlu0 %v1261
        %v1263 = vpop.xlane.xlu0 %1262
        %v1264 = vsel %vm1194, %v1185, 0.0
        %1265 = vadd.xlane.f32.xlu0 %v1264
        %v1266 = vpop.xlane.xlu0 %1265
        %v1267 = vsel %vm1194, %v1186, 0.0
        %1268 = vadd.xlane.f32.xlu0 %v1267
        %v1269 = vpop.xlane.xlu0 %1268
        %v1270 = vsel %vm1194, %v1187, 0.0
        %1271 = vadd.xlane.f32.xlu0 %v1270
        %v1272 = vpop.xlane.xlu0 %1271
        %v1273 = vsel %vm1194, %v1188, 0.0
        %1274 = vadd.xlane.f32.xlu0 %v1273
        %v1275 = vpop.xlane.xlu0 %1274
        %v1276 = vsel %vm1194, %v1189, 0.0
        %1277 = vadd.xlane.f32.xlu0 %v1276
        %v1278 = vpop.xlane.xlu0 %1277
        %v1279 = vsel %vm1194, %v1190, 0.0
        %1280 = vadd.xlane.f32.xlu0 %v1279
        %v1281 = vpop.xlane.xlu0 %1280
        %v1282 = vsel %vm1194, %v1191, 0.0
        %1283 = vadd.xlane.f32.xlu0 %v1282
        %v1284 = vpop.xlane.xlu0 %1283
        %v1285 = vsel %vm1194, %v1192, 0.0
        %1286 = vadd.xlane.f32.xlu0 %v1285
        %v1287 = vpop.xlane.xlu0 %1286
        %v1288 = vsel %vm1194, %v1193, 0.0
        %1289 = vadd.xlane.f32.xlu0 %v1288
        %v1290 = vpop.xlane.xlu0 %1289
        %v1291 = vld [vmem:[#allocation2] sm:$0x1]
        %v1293 = vperm.slane %v1291, 0
        %v1295 = vadd.f32 %v1197, %v1293
        %v1296 = vadd.f32 %v1200, %v1293
        %v1297 = vadd.f32 %v1203, %v1293
        %v1298 = vadd.f32 %v1206, %v1293
        %v1299 = vadd.f32 %v1209, %v1293
        %v1300 = vadd.f32 %v1212, %v1293
        %v1301 = vadd.f32 %v1215, %v1293
        %v1302 = vadd.f32 %v1218, %v1293
        %v1303 = vadd.f32 %v1221, %v1293
        %v1304 = vadd.f32 %v1224, %v1293
        %v1305 = vadd.f32 %v1227, %v1293
        %v1306 = vadd.f32 %v1230, %v1293
        %v1307 = vadd.f32 %v1233, %v1293
        %v1308 = vadd.f32 %v1236, %v1293
        %v1309 = vadd.f32 %v1239, %v1293
        %v1310 = vadd.f32 %v1242, %v1293
        %v1311 = vadd.f32 %v1245, %v1293
        %v1312 = vadd.f32 %v1248, %v1293
        %v1313 = vadd.f32 %v1251, %v1293
        %v1314 = vadd.f32 %v1254, %v1293
        %v1315 = vadd.f32 %v1257, %v1293
        %v1316 = vadd.f32 %v1260, %v1293
        %v1317 = vadd.f32 %v1263, %v1293
        %v1318 = vadd.f32 %v1266, %v1293
        %v1319 = vadd.f32 %v1269, %v1293
        %v1320 = vadd.f32 %v1272, %v1293
        %v1321 = vadd.f32 %v1275, %v1293
        %v1322 = vadd.f32 %v1278, %v1293
        %v1323 = vadd.f32 %v1281, %v1293
        %v1324 = vadd.f32 %v1284, %v1293
        %v1325 = vadd.f32 %v1287, %v1293
        %v1326 = vadd.f32 %v1290, %v1293
        %v1327 = vsub.f32 0.0, %v1295
        %v1328 = vsub.f32 0.0, %v1296
        %v1329 = vsub.f32 0.0, %v1297
        %v1330 = vsub.f32 0.0, %v1298
        %v1331 = vsub.f32 0.0, %v1299
        %v1332 = vsub.f32 0.0, %v1300
        %v1333 = vsub.f32 0.0, %v1301
        %v1334 = vsub.f32 0.0, %v1302
        %v1335 = vsub.f32 0.0, %v1303
        %v1336 = vsub.f32 0.0, %v1304
        %v1337 = vsub.f32 0.0, %v1305
        %v1338 = vsub.f32 0.0, %v1306
        %v1339 = vsub.f32 0.0, %v1307
        %v1340 = vsub.f32 0.0, %v1308
        %v1341 = vsub.f32 0.0, %v1309
        %v1342 = vsub.f32 0.0, %v1310
        %v1343 = vsub.f32 0.0, %v1311
        %v1344 = vsub.f32 0.0, %v1312
        %v1345 = vsub.f32 0.0, %v1313
        %v1346 = vsub.f32 0.0, %v1314
        %v1347 = vsub.f32 0.0, %v1315
        %v1348 = vsub.f32 0.0, %v1316
        %v1349 = vsub.f32 0.0, %v1317
        %v1350 = vsub.f32 0.0, %v1318
        %v1351 = vsub.f32 0.0, %v1319
        %v1352 = vsub.f32 0.0, %v1320
        %v1353 = vsub.f32 0.0, %v1321
        %v1354 = vsub.f32 0.0, %v1322
        %v1355 = vsub.f32 0.0, %v1323
        %v1356 = vsub.f32 0.0, %v1324
        %v1357 = vsub.f32 0.0, %v1325
        %v1358 = vsub.f32 0.0, %v1326
        %v1359 = vmul.f32 %v1327, 1.442695
        %v1360 = vpow.pop %v1359
        %v1361 = vmul.f32 %v1328, 1.442695
        %v1362 = vpow.pop %v1361
        %v1363 = vmul.f32 %v1329, 1.442695
        %v1364 = vpow.pop %v1363
        %v1365 = vmul.f32 %v1330, 1.442695
        %v1366 = vpow.pop %v1365
        %v1367 = vmul.f32 %v1331, 1.442695
        %v1368 = vpow.pop %v1367
        %v1369 = vmul.f32 %v1332, 1.442695
        %v1370 = vpow.pop %v1369
        %v1371 = vmul.f32 %v1333, 1.442695
        %v1372 = vpow.pop %v1371
        %v1373 = vmul.f32 %v1334, 1.442695
        %v1374 = vpow.pop %v1373
        %v1375 = vmul.f32 %v1335, 1.442695
        %v1376 = vpow.pop %v1375
        %v1377 = vmul.f32 %v1336, 1.442695
        %v1378 = vpow.pop %v1377
        %v1379 = vmul.f32 %v1337, 1.442695
        %v1380 = vpow.pop %v1379
        %v1381 = vmul.f32 %v1338, 1.442695
        %v1382 = vpow.pop %v1381
        %v1383 = vmul.f32 %v1339, 1.442695
        %v1384 = vpow.pop %v1383
        %v1385 = vmul.f32 %v1340, 1.442695
        %v1386 = vpow.pop %v1385
        %v1387 = vmul.f32 %v1341, 1.442695
        %v1388 = vpow.pop %v1387
        %v1389 = vmul.f32 %v1342, 1.442695
        %v1390 = vpow.pop %v1389
        %v1391 = vmul.f32 %v1343, 1.442695
        %v1392 = vpow.pop %v1391
        %v1393 = vmul.f32 %v1344, 1.442695
        %v1394 = vpow.pop %v1393
        %v1395 = vmul.f32 %v1345, 1.442695
        %v1396 = vpow.pop %v1395
        %v1397 = vmul.f32 %v1346, 1.442695
        %v1398 = vpow.pop %v1397
        %v1399 = vmul.f32 %v1347, 1.442695
        %v1400 = vpow.pop %v1399
        %v1401 = vmul.f32 %v1348, 1.442695
        %v1402 = vpow.pop %v1401
        %v1403 = vmul.f32 %v1349, 1.442695
        %v1404 = vpow.pop %v1403
        %v1405 = vmul.f32 %v1350, 1.442695
        %v1406 = vpow.pop %v1405
        %v1407 = vmul.f32 %v1351, 1.442695
        %v1408 = vpow.pop %v1407
        %v1409 = vmul.f32 %v1352, 1.442695
        %v1410 = vpow.pop %v1409
        %v1411 = vmul.f32 %v1353, 1.442695
        %v1412 = vpow.pop %v1411
        %v1413 = vmul.f32 %v1354, 1.442695
        %v1414 = vpow.pop %v1413
        %v1415 = vmul.f32 %v1355, 1.442695
        %v1416 = vpow.pop %v1415
        %v1417 = vmul.f32 %v1356, 1.442695
        %v1418 = vpow.pop %v1417
        %v1419 = vmul.f32 %v1357, 1.442695
        %v1420 = vpow.pop %v1419
        %v1421 = vmul.f32 %v1358, 1.442695
        %v1422 = vpow.pop %v1421
        %v1423 = vadd.f32 %v1360, 1.0
        %v1424 = vadd.f32 %v1362, 1.0
        %v1425 = vadd.f32 %v1364, 1.0
        %v1426 = vadd.f32 %v1366, 1.0
        %v1427 = vadd.f32 %v1368, 1.0
        %v1428 = vadd.f32 %v1370, 1.0
        %v1429 = vadd.f32 %v1372, 1.0
        %v1430 = vadd.f32 %v1374, 1.0
        %v1431 = vadd.f32 %v1376, 1.0
        %v1432 = vadd.f32 %v1378, 1.0
        %v1433 = vadd.f32 %v1380, 1.0
        %v1434 = vadd.f32 %v1382, 1.0
        %v1435 = vadd.f32 %v1384, 1.0
        %v1436 = vadd.f32 %v1386, 1.0
        %v1437 = vadd.f32 %v1388, 1.0
        %v1438 = vadd.f32 %v1390, 1.0
        %v1439 = vadd.f32 %v1392, 1.0
        %v1440 = vadd.f32 %v1394, 1.0
        %v1441 = vadd.f32 %v1396, 1.0
        %v1442 = vadd.f32 %v1398, 1.0
        %v1443 = vadd.f32 %v1400, 1.0
        %v1444 = vadd.f32 %v1402, 1.0
        %v1445 = vadd.f32 %v1404, 1.0
        %v1446 = vadd.f32 %v1406, 1.0
        %v1447 = vadd.f32 %v1408, 1.0
        %v1448 = vadd.f32 %v1410, 1.0
        %v1449 = vadd.f32 %v1412, 1.0
        %v1450 = vadd.f32 %v1414, 1.0
        %v1451 = vadd.f32 %v1416, 1.0
        %v1452 = vadd.f32 %v1418, 1.0
        %v1453 = vadd.f32 %v1420, 1.0
        %v1454 = vadd.f32 %v1422, 1.0
        %v1455 = vrcp.pop %v1423
        %v1456 = vmul.f32 %v1423, %v1455
        %v1457 = vsub.f32 1.0, %v1456
        %v1458 = vmul.f32 %v1455, %v1457
        %v1459 = vadd.f32 %v1455, %v1458
        %vm1460 = vweird.f32 %v1423
        %vm1461 = vweird.f32 %v1455
        %vm1462 = vmor %vm1460, %vm1461
        %v1463 = vsel %vm1462, %v1455, %v1459
        %v1464 = vand.u32 2147483647, %v1423
        %vm1465 = vcmp.eq.f32.partialorder %v1464, 8.507059e+37
        %v1466 = vand.u32 %v1423, 2147483648
        %v1467 = vor.u32 1.1754944e-38, %v1466
        %v1468 = vsel %vm1465, %v1467, %v1463
        %v1469 = vmul.f32 1.0, %v1468
        %v1470 = vrcp.pop %v1424
        %v1471 = vmul.f32 %v1424, %v1470
        %v1472 = vsub.f32 1.0, %v1471
        %v1473 = vmul.f32 %v1470, %v1472
        %v1474 = vadd.f32 %v1470, %v1473
        %vm1475 = vweird.f32 %v1424
        %vm1476 = vweird.f32 %v1470
        %vm1477 = vmor %vm1475, %vm1476
        %v1478 = vsel %vm1477, %v1470, %v1474
        %v1479 = vand.u32 2147483647, %v1424
        %vm1480 = vcmp.eq.f32.partialorder %v1479, 8.507059e+37
        %v1481 = vand.u32 %v1424, 2147483648
        %v1482 = vor.u32 1.1754944e-38, %v1481
        %v1483 = vsel %vm1480, %v1482, %v1478
        %v1484 = vmul.f32 1.0, %v1483
        %v1485 = vrcp.pop %v1425
        %v1486 = vmul.f32 %v1425, %v1485
        %v1487 = vsub.f32 1.0, %v1486
        %v1488 = vmul.f32 %v1485, %v1487
        %v1489 = vadd.f32 %v1485, %v1488
        %vm1490 = vweird.f32 %v1425
        %vm1491 = vweird.f32 %v1485
        %vm1492 = vmor %vm1490, %vm1491
        %v1493 = vsel %vm1492, %v1485, %v1489
        %v1494 = vand.u32 2147483647, %v1425
        %vm1495 = vcmp.eq.f32.partialorder %v1494, 8.507059e+37
        %v1496 = vand.u32 %v1425, 2147483648
        %v1497 = vor.u32 1.1754944e-38, %v1496
        %v1498 = vsel %vm1495, %v1497, %v1493
        %v1499 = vmul.f32 1.0, %v1498
        %v1500 = vrcp.pop %v1426
        %v1501 = vmul.f32 %v1426, %v1500
        %v1502 = vsub.f32 1.0, %v1501
        %v1503 = vmul.f32 %v1500, %v1502
        %v1504 = vadd.f32 %v1500, %v1503
        %vm1505 = vweird.f32 %v1426
        %vm1506 = vweird.f32 %v1500
        %vm1507 = vmor %vm1505, %vm1506
        %v1508 = vsel %vm1507, %v1500, %v1504
        %v1509 = vand.u32 2147483647, %v1426
        %vm1510 = vcmp.eq.f32.partialorder %v1509, 8.507059e+37
        %v1511 = vand.u32 %v1426, 2147483648
        %v1512 = vor.u32 1.1754944e-38, %v1511
        %v1513 = vsel %vm1510, %v1512, %v1508
        %v1514 = vmul.f32 1.0, %v1513
        %v1515 = vrcp.pop %v1427
        %v1516 = vmul.f32 %v1427, %v1515
        %v1517 = vsub.f32 1.0, %v1516
        %v1518 = vmul.f32 %v1515, %v1517
        %v1519 = vadd.f32 %v1515, %v1518
        %vm1520 = vweird.f32 %v1427
        %vm1521 = vweird.f32 %v1515
        %vm1522 = vmor %vm1520, %vm1521
        %v1523 = vsel %vm1522, %v1515, %v1519
        %v1524 = vand.u32 2147483647, %v1427
        %vm1525 = vcmp.eq.f32.partialorder %v1524, 8.507059e+37
        %v1526 = vand.u32 %v1427, 2147483648
        %v1527 = vor.u32 1.1754944e-38, %v1526
        %v1528 = vsel %vm1525, %v1527, %v1523
        %v1529 = vmul.f32 1.0, %v1528
        %v1530 = vrcp.pop %v1428
        %v1531 = vmul.f32 %v1428, %v1530
        %v1532 = vsub.f32 1.0, %v1531
        %v1533 = vmul.f32 %v1530, %v1532
        %v1534 = vadd.f32 %v1530, %v1533
        %vm1535 = vweird.f32 %v1428
        %vm1536 = vweird.f32 %v1530
        %vm1537 = vmor %vm1535, %vm1536
        %v1538 = vsel %vm1537, %v1530, %v1534
        %v1539 = vand.u32 2147483647, %v1428
        %vm1540 = vcmp.eq.f32.partialorder %v1539, 8.507059e+37
        %v1541 = vand.u32 %v1428, 2147483648
        %v1542 = vor.u32 1.1754944e-38, %v1541
        %v1543 = vsel %vm1540, %v1542, %v1538
        %v1544 = vmul.f32 1.0, %v1543
        %v1545 = vrcp.pop %v1429
        %v1546 = vmul.f32 %v1429, %v1545
        %v1547 = vsub.f32 1.0, %v1546
        %v1548 = vmul.f32 %v1545, %v1547
        %v1549 = vadd.f32 %v1545, %v1548
        %vm1550 = vweird.f32 %v1429
        %vm1551 = vweird.f32 %v1545
        %vm1552 = vmor %vm1550, %vm1551
        %v1553 = vsel %vm1552, %v1545, %v1549
        %v1554 = vand.u32 2147483647, %v1429
        %vm1555 = vcmp.eq.f32.partialorder %v1554, 8.507059e+37
        %v1556 = vand.u32 %v1429, 2147483648
        %v1557 = vor.u32 1.1754944e-38, %v1556
        %v1558 = vsel %vm1555, %v1557, %v1553
        %v1559 = vmul.f32 1.0, %v1558
        %v1560 = vrcp.pop %v1430
        %v1561 = vmul.f32 %v1430, %v1560
        %v1562 = vsub.f32 1.0, %v1561
        %v1563 = vmul.f32 %v1560, %v1562
        %v1564 = vadd.f32 %v1560, %v1563
        %vm1565 = vweird.f32 %v1430
        %vm1566 = vweird.f32 %v1560
        %vm1567 = vmor %vm1565, %vm1566
        %v1568 = vsel %vm1567, %v1560, %v1564
        %v1569 = vand.u32 2147483647, %v1430
        %vm1570 = vcmp.eq.f32.partialorder %v1569, 8.507059e+37
        %v1571 = vand.u32 %v1430, 2147483648
        %v1572 = vor.u32 1.1754944e-38, %v1571
        %v1573 = vsel %vm1570, %v1572, %v1568
        %v1574 = vmul.f32 1.0, %v1573
        %v1575 = vrcp.pop %v1431
        %v1576 = vmul.f32 %v1431, %v1575
        %v1577 = vsub.f32 1.0, %v1576
        %v1578 = vmul.f32 %v1575, %v1577
        %v1579 = vadd.f32 %v1575, %v1578
        %vm1580 = vweird.f32 %v1431
        %vm1581 = vweird.f32 %v1575
        %vm1582 = vmor %vm1580, %vm1581
        %v1583 = vsel %vm1582, %v1575, %v1579
        %v1584 = vand.u32 2147483647, %v1431
        %vm1585 = vcmp.eq.f32.partialorder %v1584, 8.507059e+37
        %v1586 = vand.u32 %v1431, 2147483648
        %v1587 = vor.u32 1.1754944e-38, %v1586
        %v1588 = vsel %vm1585, %v1587, %v1583
        %v1589 = vmul.f32 1.0, %v1588
        %v1590 = vrcp.pop %v1432
        %v1591 = vmul.f32 %v1432, %v1590
        %v1592 = vsub.f32 1.0, %v1591
        %v1593 = vmul.f32 %v1590, %v1592
        %v1594 = vadd.f32 %v1590, %v1593
        %vm1595 = vweird.f32 %v1432
        %vm1596 = vweird.f32 %v1590
        %vm1597 = vmor %vm1595, %vm1596
        %v1598 = vsel %vm1597, %v1590, %v1594
        %v1599 = vand.u32 2147483647, %v1432
        %vm1600 = vcmp.eq.f32.partialorder %v1599, 8.507059e+37
        %v1601 = vand.u32 %v1432, 2147483648
        %v1602 = vor.u32 1.1754944e-38, %v1601
        %v1603 = vsel %vm1600, %v1602, %v1598
        %v1604 = vmul.f32 1.0, %v1603
        %v1605 = vrcp.pop %v1433
        %v1606 = vmul.f32 %v1433, %v1605
        %v1607 = vsub.f32 1.0, %v1606
        %v1608 = vmul.f32 %v1605, %v1607
        %v1609 = vadd.f32 %v1605, %v1608
        %vm1610 = vweird.f32 %v1433
        %vm1611 = vweird.f32 %v1605
        %vm1612 = vmor %vm1610, %vm1611
        %v1613 = vsel %vm1612, %v1605, %v1609
        %v1614 = vand.u32 2147483647, %v1433
        %vm1615 = vcmp.eq.f32.partialorder %v1614, 8.507059e+37
        %v1616 = vand.u32 %v1433, 2147483648
        %v1617 = vor.u32 1.1754944e-38, %v1616
        %v1618 = vsel %vm1615, %v1617, %v1613
        %v1619 = vmul.f32 1.0, %v1618
        %v1620 = vrcp.pop %v1434
        %v1621 = vmul.f32 %v1434, %v1620
        %v1622 = vsub.f32 1.0, %v1621
        %v1623 = vmul.f32 %v1620, %v1622
        %v1624 = vadd.f32 %v1620, %v1623
        %vm1625 = vweird.f32 %v1434
        %vm1626 = vweird.f32 %v1620
        %vm1627 = vmor %vm1625, %vm1626
        %v1628 = vsel %vm1627, %v1620, %v1624
        %v1629 = vand.u32 2147483647, %v1434
        %vm1630 = vcmp.eq.f32.partialorder %v1629, 8.507059e+37
        %v1631 = vand.u32 %v1434, 2147483648
        %v1632 = vor.u32 1.1754944e-38, %v1631
        %v1633 = vsel %vm1630, %v1632, %v1628
        %v1634 = vmul.f32 1.0, %v1633
        %v1635 = vrcp.pop %v1435
        %v1636 = vmul.f32 %v1435, %v1635
        %v1637 = vsub.f32 1.0, %v1636
        %v1638 = vmul.f32 %v1635, %v1637
        %v1639 = vadd.f32 %v1635, %v1638
        %vm1640 = vweird.f32 %v1435
        %vm1641 = vweird.f32 %v1635
        %vm1642 = vmor %vm1640, %vm1641
        %v1643 = vsel %vm1642, %v1635, %v1639
        %v1644 = vand.u32 2147483647, %v1435
        %vm1645 = vcmp.eq.f32.partialorder %v1644, 8.507059e+37
        %v1646 = vand.u32 %v1435, 2147483648
        %v1647 = vor.u32 1.1754944e-38, %v1646
        %v1648 = vsel %vm1645, %v1647, %v1643
        %v1649 = vmul.f32 1.0, %v1648
        %v1650 = vrcp.pop %v1436
        %v1651 = vmul.f32 %v1436, %v1650
        %v1652 = vsub.f32 1.0, %v1651
        %v1653 = vmul.f32 %v1650, %v1652
        %v1654 = vadd.f32 %v1650, %v1653
        %vm1655 = vweird.f32 %v1436
        %vm1656 = vweird.f32 %v1650
        %vm1657 = vmor %vm1655, %vm1656
        %v1658 = vsel %vm1657, %v1650, %v1654
        %v1659 = vand.u32 2147483647, %v1436
        %vm1660 = vcmp.eq.f32.partialorder %v1659, 8.507059e+37
        %v1661 = vand.u32 %v1436, 2147483648
        %v1662 = vor.u32 1.1754944e-38, %v1661
        %v1663 = vsel %vm1660, %v1662, %v1658
        %v1664 = vmul.f32 1.0, %v1663
        %v1665 = vrcp.pop %v1437
        %v1666 = vmul.f32 %v1437, %v1665
        %v1667 = vsub.f32 1.0, %v1666
        %v1668 = vmul.f32 %v1665, %v1667
        %v1669 = vadd.f32 %v1665, %v1668
        %vm1670 = vweird.f32 %v1437
        %vm1671 = vweird.f32 %v1665
        %vm1672 = vmor %vm1670, %vm1671
        %v1673 = vsel %vm1672, %v1665, %v1669
        %v1674 = vand.u32 2147483647, %v1437
        %vm1675 = vcmp.eq.f32.partialorder %v1674, 8.507059e+37
        %v1676 = vand.u32 %v1437, 2147483648
        %v1677 = vor.u32 1.1754944e-38, %v1676
        %v1678 = vsel %vm1675, %v1677, %v1673
        %v1679 = vmul.f32 1.0, %v1678
        %v1680 = vrcp.pop %v1438
        %v1681 = vmul.f32 %v1438, %v1680
        %v1682 = vsub.f32 1.0, %v1681
        %v1683 = vmul.f32 %v1680, %v1682
        %v1684 = vadd.f32 %v1680, %v1683
        %vm1685 = vweird.f32 %v1438
        %vm1686 = vweird.f32 %v1680
        %vm1687 = vmor %vm1685, %vm1686
        %v1688 = vsel %vm1687, %v1680, %v1684
        %v1689 = vand.u32 2147483647, %v1438
        %vm1690 = vcmp.eq.f32.partialorder %v1689, 8.507059e+37
        %v1691 = vand.u32 %v1438, 2147483648
        %v1692 = vor.u32 1.1754944e-38, %v1691
        %v1693 = vsel %vm1690, %v1692, %v1688
        %v1694 = vmul.f32 1.0, %v1693
        %v1695 = vrcp.pop %v1439
        %v1696 = vmul.f32 %v1439, %v1695
        %v1697 = vsub.f32 1.0, %v1696
        %v1698 = vmul.f32 %v1695, %v1697
        %v1699 = vadd.f32 %v1695, %v1698
        %vm1700 = vweird.f32 %v1439
        %vm1701 = vweird.f32 %v1695
        %vm1702 = vmor %vm1700, %vm1701
        %v1703 = vsel %vm1702, %v1695, %v1699
        %v1704 = vand.u32 2147483647, %v1439
        %vm1705 = vcmp.eq.f32.partialorder %v1704, 8.507059e+37
        %v1706 = vand.u32 %v1439, 2147483648
        %v1707 = vor.u32 1.1754944e-38, %v1706
        %v1708 = vsel %vm1705, %v1707, %v1703
        %v1709 = vmul.f32 1.0, %v1708
        %v1710 = vrcp.pop %v1440
        %v1711 = vmul.f32 %v1440, %v1710
        %v1712 = vsub.f32 1.0, %v1711
        %v1713 = vmul.f32 %v1710, %v1712
        %v1714 = vadd.f32 %v1710, %v1713
        %vm1715 = vweird.f32 %v1440
        %vm1716 = vweird.f32 %v1710
        %vm1717 = vmor %vm1715, %vm1716
        %v1718 = vsel %vm1717, %v1710, %v1714
        %v1719 = vand.u32 2147483647, %v1440
        %vm1720 = vcmp.eq.f32.partialorder %v1719, 8.507059e+37
        %v1721 = vand.u32 %v1440, 2147483648
        %v1722 = vor.u32 1.1754944e-38, %v1721
        %v1723 = vsel %vm1720, %v1722, %v1718
        %v1724 = vmul.f32 1.0, %v1723
        %v1725 = vrcp.pop %v1441
        %v1726 = vmul.f32 %v1441, %v1725
        %v1727 = vsub.f32 1.0, %v1726
        %v1728 = vmul.f32 %v1725, %v1727
        %v1729 = vadd.f32 %v1725, %v1728
        %vm1730 = vweird.f32 %v1441
        %vm1731 = vweird.f32 %v1725
        %vm1732 = vmor %vm1730, %vm1731
        %v1733 = vsel %vm1732, %v1725, %v1729
        %v1734 = vand.u32 2147483647, %v1441
        %vm1735 = vcmp.eq.f32.partialorder %v1734, 8.507059e+37
        %v1736 = vand.u32 %v1441, 2147483648
        %v1737 = vor.u32 1.1754944e-38, %v1736
        %v1738 = vsel %vm1735, %v1737, %v1733
        %v1739 = vmul.f32 1.0, %v1738
        %v1740 = vrcp.pop %v1442
        %v1741 = vmul.f32 %v1442, %v1740
        %v1742 = vsub.f32 1.0, %v1741
        %v1743 = vmul.f32 %v1740, %v1742
        %v1744 = vadd.f32 %v1740, %v1743
        %vm1745 = vweird.f32 %v1442
        %vm1746 = vweird.f32 %v1740
        %vm1747 = vmor %vm1745, %vm1746
        %v1748 = vsel %vm1747, %v1740, %v1744
        %v1749 = vand.u32 2147483647, %v1442
        %vm1750 = vcmp.eq.f32.partialorder %v1749, 8.507059e+37
        %v1751 = vand.u32 %v1442, 2147483648
        %v1752 = vor.u32 1.1754944e-38, %v1751
        %v1753 = vsel %vm1750, %v1752, %v1748
        %v1754 = vmul.f32 1.0, %v1753
        %v1755 = vrcp.pop %v1443
        %v1756 = vmul.f32 %v1443, %v1755
        %v1757 = vsub.f32 1.0, %v1756
        %v1758 = vmul.f32 %v1755, %v1757
        %v1759 = vadd.f32 %v1755, %v1758
        %vm1760 = vweird.f32 %v1443
        %vm1761 = vweird.f32 %v1755
        %vm1762 = vmor %vm1760, %vm1761
        %v1763 = vsel %vm1762, %v1755, %v1759
        %v1764 = vand.u32 2147483647, %v1443
        %vm1765 = vcmp.eq.f32.partialorder %v1764, 8.507059e+37
        %v1766 = vand.u32 %v1443, 2147483648
        %v1767 = vor.u32 1.1754944e-38, %v1766
        %v1768 = vsel %vm1765, %v1767, %v1763
        %v1769 = vmul.f32 1.0, %v1768
        %v1770 = vrcp.pop %v1444
        %v1771 = vmul.f32 %v1444, %v1770
        %v1772 = vsub.f32 1.0, %v1771
        %v1773 = vmul.f32 %v1770, %v1772
        %v1774 = vadd.f32 %v1770, %v1773
        %vm1775 = vweird.f32 %v1444
        %vm1776 = vweird.f32 %v1770
        %vm1777 = vmor %vm1775, %vm1776
        %v1778 = vsel %vm1777, %v1770, %v1774
        %v1779 = vand.u32 2147483647, %v1444
        %vm1780 = vcmp.eq.f32.partialorder %v1779, 8.507059e+37
        %v1781 = vand.u32 %v1444, 2147483648
        %v1782 = vor.u32 1.1754944e-38, %v1781
        %v1783 = vsel %vm1780, %v1782, %v1778
        %v1784 = vmul.f32 1.0, %v1783
        %v1785 = vrcp.pop %v1445
        %v1786 = vmul.f32 %v1445, %v1785
        %v1787 = vsub.f32 1.0, %v1786
        %v1788 = vmul.f32 %v1785, %v1787
        %v1789 = vadd.f32 %v1785, %v1788
        %vm1790 = vweird.f32 %v1445
        %vm1791 = vweird.f32 %v1785
        %vm1792 = vmor %vm1790, %vm1791
        %v1793 = vsel %vm1792, %v1785, %v1789
        %v1794 = vand.u32 2147483647, %v1445
        %vm1795 = vcmp.eq.f32.partialorder %v1794, 8.507059e+37
        %v1796 = vand.u32 %v1445, 2147483648
        %v1797 = vor.u32 1.1754944e-38, %v1796
        %v1798 = vsel %vm1795, %v1797, %v1793
        %v1799 = vmul.f32 1.0, %v1798
        %v1800 = vrcp.pop %v1446
        %v1801 = vmul.f32 %v1446, %v1800
        %v1802 = vsub.f32 1.0, %v1801
        %v1803 = vmul.f32 %v1800, %v1802
        %v1804 = vadd.f32 %v1800, %v1803
        %vm1805 = vweird.f32 %v1446
        %vm1806 = vweird.f32 %v1800
        %vm1807 = vmor %vm1805, %vm1806
        %v1808 = vsel %vm1807, %v1800, %v1804
        %v1809 = vand.u32 2147483647, %v1446
        %vm1810 = vcmp.eq.f32.partialorder %v1809, 8.507059e+37
        %v1811 = vand.u32 %v1446, 2147483648
        %v1812 = vor.u32 1.1754944e-38, %v1811
        %v1813 = vsel %vm1810, %v1812, %v1808
        %v1814 = vmul.f32 1.0, %v1813
        %v1815 = vrcp.pop %v1447
        %v1816 = vmul.f32 %v1447, %v1815
        %v1817 = vsub.f32 1.0, %v1816
        %v1818 = vmul.f32 %v1815, %v1817
        %v1819 = vadd.f32 %v1815, %v1818
        %vm1820 = vweird.f32 %v1447
        %vm1821 = vweird.f32 %v1815
        %vm1822 = vmor %vm1820, %vm1821
        %v1823 = vsel %vm1822, %v1815, %v1819
        %v1824 = vand.u32 2147483647, %v1447
        %vm1825 = vcmp.eq.f32.partialorder %v1824, 8.507059e+37
        %v1826 = vand.u32 %v1447, 2147483648
        %v1827 = vor.u32 1.1754944e-38, %v1826
        %v1828 = vsel %vm1825, %v1827, %v1823
        %v1829 = vmul.f32 1.0, %v1828
        %v1830 = vrcp.pop %v1448
        %v1831 = vmul.f32 %v1448, %v1830
        %v1832 = vsub.f32 1.0, %v1831
        %v1833 = vmul.f32 %v1830, %v1832
        %v1834 = vadd.f32 %v1830, %v1833
        %vm1835 = vweird.f32 %v1448
        %vm1836 = vweird.f32 %v1830
        %vm1837 = vmor %vm1835, %vm1836
        %v1838 = vsel %vm1837, %v1830, %v1834
        %v1839 = vand.u32 2147483647, %v1448
        %vm1840 = vcmp.eq.f32.partialorder %v1839, 8.507059e+37
        %v1841 = vand.u32 %v1448, 2147483648
        %v1842 = vor.u32 1.1754944e-38, %v1841
        %v1843 = vsel %vm1840, %v1842, %v1838
        %v1844 = vmul.f32 1.0, %v1843
        %v1845 = vrcp.pop %v1449
        %v1846 = vmul.f32 %v1449, %v1845
        %v1847 = vsub.f32 1.0, %v1846
        %v1848 = vmul.f32 %v1845, %v1847
        %v1849 = vadd.f32 %v1845, %v1848
        %vm1850 = vweird.f32 %v1449
        %vm1851 = vweird.f32 %v1845
        %vm1852 = vmor %vm1850, %vm1851
        %v1853 = vsel %vm1852, %v1845, %v1849
        %v1854 = vand.u32 2147483647, %v1449
        %vm1855 = vcmp.eq.f32.partialorder %v1854, 8.507059e+37
        %v1856 = vand.u32 %v1449, 2147483648
        %v1857 = vor.u32 1.1754944e-38, %v1856
        %v1858 = vsel %vm1855, %v1857, %v1853
        %v1859 = vmul.f32 1.0, %v1858
        %v1860 = vrcp.pop %v1450
        %v1861 = vmul.f32 %v1450, %v1860
        %v1862 = vsub.f32 1.0, %v1861
        %v1863 = vmul.f32 %v1860, %v1862
        %v1864 = vadd.f32 %v1860, %v1863
        %vm1865 = vweird.f32 %v1450
        %vm1866 = vweird.f32 %v1860
        %vm1867 = vmor %vm1865, %vm1866
        %v1868 = vsel %vm1867, %v1860, %v1864
        %v1869 = vand.u32 2147483647, %v1450
        %vm1870 = vcmp.eq.f32.partialorder %v1869, 8.507059e+37
        %v1871 = vand.u32 %v1450, 2147483648
        %v1872 = vor.u32 1.1754944e-38, %v1871
        %v1873 = vsel %vm1870, %v1872, %v1868
        %v1874 = vmul.f32 1.0, %v1873
        %v1875 = vrcp.pop %v1451
        %v1876 = vmul.f32 %v1451, %v1875
        %v1877 = vsub.f32 1.0, %v1876
        %v1878 = vmul.f32 %v1875, %v1877
        %v1879 = vadd.f32 %v1875, %v1878
        %vm1880 = vweird.f32 %v1451
        %vm1881 = vweird.f32 %v1875
        %vm1882 = vmor %vm1880, %vm1881
        %v1883 = vsel %vm1882, %v1875, %v1879
        %v1884 = vand.u32 2147483647, %v1451
        %vm1885 = vcmp.eq.f32.partialorder %v1884, 8.507059e+37
        %v1886 = vand.u32 %v1451, 2147483648
        %v1887 = vor.u32 1.1754944e-38, %v1886
        %v1888 = vsel %vm1885, %v1887, %v1883
        %v1889 = vmul.f32 1.0, %v1888
        %v1890 = vrcp.pop %v1452
        %v1891 = vmul.f32 %v1452, %v1890
        %v1892 = vsub.f32 1.0, %v1891
        %v1893 = vmul.f32 %v1890, %v1892
        %v1894 = vadd.f32 %v1890, %v1893
        %vm1895 = vweird.f32 %v1452
        %vm1896 = vweird.f32 %v1890
        %vm1897 = vmor %vm1895, %vm1896
        %v1898 = vsel %vm1897, %v1890, %v1894
        %v1899 = vand.u32 2147483647, %v1452
        %vm1900 = vcmp.eq.f32.partialorder %v1899, 8.507059e+37
        %v1901 = vand.u32 %v1452, 2147483648
        %v1902 = vor.u32 1.1754944e-38, %v1901
        %v1903 = vsel %vm1900, %v1902, %v1898
        %v1904 = vmul.f32 1.0, %v1903
        %v1905 = vrcp.pop %v1453
        %v1906 = vmul.f32 %v1453, %v1905
        %v1907 = vsub.f32 1.0, %v1906
        %v1908 = vmul.f32 %v1905, %v1907
        %v1909 = vadd.f32 %v1905, %v1908
        %vm1910 = vweird.f32 %v1453
        %vm1911 = vweird.f32 %v1905
        %vm1912 = vmor %vm1910, %vm1911
        %v1913 = vsel %vm1912, %v1905, %v1909
        %v1914 = vand.u32 2147483647, %v1453
        %vm1915 = vcmp.eq.f32.partialorder %v1914, 8.507059e+37
        %v1916 = vand.u32 %v1453, 2147483648
        %v1917 = vor.u32 1.1754944e-38, %v1916
        %v1918 = vsel %vm1915, %v1917, %v1913
        %v1919 = vmul.f32 1.0, %v1918
        %v1920 = vrcp.pop %v1454
        %v1921 = vmul.f32 %v1454, %v1920
        %v1922 = vsub.f32 1.0, %v1921
        %v1923 = vmul.f32 %v1920, %v1922
        %v1924 = vadd.f32 %v1920, %v1923
        %vm1925 = vweird.f32 %v1454
        %vm1926 = vweird.f32 %v1920
        %vm1927 = vmor %vm1925, %vm1926
        %v1928 = vsel %vm1927, %v1920, %v1924
        %v1929 = vand.u32 2147483647, %v1454
        %vm1930 = vcmp.eq.f32.partialorder %v1929, 8.507059e+37
        %v1931 = vand.u32 %v1454, 2147483648
        %v1932 = vor.u32 1.1754944e-38, %v1931
        %v1933 = vsel %vm1930, %v1932, %v1928
        %v1934 = vmul.f32 1.0, %v1933
        %v1935 = vsub.f32 1.0, %v1469
        %v1936 = vsub.f32 1.0, %v1484
        %v1937 = vsub.f32 1.0, %v1499
        %v1938 = vsub.f32 1.0, %v1514
        %v1939 = vsub.f32 1.0, %v1529
        %v1940 = vsub.f32 1.0, %v1544
        %v1941 = vsub.f32 1.0, %v1559
        %v1942 = vsub.f32 1.0, %v1574
        %v1943 = vsub.f32 1.0, %v1589
        %v1944 = vsub.f32 1.0, %v1604
        %v1945 = vsub.f32 1.0, %v1619
        %v1946 = vsub.f32 1.0, %v1634
        %v1947 = vsub.f32 1.0, %v1649
        %v1948 = vsub.f32 1.0, %v1664
        %v1949 = vsub.f32 1.0, %v1679
        %v1950 = vsub.f32 1.0, %v1694
        %v1951 = vsub.f32 1.0, %v1709
        %v1952 = vsub.f32 1.0, %v1724
        %v1953 = vsub.f32 1.0, %v1739
        %v1954 = vsub.f32 1.0, %v1754
        %v1955 = vsub.f32 1.0, %v1769
        %v1956 = vsub.f32 1.0, %v1784
        %v1957 = vsub.f32 1.0, %v1799
        %v1958 = vsub.f32 1.0, %v1814
        %v1959 = vsub.f32 1.0, %v1829
        %v1960 = vsub.f32 1.0, %v1844
        %v1961 = vsub.f32 1.0, %v1859
        %v1962 = vsub.f32 1.0, %v1874
        %v1963 = vsub.f32 1.0, %v1889
        %v1964 = vsub.f32 1.0, %v1904
        %v1965 = vsub.f32 1.0, %v1919
        %v1966 = vsub.f32 1.0, %v1934
        %vm1967 = vcmask 7168
        %1968 = vst.msk [vmem:[%s321] sm:$0xff] %vm1967, %v1935
        %1969 = vst.msk [vmem:[%s321 + $0x8] sm:$0xff] %vm1967, %v1936
        %1970 = vst.msk [vmem:[%s321 + $0x10] sm:$0xff] %vm1967, %v1937
        %1971 = vst.msk [vmem:[%s321 + $0x18] sm:$0xff] %vm1967, %v1938
        %1972 = vst.msk [vmem:[%s321 + $0x20] sm:$0xff] %vm1967, %v1939
        %1973 = vst.msk [vmem:[%s321 + $0x28] sm:$0xff] %vm1967, %v1940
        %1974 = vst.msk [vmem:[%s321 + $0x30] sm:$0xff] %vm1967, %v1941
        %1975 = vst.msk [vmem:[%s321 + $0x38] sm:$0xff] %vm1967, %v1942
        %1976 = vst.msk [vmem:[%s321 + $0x40] sm:$0xff] %vm1967, %v1943
        %1977 = vst.msk [vmem:[%s321 + $0x48] sm:$0xff] %vm1967, %v1944
        %1978 = vst.msk [vmem:[%s321 + $0x50] sm:$0xff] %vm1967, %v1945
        %1979 = vst.msk [vmem:[%s321 + $0x58] sm:$0xff] %vm1967, %v1946
        %1980 = vst.msk [vmem:[%s321 + $0x60] sm:$0xff] %vm1967, %v1947
        %1981 = vst.msk [vmem:[%s321 + $0x68] sm:$0xff] %vm1967, %v1948
        %1982 = vst.msk [vmem:[%s321 + $0x70] sm:$0xff] %vm1967, %v1949
        %1983 = vst.msk [vmem:[%s321 + $0x78] sm:$0xff] %vm1967, %v1950
        %1984 = vst.msk [vmem:[%s321 + $0x80] sm:$0xff] %vm1967, %v1951
        %1985 = vst.msk [vmem:[%s321 + $0x88] sm:$0xff] %vm1967, %v1952
        %1986 = vst.msk [vmem:[%s321 + $0x90] sm:$0xff] %vm1967, %v1953
        %1987 = vst.msk [vmem:[%s321 + $0x98] sm:$0xff] %vm1967, %v1954
        %1988 = vst.msk [vmem:[%s321 + $0xa0] sm:$0xff] %vm1967, %v1955
        %1989 = vst.msk [vmem:[%s321 + $0xa8] sm:$0xff] %vm1967, %v1956
        %1990 = vst.msk [vmem:[%s321 + $0xb0] sm:$0xff] %vm1967, %v1957
        %1991 = vst.msk [vmem:[%s321 + $0xb8] sm:$0xff] %vm1967, %v1958
        %1992 = vst.msk [vmem:[%s321 + $0xc0] sm:$0xff] %vm1967, %v1959
        %1993 = vst.msk [vmem:[%s321 + $0xc8] sm:$0xff] %vm1967, %v1960
        %1994 = vst.msk [vmem:[%s321 + $0xd0] sm:$0xff] %vm1967, %v1961
        %1995 = vst.msk [vmem:[%s321 + $0xd8] sm:$0xff] %vm1967, %v1962
        %1996 = vst.msk [vmem:[%s321 + $0xe0] sm:$0xff] %vm1967, %v1963
        %1997 = vst.msk [vmem:[%s321 + $0xe8] sm:$0xff] %vm1967, %v1964
        %1998 = vst.msk [vmem:[%s321 + $0xf0] sm:$0xff] %vm1967, %v1965
        %1999 = vst.msk [vmem:[%s321 + $0xf8] sm:$0xff] %vm1967, %v1966
        %v2000 = vld [vmem:[%s315] sm:$0xff]
        %v2001 = vld [vmem:[%s315 + $0x8] sm:$0xff]
        %v2002 = vld [vmem:[%s315 + $0x10] sm:$0xff]
        %v2003 = vld [vmem:[%s315 + $0x18] sm:$0xff]
        %v2004 = vld [vmem:[%s315 + $0x20] sm:$0xff]
        %v2005 = vld [vmem:[%s315 + $0x28] sm:$0xff]
        %v2006 = vld [vmem:[%s315 + $0x30] sm:$0xff]
        %v2007 = vld [vmem:[%s315 + $0x38] sm:$0xff]
        %v2008 = vld [vmem:[%s315 + $0x40] sm:$0xff]
        %v2009 = vld [vmem:[%s315 + $0x48] sm:$0xff]
        %v2010 = vld [vmem:[%s315 + $0x50] sm:$0xff]
        %v2011 = vld [vmem:[%s315 + $0x58] sm:$0xff]
        %v2012 = vld [vmem:[%s315 + $0x60] sm:$0xff]
        %v2013 = vld [vmem:[%s315 + $0x68] sm:$0xff]
        %v2014 = vld [vmem:[%s315 + $0x70] sm:$0xff]
        %v2015 = vld [vmem:[%s315 + $0x78] sm:$0xff]
        %v2016 = vld [vmem:[%s315 + $0x80] sm:$0xff]
        %v2017 = vld [vmem:[%s315 + $0x88] sm:$0xff]
        %v2018 = vld [vmem:[%s315 + $0x90] sm:$0xff]
        %v2019 = vld [vmem:[%s315 + $0x98] sm:$0xff]
        %v2020 = vld [vmem:[%s315 + $0xa0] sm:$0xff]
        %v2021 = vld [vmem:[%s315 + $0xa8] sm:$0xff]
        %v2022 = vld [vmem:[%s315 + $0xb0] sm:$0xff]
        %v2023 = vld [vmem:[%s315 + $0xb8] sm:$0xff]
        %v2024 = vld [vmem:[%s315 + $0xc0] sm:$0xff]
        %v2025 = vld [vmem:[%s315 + $0xc8] sm:$0xff]
        %v2026 = vld [vmem:[%s315 + $0xd0] sm:$0xff]
        %v2027 = vld [vmem:[%s315 + $0xd8] sm:$0xff]
        %v2028 = vld [vmem:[%s315 + $0xe0] sm:$0xff]
        %v2029 = vld [vmem:[%s315 + $0xe8] sm:$0xff]
        %v2030 = vld [vmem:[%s315 + $0xf0] sm:$0xff]
        %v2031 = vld [vmem:[%s315 + $0xf8] sm:$0xff]
        %v2032 = vld [vmem:[%s315 + $0x100] sm:$0xff]
        %v2033 = vld [vmem:[%s315 + $0x108] sm:$0xff]
        %v2034 = vld [vmem:[%s315 + $0x110] sm:$0xff]
        %v2035 = vld [vmem:[%s315 + $0x118] sm:$0xff]
        %v2036 = vld [vmem:[%s315 + $0x120] sm:$0xff]
        %v2037 = vld [vmem:[%s315 + $0x128] sm:$0xff]
        %v2038 = vld [vmem:[%s315 + $0x130] sm:$0xff]
        %v2039 = vld [vmem:[%s315 + $0x138] sm:$0xff]
        %v2040 = vld [vmem:[%s315 + $0x140] sm:$0xff]
        %v2041 = vld [vmem:[%s315 + $0x148] sm:$0xff]
        %v2042 = vld [vmem:[%s315 + $0x150] sm:$0xff]
        %v2043 = vld [vmem:[%s315 + $0x158] sm:$0xff]
        %v2044 = vld [vmem:[%s315 + $0x160] sm:$0xff]
        %v2045 = vld [vmem:[%s315 + $0x168] sm:$0xff]
        %v2046 = vld [vmem:[%s315 + $0x170] sm:$0xff]
        %v2047 = vld [vmem:[%s315 + $0x178] sm:$0xff]
        %v2048 = vld [vmem:[%s315 + $0x180] sm:$0xff]
        %v2049 = vld [vmem:[%s315 + $0x188] sm:$0xff]
        %v2050 = vld [vmem:[%s315 + $0x190] sm:$0xff]
        %v2051 = vld [vmem:[%s315 + $0x198] sm:$0xff]
        %v2052 = vld [vmem:[%s315 + $0x1a0] sm:$0xff]
        %v2053 = vld [vmem:[%s315 + $0x1a8] sm:$0xff]
        %v2054 = vld [vmem:[%s315 + $0x1b0] sm:$0xff]
        %v2055 = vld [vmem:[%s315 + $0x1b8] sm:$0xff]
        %v2056 = vld [vmem:[%s315 + $0x1c0] sm:$0xff]
        %v2057 = vld [vmem:[%s315 + $0x1c8] sm:$0xff]
        %v2058 = vld [vmem:[%s315 + $0x1d0] sm:$0xff]
        %v2059 = vld [vmem:[%s315 + $0x1d8] sm:$0xff]
        %v2060 = vld [vmem:[%s315 + $0x1e0] sm:$0xff]
        %v2061 = vld [vmem:[%s315 + $0x1e8] sm:$0xff]
        %v2062 = vld [vmem:[%s315 + $0x1f0] sm:$0xff]
        %v2063 = vld [vmem:[%s315 + $0x1f8] sm:$0xff]
        %2065 = vset.pattern.permute.xlu0 0
        %2066 = vperm.xlu0 %2065, %v1935
        %v2067 = vpop.permute.xlu0 %2066
        %2070 = vset.pattern.permute.xlu0 0
        %2071 = vperm.xlu0 %2070, %v1936
        %v2072 = vpop.permute.xlu0 %2071
        %2075 = vset.pattern.permute.xlu0 0
        %2076 = vperm.xlu0 %2075, %v1937
        %v2077 = vpop.permute.xlu0 %2076
        %2080 = vset.pattern.permute.xlu0 0
        %2081 = vperm.xlu0 %2080, %v1938
        %v2082 = vpop.permute.xlu0 %2081
        %2085 = vset.pattern.permute.xlu0 0
        %2086 = vperm.xlu0 %2085, %v1939
        %v2087 = vpop.permute.xlu0 %2086
        %2090 = vset.pattern.permute.xlu0 0
        %2091 = vperm.xlu0 %2090, %v1940
        %v2092 = vpop.permute.xlu0 %2091
        %2095 = vset.pattern.permute.xlu0 0
        %2096 = vperm.xlu0 %2095, %v1941
        %v2097 = vpop.permute.xlu0 %2096
        %2100 = vset.pattern.permute.xlu0 0
        %2101 = vperm.xlu0 %2100, %v1942
        %v2102 = vpop.permute.xlu0 %2101
        %2105 = vset.pattern.permute.xlu0 0
        %2106 = vperm.xlu0 %2105, %v1943
        %v2107 = vpop.permute.xlu0 %2106
        %2110 = vset.pattern.permute.xlu0 0
        %2111 = vperm.xlu0 %2110, %v1944
        %v2112 = vpop.permute.xlu0 %2111
        %2115 = vset.pattern.permute.xlu0 0
        %2116 = vperm.xlu0 %2115, %v1945
        %v2117 = vpop.permute.xlu0 %2116
        %2120 = vset.pattern.permute.xlu0 0
        %2121 = vperm.xlu0 %2120, %v1946
        %v2122 = vpop.permute.xlu0 %2121
        %2125 = vset.pattern.permute.xlu0 0
        %2126 = vperm.xlu0 %2125, %v1947
        %v2127 = vpop.permute.xlu0 %2126
        %2130 = vset.pattern.permute.xlu0 0
        %2131 = vperm.xlu0 %2130, %v1948
        %v2132 = vpop.permute.xlu0 %2131
        %2135 = vset.pattern.permute.xlu0 0
        %2136 = vperm.xlu0 %2135, %v1949
        %v2137 = vpop.permute.xlu0 %2136
        %2140 = vset.pattern.permute.xlu0 0
        %2141 = vperm.xlu0 %2140, %v1950
        %v2142 = vpop.permute.xlu0 %2141
        %2145 = vset.pattern.permute.xlu0 0
        %2146 = vperm.xlu0 %2145, %v1951
        %v2147 = vpop.permute.xlu0 %2146
        %2150 = vset.pattern.permute.xlu0 0
        %2151 = vperm.xlu0 %2150, %v1952
        %v2152 = vpop.permute.xlu0 %2151
        %2155 = vset.pattern.permute.xlu0 0
        %2156 = vperm.xlu0 %2155, %v1953
        %v2157 = vpop.permute.xlu0 %2156
        %2160 = vset.pattern.permute.xlu0 0
        %2161 = vperm.xlu0 %2160, %v1954
        %v2162 = vpop.permute.xlu0 %2161
        %2165 = vset.pattern.permute.xlu0 0
        %2166 = vperm.xlu0 %2165, %v1955
        %v2167 = vpop.permute.xlu0 %2166
        %2170 = vset.pattern.permute.xlu0 0
        %2171 = vperm.xlu0 %2170, %v1956
        %v2172 = vpop.permute.xlu0 %2171
        %2175 = vset.pattern.permute.xlu0 0
        %2176 = vperm.xlu0 %2175, %v1957
        %v2177 = vpop.permute.xlu0 %2176
        %2180 = vset.pattern.permute.xlu0 0
        %2181 = vperm.xlu0 %2180, %v1958
        %v2182 = vpop.permute.xlu0 %2181
        %2185 = vset.pattern.permute.xlu0 0
        %2186 = vperm.xlu0 %2185, %v1959
        %v2187 = vpop.permute.xlu0 %2186
        %2190 = vset.pattern.permute.xlu0 0
        %2191 = vperm.xlu0 %2190, %v1960
        %v2192 = vpop.permute.xlu0 %2191
        %2195 = vset.pattern.permute.xlu0 0
        %2196 = vperm.xlu0 %2195, %v1961
        %v2197 = vpop.permute.xlu0 %2196
        %2200 = vset.pattern.permute.xlu0 0
        %2201 = vperm.xlu0 %2200, %v1962
        %v2202 = vpop.permute.xlu0 %2201
        %2205 = vset.pattern.permute.xlu0 0
        %2206 = vperm.xlu0 %2205, %v1963
        %v2207 = vpop.permute.xlu0 %2206
        %2210 = vset.pattern.permute.xlu0 0
        %2211 = vperm.xlu0 %2210, %v1964
        %v2212 = vpop.permute.xlu0 %2211
        %2215 = vset.pattern.permute.xlu0 0
        %2216 = vperm.xlu0 %2215, %v1965
        %v2217 = vpop.permute.xlu0 %2216
        %2220 = vset.pattern.permute.xlu0 0
        %2221 = vperm.xlu0 %2220, %v1966
        %v2222 = vpop.permute.xlu0 %2221
        %v2224 = vmul.f32 %v2000, %v2067
        %v2225 = vmul.f32 %v2001, %v2067
        %v2226 = vmul.f32 %v2002, %v2072
        %v2227 = vmul.f32 %v2003, %v2072
        %v2228 = vmul.f32 %v2004, %v2077
        %v2229 = vmul.f32 %v2005, %v2077
        %v2230 = vmul.f32 %v2006, %v2082
        %v2231 = vmul.f32 %v2007, %v2082
        %v2232 = vmul.f32 %v2008, %v2087
        %v2233 = vmul.f32 %v2009, %v2087
        %v2234 = vmul.f32 %v2010, %v2092
        %v2235 = vmul.f32 %v2011, %v2092
        %v2236 = vmul.f32 %v2012, %v2097
        %v2237 = vmul.f32 %v2013, %v2097
        %v2238 = vmul.f32 %v2014, %v2102
        %v2239 = vmul.f32 %v2015, %v2102
        %v2240 = vmul.f32 %v2016, %v2107
        %v2241 = vmul.f32 %v2017, %v2107
        %v2242 = vmul.f32 %v2018, %v2112
        %v2243 = vmul.f32 %v2019, %v2112
        %v2244 = vmul.f32 %v2020, %v2117
        %v2245 = vmul.f32 %v2021, %v2117
        %v2246 = vmul.f32 %v2022, %v2122
        %v2247 = vmul.f32 %v2023, %v2122
        %v2248 = vmul.f32 %v2024, %v2127
        %v2249 = vmul.f32 %v2025, %v2127
        %v2250 = vmul.f32 %v2026, %v2132
        %v2251 = vmul.f32 %v2027, %v2132
        %v2252 = vmul.f32 %v2028, %v2137
        %v2253 = vmul.f32 %v2029, %v2137
        %v2254 = vmul.f32 %v2030, %v2142
        %v2255 = vmul.f32 %v2031, %v2142
        %v2256 = vmul.f32 %v2032, %v2147
        %v2257 = vmul.f32 %v2033, %v2147
        %v2258 = vmul.f32 %v2034, %v2152
        %v2259 = vmul.f32 %v2035, %v2152
        %v2260 = vmul.f32 %v2036, %v2157
        %v2261 = vmul.f32 %v2037, %v2157
        %v2262 = vmul.f32 %v2038, %v2162
        %v2263 = vmul.f32 %v2039, %v2162
        %v2264 = vmul.f32 %v2040, %v2167
        %v2265 = vmul.f32 %v2041, %v2167
        %v2266 = vmul.f32 %v2042, %v2172
        %v2267 = vmul.f32 %v2043, %v2172
        %v2268 = vmul.f32 %v2044, %v2177
        %v2269 = vmul.f32 %v2045, %v2177
        %v2270 = vmul.f32 %v2046, %v2182
        %v2271 = vmul.f32 %v2047, %v2182
        %v2272 = vmul.f32 %v2048, %v2187
        %v2273 = vmul.f32 %v2049, %v2187
        %v2274 = vmul.f32 %v2050, %v2192
        %v2275 = vmul.f32 %v2051, %v2192
        %v2276 = vmul.f32 %v2052, %v2197
        %v2277 = vmul.f32 %v2053, %v2197
        %v2278 = vmul.f32 %v2054, %v2202
        %v2279 = vmul.f32 %v2055, %v2202
        %v2280 = vmul.f32 %v2056, %v2207
        %v2281 = vmul.f32 %v2057, %v2207
        %v2282 = vmul.f32 %v2058, %v2212
        %v2283 = vmul.f32 %v2059, %v2212
        %v2284 = vmul.f32 %v2060, %v2217
        %v2285 = vmul.f32 %v2061, %v2217
        %v2286 = vmul.f32 %v2062, %v2222
        %v2287 = vmul.f32 %v2063, %v2222
        %2288 = vst [vmem:[%s302] sm:$0xff] %v2224
        %2289 = vst [vmem:[%s302 + $0x8] sm:$0xff] %v2225
        %2290 = vst [vmem:[%s302 + $0x10] sm:$0xff] %v2226
        %2291 = vst [vmem:[%s302 + $0x18] sm:$0xff] %v2227
        %2292 = vst [vmem:[%s302 + $0x20] sm:$0xff] %v2228
        %2293 = vst [vmem:[%s302 + $0x28] sm:$0xff] %v2229
        %2294 = vst [vmem:[%s302 + $0x30] sm:$0xff] %v2230
        %2295 = vst [vmem:[%s302 + $0x38] sm:$0xff] %v2231
        %2296 = vst [vmem:[%s302 + $0x40] sm:$0xff] %v2232
        %2297 = vst [vmem:[%s302 + $0x48] sm:$0xff] %v2233
        %2298 = vst [vmem:[%s302 + $0x50] sm:$0xff] %v2234
        %2299 = vst [vmem:[%s302 + $0x58] sm:$0xff] %v2235
        %2300 = vst [vmem:[%s302 + $0x60] sm:$0xff] %v2236
        %2301 = vst [vmem:[%s302 + $0x68] sm:$0xff] %v2237
        %2302 = vst [vmem:[%s302 + $0x70] sm:$0xff] %v2238
        %2303 = vst [vmem:[%s302 + $0x78] sm:$0xff] %v2239
        %2304 = vst [vmem:[%s302 + $0x80] sm:$0xff] %v2240
        %2305 = vst [vmem:[%s302 + $0x88] sm:$0xff] %v2241
        %2306 = vst [vmem:[%s302 + $0x90] sm:$0xff] %v2242
        %2307 = vst [vmem:[%s302 + $0x98] sm:$0xff] %v2243
        %2308 = vst [vmem:[%s302 + $0xa0] sm:$0xff] %v2244
        %2309 = vst [vmem:[%s302 + $0xa8] sm:$0xff] %v2245
        %2310 = vst [vmem:[%s302 + $0xb0] sm:$0xff] %v2246
        %2311 = vst [vmem:[%s302 + $0xb8] sm:$0xff] %v2247
        %2312 = vst [vmem:[%s302 + $0xc0] sm:$0xff] %v2248
        %2313 = vst [vmem:[%s302 + $0xc8] sm:$0xff] %v2249
        %2314 = vst [vmem:[%s302 + $0xd0] sm:$0xff] %v2250
        %2315 = vst [vmem:[%s302 + $0xd8] sm:$0xff] %v2251
        %2316 = vst [vmem:[%s302 + $0xe0] sm:$0xff] %v2252
        %2317 = vst [vmem:[%s302 + $0xe8] sm:$0xff] %v2253
        %2318 = vst [vmem:[%s302 + $0xf0] sm:$0xff] %v2254
        %2319 = vst [vmem:[%s302 + $0xf8] sm:$0xff] %v2255
        %2320 = vst [vmem:[%s302 + $0x100] sm:$0xff] %v2256
        %2321 = vst [vmem:[%s302 + $0x108] sm:$0xff] %v2257
        %2322 = vst [vmem:[%s302 + $0x110] sm:$0xff] %v2258
        %2323 = vst [vmem:[%s302 + $0x118] sm:$0xff] %v2259
        %2324 = vst [vmem:[%s302 + $0x120] sm:$0xff] %v2260
        %2325 = vst [vmem:[%s302 + $0x128] sm:$0xff] %v2261
        %2326 = vst [vmem:[%s302 + $0x130] sm:$0xff] %v2262
        %2327 = vst [vmem:[%s302 + $0x138] sm:$0xff] %v2263
        %2328 = vst [vmem:[%s302 + $0x140] sm:$0xff] %v2264
        %2329 = vst [vmem:[%s302 + $0x148] sm:$0xff] %v2265
        %2330 = vst [vmem:[%s302 + $0x150] sm:$0xff] %v2266
        %2331 = vst [vmem:[%s302 + $0x158] sm:$0xff] %v2267
        %2332 = vst [vmem:[%s302 + $0x160] sm:$0xff] %v2268
        %2333 = vst [vmem:[%s302 + $0x168] sm:$0xff] %v2269
        %2334 = vst [vmem:[%s302 + $0x170] sm:$0xff] %v2270
        %2335 = vst [vmem:[%s302 + $0x178] sm:$0xff] %v2271
        %2336 = vst [vmem:[%s302 + $0x180] sm:$0xff] %v2272
        %2337 = vst [vmem:[%s302 + $0x188] sm:$0xff] %v2273
        %2338 = vst [vmem:[%s302 + $0x190] sm:$0xff] %v2274
        %2339 = vst [vmem:[%s302 + $0x198] sm:$0xff] %v2275
        %2340 = vst [vmem:[%s302 + $0x1a0] sm:$0xff] %v2276
        %2341 = vst [vmem:[%s302 + $0x1a8] sm:$0xff] %v2277
        %2342 = vst [vmem:[%s302 + $0x1b0] sm:$0xff] %v2278
        %2343 = vst [vmem:[%s302 + $0x1b8] sm:$0xff] %v2279
        %2344 = vst [vmem:[%s302 + $0x1c0] sm:$0xff] %v2280
        %2345 = vst [vmem:[%s302 + $0x1c8] sm:$0xff] %v2281
        %2346 = vst [vmem:[%s302 + $0x1d0] sm:$0xff] %v2282
        %2347 = vst [vmem:[%s302 + $0x1d8] sm:$0xff] %v2283
        %2348 = vst [vmem:[%s302 + $0x1e0] sm:$0xff] %v2284
        %2349 = vst [vmem:[%s302 + $0x1e8] sm:$0xff] %v2285
        %2350 = vst [vmem:[%s302 + $0x1f0] sm:$0xff] %v2286
        %2351 = vst [vmem:[%s302 + $0x1f8] sm:$0xff] %v2287
        %s2352 = smul.u32 32, %s24
        %p2353 = scmp.lt.s32.totalorder %s2352, 63
        %s2354 = scalar_select %p2353, %s2352, 63
        %s2355 = smul.addr %s2354, 8
        %s2356 = scalar_lea.vmem %s6, %s2355
        %s2357 = sand.u32 %s194, 1
        %s2358 = scalar_lea.sflag [#allocation4], %s2357
        %s2359 = sand.u32 %s194, 1
        %s2360 = smul.addr %s2359, 512
        %s2361 = scalar_lea.vmem [#allocation3], %s2360
        // Predicated region
        $region45: #{mmca_forward.3} parent=43 // pred_check
          %p2362 = pneg %p178
        $region46: #{mmca_forward.3} parent=43 // pred_check_branch
          %2364 = sbr.rel (%p2362) target = $region48
        $region47: #{mmca_forward.3} parent=43 // pred_region
          %s2365 = smul.u32 32, %s24
        $region48: #{mmca_forward.3} parent=43 // pred_fallthru
          _
        // Predicated region
        $region49: #{mmca_forward.3} parent=43 // pred_check
          %p2366 = pneg %p204
        $region50: #{mmca_forward.3} parent=43 // pred_check_branch
          %2368 = sbr.rel (%p2366) target = $region52
        $region51: #{mmca_forward.3} parent=43 // pred_region
          %s2369 = smul.u32 32, %s24
          %2371 = vsyncadd %s2358, 0
          %s2372 = smul.addr %s2369, 2
          %s2373 = smul.addr %s2372, 8
          %s2374 = scalar_lea.hbm %s7, %s2373
          %s2375 = sshll.u32 %s2361, 4
          %s2376 = int_to_ptr.vmem [resolvable:$true] %s2375
          %s2377 = sshll.u32 %s2374, 4
          %s2378 = int_to_ptr.hbm [resolvable:$true] %s2377
          %2383 = dma.vmem_to_hbm [thread:$0]  %s2376, 8192, %s2378, %s2358, 256, 256, 16
        $region52: #{mmca_forward.3} parent=43 // pred_fallthru
          _
      $region44: #{mmca_forward.3} parent=5 // pred_fallthru
        _
      %p2384 = scmp.le.s32.totalorder 2, %s19
      // Predicated region
      $region53: #{mmca_forward.3} parent=5 // pred_check
        %p2385 = pneg %p2384
      $region54: #{mmca_forward.3} parent=5 // pred_check_branch
        %2387 = sbr.rel (%p2385) target = $region56
      $region55: #{mmca_forward.3} parent=5 // pred_region
        %s2388 = ssub.s32 %s19, 2
        // Predicated region
        $region57: #{mmca_forward.3} parent=55 // pred_check
          %p2389 = pneg %p184
        $region58: #{mmca_forward.3} parent=55 // pred_check_branch
          %2391 = sbr.rel (%p2389) target = $region60
        $region59: #{mmca_forward.3} parent=55 // pred_region
          %s2392 = smul.u32 32, %s25
          %p2393 = scmp.lt.s32.totalorder %s2392, 63
          %s2394 = scalar_select %p2393, %s2392, 63
          %s2395 = smul.addr %s2394, 8
          %s2396 = scalar_lea.vmem %s6, %s2395
        $region60: #{mmca_forward.3} parent=55 // pred_fallthru
          _
        // Predicated region
        $region61: #{mmca_forward.3} parent=55 // pred_check
          %p2397 = pneg %p210
        $region62: #{mmca_forward.3} parent=55 // pred_check_branch
          %2399 = sbr.rel (%p2397) target = $region64
        $region63: #{mmca_forward.3} parent=55 // pred_region
          %s2400 = sand.u32 %s195, 1
          %s2401 = scalar_lea.sflag [#allocation4], %s2400
          %s2402 = sand.u32 %s195, 1
          %s2403 = smul.addr %s2402, 512
          %s2404 = scalar_lea.vmem [#allocation3], %s2403
          %2406 = dma.done %s2401, 8192
        $region64: #{mmca_forward.3} parent=55 // pred_fallthru
          _
      $region56: #{mmca_forward.3} parent=5 // pred_fallthru
        _
    $region6: #{mmca_forward.3} parent=1 // loop_footer
      %s23 = sadd.s32 1, %s19
    $region7: #{mmca_forward.3} parent=1 // loop_footer_branch
      %18 = sbr.rel target = $region3
    $region8: #{mmca_forward.3} parent=1 // loop_exit
      _
    %2407 = vsyncpa [#allocation4], 1
    %s2408 = scalar_lea.sflag [#allocation4], 1
    %2409 = vsyncpa %s2408, 1

</llo_original>
